<compile_context>
chip_gen: v7x
topology: tpu7x:2x2x1
jax: 0.10.0
libtpu: 0.0.40
codegen_flags: <defaults>
</compile_context>

<pallas_src>
import jax
import jax.numpy as jnp
from jax import lax
from jax.experimental import pallas as pl
from jax.experimental.pallas import tpu as pltpu


def _round_up(x, m):
    return (x + m - 1) // m * m


# ----------------------------------------------------------------------------
# Pallas kernel: one grid step == one (batch block, chunk of T_BLOCK timesteps).
# PyTorch GRU gate order is (r, z, n):
#   gi = x @ W_ih^T + b_ih     (precomputed outside, gate-padded to 3*Hp lanes)
#   gh = h @ W_hh^T + b_hh
#   r = sigmoid(gi_r + gh_r) ; z = sigmoid(gi_z + gh_z)
#   n = tanh(gi_n + r * gh_n) ; h' = (1 - z) * n + z * h = n + z * (h - n)
# Padded timesteps (t >= length[b]) do not advance the hidden state and produce
# zero output, reproducing pack/unpack + mask-multiply semantics for trailing
# padding.  The final hidden state is h at the last valid timestep of each row.
# ----------------------------------------------------------------------------
def gru_encoder_kernel(gi_ref, len_ref, whh_ref, bhh_ref,
                       out_ref, hN_ref, h_scratch):
    c = pl.program_id(1)                      # sequence-chunk index ("arbitrary")
    bs_blk, t_blk, _ = gi_ref.shape
    hp = whh_ref.shape[0]

    # Start of a new batch block's sequence -> reset carried hidden (initHidden).
    @pl.when(c == 0)
    def _():
        h_scratch[...] = jnp.zeros_like(h_scratch)

    lengths = len_ref[...]                    # (bs_blk, 1) int32 (constant block)
    whh = whh_ref[...]                        # (Hp, 3Hp) bf16 (constant block)
    # Hoist the bias broadcast out of the unrolled loop (no CSE of broadcasts).
    bhh_b = jnp.broadcast_to(bhh_ref[...], (bs_blk, 3 * hp))   # (bs_blk, 3Hp) f32
    t0 = c * t_blk                            # global timestep of this chunk

    h = h_scratch[...]                        # (bs_blk, Hp) f32
    for lt in range(t_blk):                   # statically unrolled recurrence
        gi_t = gi_ref[:, lt, :]               # (bs_blk, 3Hp) f32, 128-aligned gates
        gh = jnp.dot(h.astype(jnp.bfloat16), whh,
                     preferred_element_type=jnp.float32) + bhh_b
        r = jax.nn.sigmoid(gi_t[:, 0 * hp:1 * hp] + gh[:, 0 * hp:1 * hp])
        z = jax.nn.sigmoid(gi_t[:, 1 * hp:2 * hp] + gh[:, 1 * hp:2 * hp])
        n = jnp.tanh(gi_t[:, 2 * hp:3 * hp] + r * gh[:, 2 * hp:3 * hp])
        h_new = n + z * (h - n)               # == (1 - z) * n + z * h
        valid = (t0 + lt) < lengths           # (bs_blk, 1) bool
        h = jnp.where(valid, h_new, h)        # frozen hidden at padded steps
        out_ref[:, lt, :] = jnp.where(valid, h_new, 0.0).astype(out_ref.dtype)

    h_scratch[...] = h
    hN_ref[...] = h.astype(hN_ref.dtype)      # final hidden (accumulator out-spec)


def encoder_forward(tokens, emb_table, w_ih, w_hh, b_ih, b_hh,
                    *, t_block=8, bs_block=8):
    """tokens: (bs, sl) int32, batch-first, trailing zero padding.
    Returns (output (bs, sl, H), hidden (bs, H)) like Encoder.forward."""
    bs, sl = tokens.shape
    E = emb_table.shape[1]
    H = w_hh.shape[1]

    hp = _round_up(H, 128)                    # lane-aligned hidden size
    bs_p = _round_up(bs, bs_block)            # sublane-aligned batch
    sl_p = _round_up(sl, t_block)             # whole number of chunks
    n_b = bs_p // bs_block
    n_c = sl_p // t_block

    # Gate-padded weights/biases: each gate gets its own 128-aligned lane block,
    # so in-kernel gate slices are full-vreg.  Padded rows/cols are zero.
    def pad_gates(mat_t, rows_p):             # (rows, 3H) -> (rows_p, 3*hp)
        rows = mat_t.shape[0]
        out = jnp.zeros((rows_p, 3 * hp), jnp.float32)
        for g in range(3):
            out = out.at[:rows, g * hp:g * hp + H].set(mat_t[:, g * H:(g + 1) * H])
        return out

    wih_t = pad_gates(jnp.transpose(w_ih).astype(jnp.float32), E).astype(jnp.bfloat16)   # (E, 3hp)
    whh_t = pad_gates(jnp.transpose(w_hh).astype(jnp.float32), hp).astype(jnp.bfloat16)  # (hp, 3hp)
    bih_p = pad_gates(b_ih.reshape(1, 3 * H).astype(jnp.float32), 1)                     # (1, 3hp)
    bhh_p = pad_gates(b_hh.reshape(1, 3 * H).astype(jnp.float32), 1)                     # (1, 3hp)

    # --- wrapper glue: embedding gather (padding_idx=0 row is zero) ----------
    tok_p = jnp.zeros((bs_p, sl_p), jnp.int32).at[:bs, :sl].set(tokens)
    emb = jnp.take(emb_table, tok_p, axis=0).astype(jnp.bfloat16)        # (bs_p, sl_p, E)

    # --- hoisted input projection: one big MXU matmul for ALL timesteps ------
    gi_all = jnp.einsum('bse,eg->bsg', emb, wih_t,
                        preferred_element_type=jnp.float32) + bih_p      # (bs_p, sl_p, 3hp)

    # Trailing-padding lengths (pack_padded_sequence semantics).
    lengths = jnp.sum((tok_p > 0).astype(jnp.int32), axis=1, keepdims=True)  # (bs_p, 1)

    out_p, hid_p = pl.pallas_call(
        gru_encoder_kernel,
        out_shape=(
            jax.ShapeDtypeStruct((bs_p, sl_p, hp), jnp.float32),
            jax.ShapeDtypeStruct((bs_p, hp), jnp.float32),
        ),
        grid_spec=pltpu.PrefetchScalarGridSpec(
            num_scalar_prefetch=0,
            grid=(n_b, n_c),
            in_specs=[
                pl.BlockSpec((bs_block, t_block, 3 * hp), lambda b, c: (b, c, 0)),  # gi chunk
                pl.BlockSpec((bs_block, 1), lambda b, c: (b, 0)),                   # lengths
                pl.BlockSpec((hp, 3 * hp), lambda b, c: (0, 0)),                    # W_hh^T
                pl.BlockSpec((1, 3 * hp), lambda b, c: (0, 0)),                     # b_hh
            ],
            out_specs=[
                pl.BlockSpec((bs_block, t_block, hp), lambda b, c: (b, c, 0)),      # output
                pl.BlockSpec((bs_block, hp), lambda b, c: (b, 0)),                  # final hidden
            ],
            scratch_shapes=[pltpu.VMEM((bs_block, hp), jnp.float32)],               # carried h
        ),
        compiler_params=pltpu.CompilerParams(
            # Batch blocks are independent -> "parallel" (v7x 2 TensorCores).
            # The sequence-chunk axis carries the recurrence and the hN
            # accumulator -> must stay "arbitrary".
            dimension_semantics=("parallel", "arbitrary")),
    )(gi_all, lengths, whh_t, bhh_p)

    # Un-pad.  No extra mask multiply: the kernel already zeroes padded steps.
    output = out_p[:bs, :sl, :H]
    hidden = hid_p[:bs, :H]
    return output, hidden


# Pure-JAX reference (lax.scan GRU) with the same bf16-operand / f32-accumulate
# numerics policy as the kernel.  Used only for the correctness check.
def encoder_reference(tokens, emb_table, w_ih, w_hh, b_ih, b_hh):
    bs, sl = tokens.shape
    H = w_hh.shape[1]
    emb = jnp.take(emb_table, tokens, axis=0).astype(jnp.bfloat16)       # (bs, sl, E)
    w_ih_b = w_ih.astype(jnp.bfloat16)
    w_hh_b = w_hh.astype(jnp.bfloat16)
    lengths = jnp.sum((tokens > 0).astype(jnp.int32), axis=1)

    def step(h, inp):
        x, t = inp
        gi = jnp.dot(x, w_ih_b.T, preferred_element_type=jnp.float32) + b_ih
        gh = jnp.dot(h.astype(jnp.bfloat16), w_hh_b.T,
                     preferred_element_type=jnp.float32) + b_hh
        r = jax.nn.sigmoid(gi[:, :H] + gh[:, :H])
        z = jax.nn.sigmoid(gi[:, H:2 * H] + gh[:, H:2 * H])
        n = jnp.tanh(gi[:, 2 * H:] + r * gh[:, 2 * H:])
        h_new = (1.0 - z) * n + z * h
        m = (t < lengths).astype(jnp.float32)[:, None]
        h_out = m * h_new + (1.0 - m) * h
        return h_out, m * h_new

    x_tm = jnp.transpose(emb, (1, 0, 2))
    h_last, outs = lax.scan(step, jnp.zeros((bs, H), jnp.float32),
                            (x_tm, jnp.arange(sl)))
    return jnp.transpose(outs, (1, 0, 2)), h_last


if __name__ == "__main__":
    voc_size, emb_size, hidden_size = 20, 16, 32
    bs, sl = 2, 12                                  # 12 -> padded to 16 (2 chunks of 8)

    key = jax.random.PRNGKey(0)
    k_emb, k_ih, k_hh, k_bi, k_bh, k_tok = jax.random.split(key, 6)

    bound = 1.0 / jnp.sqrt(hidden_size)
    emb_table = jax.random.normal(k_emb, (voc_size, emb_size), jnp.float32)
    emb_table = emb_table.at[0].set(0.0)            # padding_idx=0
    w_ih = jax.random.uniform(k_ih, (3 * hidden_size, emb_size), jnp.float32, -bound, bound)
    w_hh = jax.random.uniform(k_hh, (3 * hidden_size, hidden_size), jnp.float32, -bound, bound)
    b_ih = jax.random.uniform(k_bi, (3 * hidden_size,), jnp.float32, -bound, bound)
    b_hh = jax.random.uniform(k_bh, (3 * hidden_size,), jnp.float32, -bound, bound)

    # Tokens: nonzero prefix + trailing zero padding (as pack_padded_sequence expects).
    tokens = jax.random.randint(k_tok, (bs, sl), 1, voc_size, jnp.int32)
    seq_lengths = jnp.array([sl, 7], dtype=jnp.int32)
    pad_mask = jnp.arange(sl)[None, :] < seq_lengths[:, None]
    tokens = jnp.where(pad_mask, tokens, 0)

    enc = jax.jit(encoder_forward)
    output, hidden = enc(tokens, emb_table, w_ih, w_hh, b_ih, b_hh)
    jax.block_until_ready((output, hidden))

    ref_out, ref_hid = encoder_reference(tokens, emb_table, w_ih, w_hh, b_ih, b_hh)
    assert output.shape == (bs, sl, hidden_size)
    assert hidden.shape == (bs, hidden_size)
    assert jnp.allclose(output, ref_out, atol=1e-3, rtol=1e-3)
    assert jnp.allclose(hidden, ref_hid, atol=1e-3, rtol=1e-3)

    print("KERNEL_OK")
</pallas_src>

<mosaic_0001>
module attributes {stable_mosaic.version = 11 : i64} {
  func.func @gru_encoder_kernel(%arg0: i32, %arg1: i32, %arg2: memref<8x8x384xf32, #tpu.memory_space<vmem>>, %arg3: memref<8x1xi32, #tpu.memory_space<vmem>>, %arg4: memref<128x384xbf16, #tpu.memory_space<vmem>>, %arg5: memref<1x384xf32, #tpu.memory_space<vmem>>, %arg6: memref<8x8x128xf32, #tpu.memory_space<vmem>>, %arg7: memref<8x128xf32, #tpu.memory_space<vmem>>, %arg8: memref<8x128xf32, #tpu.memory_space<vmem>>) attributes {dimension_semantics = [#tpu.dimension_semantics<parallel>, #tpu.dimension_semantics<arbitrary>], iteration_bounds = array<i64: 1, 2>, scalar_prefetch = 0 : i64, scratch_operands = 1 : i64, tpu.core_type = #tpu.core_type<tc>, window_params = [{transform_indices = @transform_0, window_bounds = array<i64: 8, 8, 384>}, {transform_indices = @transform_1, window_bounds = array<i64: 8, 1>}, {pipeline_mode = #tpu.pipeline_mode<synchronous>, transform_indices = @transform_2, window_bounds = array<i64: 128, 384>}, {pipeline_mode = #tpu.pipeline_mode<synchronous>, transform_indices = @transform_3, window_bounds = array<i64: 1, 384>}, {transform_indices = @transform_4, window_bounds = array<i64: 8, 8, 128>}, {transform_indices = @transform_5, window_bounds = array<i64: 8, 128>}]} {
    %c0_i32 = arith.constant 0 : i32
    %0 = arith.cmpi eq, %arg1, %c0_i32 : i32
    %1 = arith.extui %0 : i1 to i32
    %c0_i32_0 = arith.constant 0 : i32
    %2 = arith.cmpi ne, %1, %c0_i32_0 : i32
    scf.if %2 {
      %cst_85 = arith.constant 0.000000e+00 : f32
      %348 = vector.broadcast %cst_85 : f32 to vector<8x128xf32>
      %c0_86 = arith.constant 0 : index
      %c0_87 = arith.constant 0 : index
      %349 = vector.load %arg8[%c0_86, %c0_87] : memref<8x128xf32, #tpu.memory_space<vmem>>, vector<8x128xf32>
      tpu.vector_store %arg8[%c0_86, %c0_87], %348 {strides = array<i32>} : memref<8x128xf32, #tpu.memory_space<vmem>>, vector<8x128xf32>,
    } else {
    }
    %c0 = arith.constant 0 : index
    %c0_1 = arith.constant 0 : index
    %3 = vector.load %arg3[%c0, %c0_1] : memref<8x1xi32, #tpu.memory_space<vmem>>, vector<8x1xi32>
    %c0_2 = arith.constant 0 : index
    %c0_3 = arith.constant 0 : index
    %4 = vector.load %arg4[%c0_2, %c0_3] : memref<128x384xbf16, #tpu.memory_space<vmem>>, vector<128x384xbf16>
    %c0_4 = arith.constant 0 : index
    %c0_5 = arith.constant 0 : index
    %5 = vector.load %arg5[%c0_4, %c0_5] : memref<1x384xf32, #tpu.memory_space<vmem>>, vector<1x384xf32>
    %6 = vector.shape_cast %5 : vector<1x384xf32> to vector<1x384xf32>
    %7 = vector.broadcast %6 : vector<1x384xf32> to vector<8x384xf32>
    %c8_i32 = arith.constant 8 : i32
    %8 = arith.muli %arg1, %c8_i32 : i32
    %c0_6 = arith.constant 0 : index
    %c0_7 = arith.constant 0 : index
    %9 = vector.load %arg8[%c0_6, %c0_7] : memref<8x128xf32, #tpu.memory_space<vmem>>, vector<8x128xf32>
    %c0_8 = arith.constant 0 : index
    %c0_9 = arith.constant 0 : index
    %c0_10 = arith.constant 0 : index
    %10 = vector.load %arg2[%c0_8, %c0_9, %c0_10] : memref<8x8x384xf32, #tpu.memory_space<vmem>>, vector<8x1x384xf32>
    %11 = vector.shape_cast %10 : vector<8x1x384xf32> to vector<8x384xf32>
    %12 = arith.truncf %9 : vector<8x128xf32> to vector<8x128xbf16>
    %cst = arith.constant dense<0.000000e+00> : vector<8x384xf32>
    %13 = tpu.matmul %12, %4, %cst {dimension_numbers = #tpu.dot_dimension_numbers<[1], [0], [0], [1], [0, 0, 1, 1], [], []>} : vector<8x128xbf16>, vector<128x384xbf16>, vector<8x384xf32> -> vector<8x384xf32>
    %14 = arith.addf %13, %7 : vector<8x384xf32>
    %15 = vector.extract_strided_slice %11 {offsets = [0, 0], sizes = [8, 128], strides = [1, 1]} : vector<8x384xf32> to vector<8x128xf32>
    %16 = vector.extract_strided_slice %14 {offsets = [0, 0], sizes = [8, 128], strides = [1, 1]} : vector<8x384xf32> to vector<8x128xf32>
    %17 = arith.addf %15, %16 : vector<8x128xf32>
    %18 = arith.negf %17 : vector<8x128xf32>
    %19 = math.exp %18 : vector<8x128xf32>
    %cst_11 = arith.constant 1.000000e+00 : f32
    %20 = vector.broadcast %cst_11 : f32 to vector<8x128xf32>
    %21 = arith.addf %20, %19 : vector<8x128xf32>
    %22 = arith.divf %20, %21 : vector<8x128xf32>
    %23 = vector.extract_strided_slice %11 {offsets = [0, 128], sizes = [8, 128], strides = [1, 1]} : vector<8x384xf32> to vector<8x128xf32>
    %24 = vector.extract_strided_slice %14 {offsets = [0, 128], sizes = [8, 128], strides = [1, 1]} : vector<8x384xf32> to vector<8x128xf32>
    %25 = arith.addf %23, %24 : vector<8x128xf32>
    %26 = arith.negf %25 : vector<8x128xf32>
    %27 = math.exp %26 : vector<8x128xf32>
    %cst_12 = arith.constant 1.000000e+00 : f32
    %28 = vector.broadcast %cst_12 : f32 to vector<8x128xf32>
    %29 = arith.addf %28, %27 : vector<8x128xf32>
    %30 = arith.divf %28, %29 : vector<8x128xf32>
    %31 = vector.extract_strided_slice %11 {offsets = [0, 256], sizes = [8, 128], strides = [1, 1]} : vector<8x384xf32> to vector<8x128xf32>
    %32 = vector.extract_strided_slice %14 {offsets = [0, 256], sizes = [8, 128], strides = [1, 1]} : vector<8x384xf32> to vector<8x128xf32>
    %33 = arith.mulf %22, %32 : vector<8x128xf32>
    %34 = arith.addf %31, %33 : vector<8x128xf32>
    %35 = math.tanh %34 : vector<8x128xf32>
    %36 = arith.subf %9, %35 : vector<8x128xf32>
    %37 = arith.mulf %30, %36 : vector<8x128xf32>
    %38 = arith.addf %35, %37 : vector<8x128xf32>
    %c0_i32_13 = arith.constant 0 : i32
    %39 = arith.addi %8, %c0_i32_13 : i32
    %40 = vector.broadcast %39 : i32 to vector<8x1xi32>
    %41 = arith.cmpi slt, %40, %3 : vector<8x1xi32>
    %42 = vector.shape_cast %41 : vector<8x1xi1> to vector<8x1xi1>
    %43 = vector.broadcast %42 : vector<8x1xi1> to vector<8x128xi1>
    %44 = arith.select %43, %38, %9 : vector<8x128xi1>, vector<8x128xf32>
    %cst_14 = arith.constant 0.000000e+00 : f32
    %45 = vector.shape_cast %41 : vector<8x1xi1> to vector<8x1xi1>
    %46 = vector.broadcast %45 : vector<8x1xi1> to vector<8x128xi1>
    %47 = vector.broadcast %cst_14 : f32 to vector<8x128xf32>
    %48 = arith.select %46, %38, %47 : vector<8x128xi1>, vector<8x128xf32>
    %c0_15 = arith.constant 0 : index
    %c0_16 = arith.constant 0 : index
    %c0_17 = arith.constant 0 : index
    %49 = vector.load %arg6[%c0_15, %c0_16, %c0_17] : memref<8x8x128xf32, #tpu.memory_space<vmem>>, vector<8x1x128xf32>
    %50 = vector.shape_cast %49 : vector<8x1x128xf32> to vector<8x128xf32>
    %51 = vector.shape_cast %48 : vector<8x128xf32> to vector<8x1x128xf32>
    tpu.vector_store %arg6[%c0_15, %c0_16, %c0_17], %51 {strides = array<i32>} : memref<8x8x128xf32, #tpu.memory_space<vmem>>, vector<8x1x128xf32>,
    %c0_18 = arith.constant 0 : index
    %c1 = arith.constant 1 : index
    %c0_19 = arith.constant 0 : index
    %52 = vector.load %arg2[%c0_18, %c1, %c0_19] : memref<8x8x384xf32, #tpu.memory_space<vmem>>, vector<8x1x384xf32>
    %53 = vector.shape_cast %52 : vector<8x1x384xf32> to vector<8x384xf32>
    %54 = arith.truncf %44 : vector<8x128xf32> to vector<8x128xbf16>
    %cst_20 = arith.constant dense<0.000000e+00> : vector<8x384xf32>
    %55 = tpu.matmul %54, %4, %cst_20 {dimension_numbers = #tpu.dot_dimension_numbers<[1], [0], [0], [1], [0, 0, 1, 1], [], []>} : vector<8x128xbf16>, vector<128x384xbf16>, vector<8x384xf32> -> vector<8x384xf32>
    %56 = arith.addf %55, %7 : vector<8x384xf32>
    %57 = vector.extract_strided_slice %53 {offsets = [0, 0], sizes = [8, 128], strides = [1, 1]} : vector<8x384xf32> to vector<8x128xf32>
    %58 = vector.extract_strided_slice %56 {offsets = [0, 0], sizes = [8, 128], strides = [1, 1]} : vector<8x384xf32> to vector<8x128xf32>
    %59 = arith.addf %57, %58 : vector<8x128xf32>
    %60 = arith.negf %59 : vector<8x128xf32>
    %61 = math.exp %60 : vector<8x128xf32>
    %cst_21 = arith.constant 1.000000e+00 : f32
    %62 = vector.broadcast %cst_21 : f32 to vector<8x128xf32>
    %63 = arith.addf %62, %61 : vector<8x128xf32>
    %64 = arith.divf %62, %63 : vector<8x128xf32>
    %65 = vector.extract_strided_slice %53 {offsets = [0, 128], sizes = [8, 128], strides = [1, 1]} : vector<8x384xf32> to vector<8x128xf32>
    %66 = vector.extract_strided_slice %56 {offsets = [0, 128], sizes = [8, 128], strides = [1, 1]} : vector<8x384xf32> to vector<8x128xf32>
    %67 = arith.addf %65, %66 : vector<8x128xf32>
    %68 = arith.negf %67 : vector<8x128xf32>
    %69 = math.exp %68 : vector<8x128xf32>
    %cst_22 = arith.constant 1.000000e+00 : f32
    %70 = vector.broadcast %cst_22 : f32 to vector<8x128xf32>
    %71 = arith.addf %70, %69 : vector<8x128xf32>
    %72 = arith.divf %70, %71 : vector<8x128xf32>
    %73 = vector.extract_strided_slice %53 {offsets = [0, 256], sizes = [8, 128], strides = [1, 1]} : vector<8x384xf32> to vector<8x128xf32>
    %74 = vector.extract_strided_slice %56 {offsets = [0, 256], sizes = [8, 128], strides = [1, 1]} : vector<8x384xf32> to vector<8x128xf32>
    %75 = arith.mulf %64, %74 : vector<8x128xf32>
    %76 = arith.addf %73, %75 : vector<8x128xf32>
    %77 = math.tanh %76 : vector<8x128xf32>
    %78 = arith.subf %44, %77 : vector<8x128xf32>
    %79 = arith.mulf %72, %78 : vector<8x128xf32>
    %80 = arith.addf %77, %79 : vector<8x128xf32>
    %c1_i32 = arith.constant 1 : i32
    %81 = arith.addi %8, %c1_i32 : i32
    %82 = vector.broadcast %81 : i32 to vector<8x1xi32>
    %83 = arith.cmpi slt, %82, %3 : vector<8x1xi32>
    %84 = vector.shape_cast %83 : vector<8x1xi1> to vector<8x1xi1>
    %85 = vector.broadcast %84 : vector<8x1xi1> to vector<8x128xi1>
    %86 = arith.select %85, %80, %44 : vector<8x128xi1>, vector<8x128xf32>
    %cst_23 = arith.constant 0.000000e+00 : f32
    %87 = vector.shape_cast %83 : vector<8x1xi1> to vector<8x1xi1>
    %88 = vector.broadcast %87 : vector<8x1xi1> to vector<8x128xi1>
    %89 = vector.broadcast %cst_23 : f32 to vector<8x128xf32>
    %90 = arith.select %88, %80, %89 : vector<8x128xi1>, vector<8x128xf32>
    %c0_24 = arith.constant 0 : index
    %c1_25 = arith.constant 1 : index
    %c0_26 = arith.constant 0 : index
    %91 = vector.load %arg6[%c0_24, %c1_25, %c0_26] : memref<8x8x128xf32, #tpu.memory_space<vmem>>, vector<8x1x128xf32>
    %92 = vector.shape_cast %91 : vector<8x1x128xf32> to vector<8x128xf32>
    %93 = vector.shape_cast %90 : vector<8x128xf32> to vector<8x1x128xf32>
    tpu.vector_store %arg6[%c0_24, %c1_25, %c0_26], %93 {strides = array<i32>} : memref<8x8x128xf32, #tpu.memory_space<vmem>>, vector<8x1x128xf32>,
    %c0_27 = arith.constant 0 : index
    %c2 = arith.constant 2 : index
    %c0_28 = arith.constant 0 : index
    %94 = vector.load %arg2[%c0_27, %c2, %c0_28] : memref<8x8x384xf32, #tpu.memory_space<vmem>>, vector<8x1x384xf32>
    %95 = vector.shape_cast %94 : vector<8x1x384xf32> to vector<8x384xf32>
    %96 = arith.truncf %86 : vector<8x128xf32> to vector<8x128xbf16>
    %cst_29 = arith.constant dense<0.000000e+00> : vector<8x384xf32>
    %97 = tpu.matmul %96, %4, %cst_29 {dimension_numbers = #tpu.dot_dimension_numbers<[1], [0], [0], [1], [0, 0, 1, 1], [], []>} : vector<8x128xbf16>, vector<128x384xbf16>, vector<8x384xf32> -> vector<8x384xf32>
    %98 = arith.addf %97, %7 : vector<8x384xf32>
    %99 = vector.extract_strided_slice %95 {offsets = [0, 0], sizes = [8, 128], strides = [1, 1]} : vector<8x384xf32> to vector<8x128xf32>
    %100 = vector.extract_strided_slice %98 {offsets = [0, 0], sizes = [8, 128], strides = [1, 1]} : vector<8x384xf32> to vector<8x128xf32>
    %101 = arith.addf %99, %100 : vector<8x128xf32>
    %102 = arith.negf %101 : vector<8x128xf32>
    %103 = math.exp %102 : vector<8x128xf32>
    %cst_30 = arith.constant 1.000000e+00 : f32
    %104 = vector.broadcast %cst_30 : f32 to vector<8x128xf32>
    %105 = arith.addf %104, %103 : vector<8x128xf32>
    %106 = arith.divf %104, %105 : vector<8x128xf32>
    %107 = vector.extract_strided_slice %95 {offsets = [0, 128], sizes = [8, 128], strides = [1, 1]} : vector<8x384xf32> to vector<8x128xf32>
    %108 = vector.extract_strided_slice %98 {offsets = [0, 128], sizes = [8, 128], strides = [1, 1]} : vector<8x384xf32> to vector<8x128xf32>
    %109 = arith.addf %107, %108 : vector<8x128xf32>
    %110 = arith.negf %109 : vector<8x128xf32>
    %111 = math.exp %110 : vector<8x128xf32>
    %cst_31 = arith.constant 1.000000e+00 : f32
    %112 = vector.broadcast %cst_31 : f32 to vector<8x128xf32>
    %113 = arith.addf %112, %111 : vector<8x128xf32>
    %114 = arith.divf %112, %113 : vector<8x128xf32>
    %115 = vector.extract_strided_slice %95 {offsets = [0, 256], sizes = [8, 128], strides = [1, 1]} : vector<8x384xf32> to vector<8x128xf32>
    %116 = vector.extract_strided_slice %98 {offsets = [0, 256], sizes = [8, 128], strides = [1, 1]} : vector<8x384xf32> to vector<8x128xf32>
    %117 = arith.mulf %106, %116 : vector<8x128xf32>
    %118 = arith.addf %115, %117 : vector<8x128xf32>
    %119 = math.tanh %118 : vector<8x128xf32>
    %120 = arith.subf %86, %119 : vector<8x128xf32>
    %121 = arith.mulf %114, %120 : vector<8x128xf32>
    %122 = arith.addf %119, %121 : vector<8x128xf32>
    %c2_i32 = arith.constant 2 : i32
    %123 = arith.addi %8, %c2_i32 : i32
    %124 = vector.broadcast %123 : i32 to vector<8x1xi32>
    %125 = arith.cmpi slt, %124, %3 : vector<8x1xi32>
    %126 = vector.shape_cast %125 : vector<8x1xi1> to vector<8x1xi1>
    %127 = vector.broadcast %126 : vector<8x1xi1> to vector<8x128xi1>
    %128 = arith.select %127, %122, %86 : vector<8x128xi1>, vector<8x128xf32>
    %cst_32 = arith.constant 0.000000e+00 : f32
    %129 = vector.shape_cast %125 : vector<8x1xi1> to vector<8x1xi1>
    %130 = vector.broadcast %129 : vector<8x1xi1> to vector<8x128xi1>
    %131 = vector.broadcast %cst_32 : f32 to vector<8x128xf32>
    %132 = arith.select %130, %122, %131 : vector<8x128xi1>, vector<8x128xf32>
    %c0_33 = arith.constant 0 : index
    %c2_34 = arith.constant 2 : index
    %c0_35 = arith.constant 0 : index
    %133 = vector.load %arg6[%c0_33, %c2_34, %c0_35] : memref<8x8x128xf32, #tpu.memory_space<vmem>>, vector<8x1x128xf32>
    %134 = vector.shape_cast %133 : vector<8x1x128xf32> to vector<8x128xf32>
    %135 = vector.shape_cast %132 : vector<8x128xf32> to vector<8x1x128xf32>
    tpu.vector_store %arg6[%c0_33, %c2_34, %c0_35], %135 {strides = array<i32>} : memref<8x8x128xf32, #tpu.memory_space<vmem>>, vector<8x1x128xf32>,
    %c0_36 = arith.constant 0 : index
    %c3 = arith.constant 3 : index
    %c0_37 = arith.constant 0 : index
    %136 = vector.load %arg2[%c0_36, %c3, %c0_37] : memref<8x8x384xf32, #tpu.memory_space<vmem>>, vector<8x1x384xf32>
    %137 = vector.shape_cast %136 : vector<8x1x384xf32> to vector<8x384xf32>
    %138 = arith.truncf %128 : vector<8x128xf32> to vector<8x128xbf16>
    %cst_38 = arith.constant dense<0.000000e+00> : vector<8x384xf32>
    %139 = tpu.matmul %138, %4, %cst_38 {dimension_numbers = #tpu.dot_dimension_numbers<[1], [0], [0], [1], [0, 0, 1, 1], [], []>} : vector<8x128xbf16>, vector<128x384xbf16>, vector<8x384xf32> -> vector<8x384xf32>
    %140 = arith.addf %139, %7 : vector<8x384xf32>
    %141 = vector.extract_strided_slice %137 {offsets = [0, 0], sizes = [8, 128], strides = [1, 1]} : vector<8x384xf32> to vector<8x128xf32>
    %142 = vector.extract_strided_slice %140 {offsets = [0, 0], sizes = [8, 128], strides = [1, 1]} : vector<8x384xf32> to vector<8x128xf32>
    %143 = arith.addf %141, %142 : vector<8x128xf32>
    %144 = arith.negf %143 : vector<8x128xf32>
    %145 = math.exp %144 : vector<8x128xf32>
    %cst_39 = arith.constant 1.000000e+00 : f32
    %146 = vector.broadcast %cst_39 : f32 to vector<8x128xf32>
    %147 = arith.addf %146, %145 : vector<8x128xf32>
    %148 = arith.divf %146, %147 : vector<8x128xf32>
    %149 = vector.extract_strided_slice %137 {offsets = [0, 128], sizes = [8, 128], strides = [1, 1]} : vector<8x384xf32> to vector<8x128xf32>
    %150 = vector.extract_strided_slice %140 {offsets = [0, 128], sizes = [8, 128], strides = [1, 1]} : vector<8x384xf32> to vector<8x128xf32>
    %151 = arith.addf %149, %150 : vector<8x128xf32>
    %152 = arith.negf %151 : vector<8x128xf32>
    %153 = math.exp %152 : vector<8x128xf32>
    %cst_40 = arith.constant 1.000000e+00 : f32
    %154 = vector.broadcast %cst_40 : f32 to vector<8x128xf32>
    %155 = arith.addf %154, %153 : vector<8x128xf32>
    %156 = arith.divf %154, %155 : vector<8x128xf32>
    %157 = vector.extract_strided_slice %137 {offsets = [0, 256], sizes = [8, 128], strides = [1, 1]} : vector<8x384xf32> to vector<8x128xf32>
    %158 = vector.extract_strided_slice %140 {offsets = [0, 256], sizes = [8, 128], strides = [1, 1]} : vector<8x384xf32> to vector<8x128xf32>
    %159 = arith.mulf %148, %158 : vector<8x128xf32>
    %160 = arith.addf %157, %159 : vector<8x128xf32>
    %161 = math.tanh %160 : vector<8x128xf32>
    %162 = arith.subf %128, %161 : vector<8x128xf32>
    %163 = arith.mulf %156, %162 : vector<8x128xf32>
    %164 = arith.addf %161, %163 : vector<8x128xf32>
    %c3_i32 = arith.constant 3 : i32
    %165 = arith.addi %8, %c3_i32 : i32
    %166 = vector.broadcast %165 : i32 to vector<8x1xi32>
    %167 = arith.cmpi slt, %166, %3 : vector<8x1xi32>
    %168 = vector.shape_cast %167 : vector<8x1xi1> to vector<8x1xi1>
    %169 = vector.broadcast %168 : vector<8x1xi1> to vector<8x128xi1>
    %170 = arith.select %169, %164, %128 : vector<8x128xi1>, vector<8x128xf32>
    %cst_41 = arith.constant 0.000000e+00 : f32
    %171 = vector.shape_cast %167 : vector<8x1xi1> to vector<8x1xi1>
    %172 = vector.broadcast %171 : vector<8x1xi1> to vector<8x128xi1>
    %173 = vector.broadcast %cst_41 : f32 to vector<8x128xf32>
    %174 = arith.select %172, %164, %173 : vector<8x128xi1>, vector<8x128xf32>
    %c0_42 = arith.constant 0 : index
    %c3_43 = arith.constant 3 : index
    %c0_44 = arith.constant 0 : index
    %175 = vector.load %arg6[%c0_42, %c3_43, %c0_44] : memref<8x8x128xf32, #tpu.memory_space<vmem>>, vector<8x1x128xf32>
    %176 = vector.shape_cast %175 : vector<8x1x128xf32> to vector<8x128xf32>
    %177 = vector.shape_cast %174 : vector<8x128xf32> to vector<8x1x128xf32>
    tpu.vector_store %arg6[%c0_42, %c3_43, %c0_44], %177 {strides = array<i32>} : memref<8x8x128xf32, #tpu.memory_space<vmem>>, vector<8x1x128xf32>,
    %c0_45 = arith.constant 0 : index
    %c4 = arith.constant 4 : index
    %c0_46 = arith.constant 0 : index
    %178 = vector.load %arg2[%c0_45, %c4, %c0_46] : memref<8x8x384xf32, #tpu.memory_space<vmem>>, vector<8x1x384xf32>
    %179 = vector.shape_cast %178 : vector<8x1x384xf32> to vector<8x384xf32>
    %180 = arith.truncf %170 : vector<8x128xf32> to vector<8x128xbf16>
    %cst_47 = arith.constant dense<0.000000e+00> : vector<8x384xf32>
    %181 = tpu.matmul %180, %4, %cst_47 {dimension_numbers = #tpu.dot_dimension_numbers<[1], [0], [0], [1], [0, 0, 1, 1], [], []>} : vector<8x128xbf16>, vector<128x384xbf16>, vector<8x384xf32> -> vector<8x384xf32>
    %182 = arith.addf %181, %7 : vector<8x384xf32>
    %183 = vector.extract_strided_slice %179 {offsets = [0, 0], sizes = [8, 128], strides = [1, 1]} : vector<8x384xf32> to vector<8x128xf32>
    %184 = vector.extract_strided_slice %182 {offsets = [0, 0], sizes = [8, 128], strides = [1, 1]} : vector<8x384xf32> to vector<8x128xf32>
    %185 = arith.addf %183, %184 : vector<8x128xf32>
    %186 = arith.negf %185 : vector<8x128xf32>
    %187 = math.exp %186 : vector<8x128xf32>
    %cst_48 = arith.constant 1.000000e+00 : f32
    %188 = vector.broadcast %cst_48 : f32 to vector<8x128xf32>
    %189 = arith.addf %188, %187 : vector<8x128xf32>
    %190 = arith.divf %188, %189 : vector<8x128xf32>
    %191 = vector.extract_strided_slice %179 {offsets = [0, 128], sizes = [8, 128], strides = [1, 1]} : vector<8x384xf32> to vector<8x128xf32>
    %192 = vector.extract_strided_slice %182 {offsets = [0, 128], sizes = [8, 128], strides = [1, 1]} : vector<8x384xf32> to vector<8x128xf32>
    %193 = arith.addf %191, %192 : vector<8x128xf32>
    %194 = arith.negf %193 : vector<8x128xf32>
    %195 = math.exp %194 : vector<8x128xf32>
    %cst_49 = arith.constant 1.000000e+00 : f32
    %196 = vector.broadcast %cst_49 : f32 to vector<8x128xf32>
    %197 = arith.addf %196, %195 : vector<8x128xf32>
    %198 = arith.divf %196, %197 : vector<8x128xf32>
    %199 = vector.extract_strided_slice %179 {offsets = [0, 256], sizes = [8, 128], strides = [1, 1]} : vector<8x384xf32> to vector<8x128xf32>
    %200 = vector.extract_strided_slice %182 {offsets = [0, 256], sizes = [8, 128], strides = [1, 1]} : vector<8x384xf32> to vector<8x128xf32>
    %201 = arith.mulf %190, %200 : vector<8x128xf32>
    %202 = arith.addf %199, %201 : vector<8x128xf32>
    %203 = math.tanh %202 : vector<8x128xf32>
    %204 = arith.subf %170, %203 : vector<8x128xf32>
    %205 = arith.mulf %198, %204 : vector<8x128xf32>
    %206 = arith.addf %203, %205 : vector<8x128xf32>
    %c4_i32 = arith.constant 4 : i32
    %207 = arith.addi %8, %c4_i32 : i32
    %208 = vector.broadcast %207 : i32 to vector<8x1xi32>
    %209 = arith.cmpi slt, %208, %3 : vector<8x1xi32>
    %210 = vector.shape_cast %209 : vector<8x1xi1> to vector<8x1xi1>
    %211 = vector.broadcast %210 : vector<8x1xi1> to vector<8x128xi1>
    %212 = arith.select %211, %206, %170 : vector<8x128xi1>, vector<8x128xf32>
    %cst_50 = arith.constant 0.000000e+00 : f32
    %213 = vector.shape_cast %209 : vector<8x1xi1> to vector<8x1xi1>
    %214 = vector.broadcast %213 : vector<8x1xi1> to vector<8x128xi1>
    %215 = vector.broadcast %cst_50 : f32 to vector<8x128xf32>
    %216 = arith.select %214, %206, %215 : vector<8x128xi1>, vector<8x128xf32>
    %c0_51 = arith.constant 0 : index
    %c4_52 = arith.constant 4 : index
    %c0_53 = arith.constant 0 : index
    %217 = vector.load %arg6[%c0_51, %c4_52, %c0_53] : memref<8x8x128xf32, #tpu.memory_space<vmem>>, vector<8x1x128xf32>
    %218 = vector.shape_cast %217 : vector<8x1x128xf32> to vector<8x128xf32>
    %219 = vector.shape_cast %216 : vector<8x128xf32> to vector<8x1x128xf32>
    tpu.vector_store %arg6[%c0_51, %c4_52, %c0_53], %219 {strides = array<i32>} : memref<8x8x128xf32, #tpu.memory_space<vmem>>, vector<8x1x128xf32>,
    %c0_54 = arith.constant 0 : index
    %c5 = arith.constant 5 : index
    %c0_55 = arith.constant 0 : index
    %220 = vector.load %arg2[%c0_54, %c5, %c0_55] : memref<8x8x384xf32, #tpu.memory_space<vmem>>, vector<8x1x384xf32>
    %221 = vector.shape_cast %220 : vector<8x1x384xf32> to vector<8x384xf32>
    %222 = arith.truncf %212 : vector<8x128xf32> to vector<8x128xbf16>
    %cst_56 = arith.constant dense<0.000000e+00> : vector<8x384xf32>
    %223 = tpu.matmul %222, %4, %cst_56 {dimension_numbers = #tpu.dot_dimension_numbers<[1], [0], [0], [1], [0, 0, 1, 1], [], []>} : vector<8x128xbf16>, vector<128x384xbf16>, vector<8x384xf32> -> vector<8x384xf32>
    %224 = arith.addf %223, %7 : vector<8x384xf32>
    %225 = vector.extract_strided_slice %221 {offsets = [0, 0], sizes = [8, 128], strides = [1, 1]} : vector<8x384xf32> to vector<8x128xf32>
    %226 = vector.extract_strided_slice %224 {offsets = [0, 0], sizes = [8, 128], strides = [1, 1]} : vector<8x384xf32> to vector<8x128xf32>
    %227 = arith.addf %225, %226 : vector<8x128xf32>
    %228 = arith.negf %227 : vector<8x128xf32>
    %229 = math.exp %228 : vector<8x128xf32>
    %cst_57 = arith.constant 1.000000e+00 : f32
    %230 = vector.broadcast %cst_57 : f32 to vector<8x128xf32>
    %231 = arith.addf %230, %229 : vector<8x128xf32>
    %232 = arith.divf %230, %231 : vector<8x128xf32>
    %233 = vector.extract_strided_slice %221 {offsets = [0, 128], sizes = [8, 128], strides = [1, 1]} : vector<8x384xf32> to vector<8x128xf32>
    %234 = vector.extract_strided_slice %224 {offsets = [0, 128], sizes = [8, 128], strides = [1, 1]} : vector<8x384xf32> to vector<8x128xf32>
    %235 = arith.addf %233, %234 : vector<8x128xf32>
    %236 = arith.negf %235 : vector<8x128xf32>
    %237 = math.exp %236 : vector<8x128xf32>
    %cst_58 = arith.constant 1.000000e+00 : f32
    %238 = vector.broadcast %cst_58 : f32 to vector<8x128xf32>
    %239 = arith.addf %238, %237 : vector<8x128xf32>
    %240 = arith.divf %238, %239 : vector<8x128xf32>
    %241 = vector.extract_strided_slice %221 {offsets = [0, 256], sizes = [8, 128], strides = [1, 1]} : vector<8x384xf32> to vector<8x128xf32>
    %242 = vector.extract_strided_slice %224 {offsets = [0, 256], sizes = [8, 128], strides = [1, 1]} : vector<8x384xf32> to vector<8x128xf32>
    %243 = arith.mulf %232, %242 : vector<8x128xf32>
    %244 = arith.addf %241, %243 : vector<8x128xf32>
    %245 = math.tanh %244 : vector<8x128xf32>
    %246 = arith.subf %212, %245 : vector<8x128xf32>
    %247 = arith.mulf %240, %246 : vector<8x128xf32>
    %248 = arith.addf %245, %247 : vector<8x128xf32>
    %c5_i32 = arith.constant 5 : i32
    %249 = arith.addi %8, %c5_i32 : i32
    %250 = vector.broadcast %249 : i32 to vector<8x1xi32>
    %251 = arith.cmpi slt, %250, %3 : vector<8x1xi32>
    %252 = vector.shape_cast %251 : vector<8x1xi1> to vector<8x1xi1>
    %253 = vector.broadcast %252 : vector<8x1xi1> to vector<8x128xi1>
    %254 = arith.select %253, %248, %212 : vector<8x128xi1>, vector<8x128xf32>
    %cst_59 = arith.constant 0.000000e+00 : f32
    %255 = vector.shape_cast %251 : vector<8x1xi1> to vector<8x1xi1>
    %256 = vector.broadcast %255 : vector<8x1xi1> to vector<8x128xi1>
    %257 = vector.broadcast %cst_59 : f32 to vector<8x128xf32>
    %258 = arith.select %256, %248, %257 : vector<8x128xi1>, vector<8x128xf32>
    %c0_60 = arith.constant 0 : index
    %c5_61 = arith.constant 5 : index
    %c0_62 = arith.constant 0 : index
    %259 = vector.load %arg6[%c0_60, %c5_61, %c0_62] : memref<8x8x128xf32, #tpu.memory_space<vmem>>, vector<8x1x128xf32>
    %260 = vector.shape_cast %259 : vector<8x1x128xf32> to vector<8x128xf32>
    %261 = vector.shape_cast %258 : vector<8x128xf32> to vector<8x1x128xf32>
    tpu.vector_store %arg6[%c0_60, %c5_61, %c0_62], %261 {strides = array<i32>} : memref<8x8x128xf32, #tpu.memory_space<vmem>>, vector<8x1x128xf32>,
    %c0_63 = arith.constant 0 : index
    %c6 = arith.constant 6 : index
    %c0_64 = arith.constant 0 : index
    %262 = vector.load %arg2[%c0_63, %c6, %c0_64] : memref<8x8x384xf32, #tpu.memory_space<vmem>>, vector<8x1x384xf32>
    %263 = vector.shape_cast %262 : vector<8x1x384xf32> to vector<8x384xf32>
    %264 = arith.truncf %254 : vector<8x128xf32> to vector<8x128xbf16>
    %cst_65 = arith.constant dense<0.000000e+00> : vector<8x384xf32>
    %265 = tpu.matmul %264, %4, %cst_65 {dimension_numbers = #tpu.dot_dimension_numbers<[1], [0], [0], [1], [0, 0, 1, 1], [], []>} : vector<8x128xbf16>, vector<128x384xbf16>, vector<8x384xf32> -> vector<8x384xf32>
    %266 = arith.addf %265, %7 : vector<8x384xf32>
    %267 = vector.extract_strided_slice %263 {offsets = [0, 0], sizes = [8, 128], strides = [1, 1]} : vector<8x384xf32> to vector<8x128xf32>
    %268 = vector.extract_strided_slice %266 {offsets = [0, 0], sizes = [8, 128], strides = [1, 1]} : vector<8x384xf32> to vector<8x128xf32>
    %269 = arith.addf %267, %268 : vector<8x128xf32>
    %270 = arith.negf %269 : vector<8x128xf32>
    %271 = math.exp %270 : vector<8x128xf32>
    %cst_66 = arith.constant 1.000000e+00 : f32
    %272 = vector.broadcast %cst_66 : f32 to vector<8x128xf32>
    %273 = arith.addf %272, %271 : vector<8x128xf32>
    %274 = arith.divf %272, %273 : vector<8x128xf32>
    %275 = vector.extract_strided_slice %263 {offsets = [0, 128], sizes = [8, 128], strides = [1, 1]} : vector<8x384xf32> to vector<8x128xf32>
    %276 = vector.extract_strided_slice %266 {offsets = [0, 128], sizes = [8, 128], strides = [1, 1]} : vector<8x384xf32> to vector<8x128xf32>
    %277 = arith.addf %275, %276 : vector<8x128xf32>
    %278 = arith.negf %277 : vector<8x128xf32>
    %279 = math.exp %278 : vector<8x128xf32>
    %cst_67 = arith.constant 1.000000e+00 : f32
    %280 = vector.broadcast %cst_67 : f32 to vector<8x128xf32>
    %281 = arith.addf %280, %279 : vector<8x128xf32>
    %282 = arith.divf %280, %281 : vector<8x128xf32>
    %283 = vector.extract_strided_slice %263 {offsets = [0, 256], sizes = [8, 128], strides = [1, 1]} : vector<8x384xf32> to vector<8x128xf32>
    %284 = vector.extract_strided_slice %266 {offsets = [0, 256], sizes = [8, 128], strides = [1, 1]} : vector<8x384xf32> to vector<8x128xf32>
    %285 = arith.mulf %274, %284 : vector<8x128xf32>
    %286 = arith.addf %283, %285 : vector<8x128xf32>
    %287 = math.tanh %286 : vector<8x128xf32>
    %288 = arith.subf %254, %287 : vector<8x128xf32>
    %289 = arith.mulf %282, %288 : vector<8x128xf32>
    %290 = arith.addf %287, %289 : vector<8x128xf32>
    %c6_i32 = arith.constant 6 : i32
    %291 = arith.addi %8, %c6_i32 : i32
    %292 = vector.broadcast %291 : i32 to vector<8x1xi32>
    %293 = arith.cmpi slt, %292, %3 : vector<8x1xi32>
    %294 = vector.shape_cast %293 : vector<8x1xi1> to vector<8x1xi1>
    %295 = vector.broadcast %294 : vector<8x1xi1> to vector<8x128xi1>
    %296 = arith.select %295, %290, %254 : vector<8x128xi1>, vector<8x128xf32>
    %cst_68 = arith.constant 0.000000e+00 : f32
    %297 = vector.shape_cast %293 : vector<8x1xi1> to vector<8x1xi1>
    %298 = vector.broadcast %297 : vector<8x1xi1> to vector<8x128xi1>
    %299 = vector.broadcast %cst_68 : f32 to vector<8x128xf32>
    %300 = arith.select %298, %290, %299 : vector<8x128xi1>, vector<8x128xf32>
    %c0_69 = arith.constant 0 : index
    %c6_70 = arith.constant 6 : index
    %c0_71 = arith.constant 0 : index
    %301 = vector.load %arg6[%c0_69, %c6_70, %c0_71] : memref<8x8x128xf32, #tpu.memory_space<vmem>>, vector<8x1x128xf32>
    %302 = vector.shape_cast %301 : vector<8x1x128xf32> to vector<8x128xf32>
    %303 = vector.shape_cast %300 : vector<8x128xf32> to vector<8x1x128xf32>
    tpu.vector_store %arg6[%c0_69, %c6_70, %c0_71], %303 {strides = array<i32>} : memref<8x8x128xf32, #tpu.memory_space<vmem>>, vector<8x1x128xf32>,
    %c0_72 = arith.constant 0 : index
    %c7 = arith.constant 7 : index
    %c0_73 = arith.constant 0 : index
    %304 = vector.load %arg2[%c0_72, %c7, %c0_73] : memref<8x8x384xf32, #tpu.memory_space<vmem>>, vector<8x1x384xf32>
    %305 = vector.shape_cast %304 : vector<8x1x384xf32> to vector<8x384xf32>
    %306 = arith.truncf %296 : vector<8x128xf32> to vector<8x128xbf16>
    %cst_74 = arith.constant dense<0.000000e+00> : vector<8x384xf32>
    %307 = tpu.matmul %306, %4, %cst_74 {dimension_numbers = #tpu.dot_dimension_numbers<[1], [0], [0], [1], [0, 0, 1, 1], [], []>} : vector<8x128xbf16>, vector<128x384xbf16>, vector<8x384xf32> -> vector<8x384xf32>
    %308 = arith.addf %307, %7 : vector<8x384xf32>
    %309 = vector.extract_strided_slice %305 {offsets = [0, 0], sizes = [8, 128], strides = [1, 1]} : vector<8x384xf32> to vector<8x128xf32>
    %310 = vector.extract_strided_slice %308 {offsets = [0, 0], sizes = [8, 128], strides = [1, 1]} : vector<8x384xf32> to vector<8x128xf32>
    %311 = arith.addf %309, %310 : vector<8x128xf32>
    %312 = arith.negf %311 : vector<8x128xf32>
    %313 = math.exp %312 : vector<8x128xf32>
    %cst_75 = arith.constant 1.000000e+00 : f32
    %314 = vector.broadcast %cst_75 : f32 to vector<8x128xf32>
    %315 = arith.addf %314, %313 : vector<8x128xf32>
    %316 = arith.divf %314, %315 : vector<8x128xf32>
    %317 = vector.extract_strided_slice %305 {offsets = [0, 128], sizes = [8, 128], strides = [1, 1]} : vector<8x384xf32> to vector<8x128xf32>
    %318 = vector.extract_strided_slice %308 {offsets = [0, 128], sizes = [8, 128], strides = [1, 1]} : vector<8x384xf32> to vector<8x128xf32>
    %319 = arith.addf %317, %318 : vector<8x128xf32>
    %320 = arith.negf %319 : vector<8x128xf32>
    %321 = math.exp %320 : vector<8x128xf32>
    %cst_76 = arith.constant 1.000000e+00 : f32
    %322 = vector.broadcast %cst_76 : f32 to vector<8x128xf32>
    %323 = arith.addf %322, %321 : vector<8x128xf32>
    %324 = arith.divf %322, %323 : vector<8x128xf32>
    %325 = vector.extract_strided_slice %305 {offsets = [0, 256], sizes = [8, 128], strides = [1, 1]} : vector<8x384xf32> to vector<8x128xf32>
    %326 = vector.extract_strided_slice %308 {offsets = [0, 256], sizes = [8, 128], strides = [1, 1]} : vector<8x384xf32> to vector<8x128xf32>
    %327 = arith.mulf %316, %326 : vector<8x128xf32>
    %328 = arith.addf %325, %327 : vector<8x128xf32>
    %329 = math.tanh %328 : vector<8x128xf32>
    %330 = arith.subf %296, %329 : vector<8x128xf32>
    %331 = arith.mulf %324, %330 : vector<8x128xf32>
    %332 = arith.addf %329, %331 : vector<8x128xf32>
    %c7_i32 = arith.constant 7 : i32
    %333 = arith.addi %8, %c7_i32 : i32
    %334 = vector.broadcast %333 : i32 to vector<8x1xi32>
    %335 = arith.cmpi slt, %334, %3 : vector<8x1xi32>
    %336 = vector.shape_cast %335 : vector<8x1xi1> to vector<8x1xi1>
    %337 = vector.broadcast %336 : vector<8x1xi1> to vector<8x128xi1>
    %338 = arith.select %337, %332, %296 : vector<8x128xi1>, vector<8x128xf32>
    %cst_77 = arith.constant 0.000000e+00 : f32
    %339 = vector.shape_cast %335 : vector<8x1xi1> to vector<8x1xi1>
    %340 = vector.broadcast %339 : vector<8x1xi1> to vector<8x128xi1>
    %341 = vector.broadcast %cst_77 : f32 to vector<8x128xf32>
    %342 = arith.select %340, %332, %341 : vector<8x128xi1>, vector<8x128xf32>
    %c0_78 = arith.constant 0 : index
    %c7_79 = arith.constant 7 : index
    %c0_80 = arith.constant 0 : index
    %343 = vector.load %arg6[%c0_78, %c7_79, %c0_80] : memref<8x8x128xf32, #tpu.memory_space<vmem>>, vector<8x1x128xf32>
    %344 = vector.shape_cast %343 : vector<8x1x128xf32> to vector<8x128xf32>
    %345 = vector.shape_cast %342 : vector<8x128xf32> to vector<8x1x128xf32>
    tpu.vector_store %arg6[%c0_78, %c7_79, %c0_80], %345 {strides = array<i32>} : memref<8x8x128xf32, #tpu.memory_space<vmem>>, vector<8x1x128xf32>,
    %c0_81 = arith.constant 0 : index
    %c0_82 = arith.constant 0 : index
    %346 = vector.load %arg8[%c0_81, %c0_82] : memref<8x128xf32, #tpu.memory_space<vmem>>, vector<8x128xf32>
    tpu.vector_store %arg8[%c0_81, %c0_82], %338 {strides = array<i32>} : memref<8x128xf32, #tpu.memory_space<vmem>>, vector<8x128xf32>,
    %c0_83 = arith.constant 0 : index
    %c0_84 = arith.constant 0 : index
    %347 = vector.load %arg7[%c0_83, %c0_84] : memref<8x128xf32, #tpu.memory_space<vmem>>, vector<8x128xf32>
    tpu.vector_store %arg7[%c0_83, %c0_84], %338 {strides = array<i32>} : memref<8x128xf32, #tpu.memory_space<vmem>>, vector<8x128xf32>,
    return
  }
  func.func @transform_0(%arg0: i32, %arg1: i32) -> (i32, i32, i32) {
    %c0_i32 = arith.constant 0 : i32
    %c0_i32_0 = arith.constant 0 : i32
    return %arg0, %arg1, %c0_i32 : i32, i32, i32
  }
  func.func @transform_1(%arg0: i32, %arg1: i32) -> (i32, i32) {
    %c0_i32 = arith.constant 0 : i32
    %c0_i32_0 = arith.constant 0 : i32
    return %arg0, %c0_i32 : i32, i32
  }
  func.func @transform_2(%arg0: i32, %arg1: i32) -> (i32, i32) {
    %c0_i32 = arith.constant 0 : i32
    %c0_i32_0 = arith.constant 0 : i32
    %c0_i32_1 = arith.constant 0 : i32
    return %c0_i32, %c0_i32_0 : i32, i32
  }
  func.func @transform_3(%arg0: i32, %arg1: i32) -> (i32, i32) {
    %c0_i32 = arith.constant 0 : i32
    %c0_i32_0 = arith.constant 0 : i32
    %c0_i32_1 = arith.constant 0 : i32
    return %c0_i32, %c0_i32_0 : i32, i32
  }
  func.func @transform_4(%arg0: i32, %arg1: i32) -> (i32, i32, i32) {
    %c0_i32 = arith.constant 0 : i32
    %c0_i32_0 = arith.constant 0 : i32
    return %arg0, %arg1, %c0_i32 : i32, i32, i32
  }
  func.func @transform_5(%arg0: i32, %arg1: i32) -> (i32, i32) {
    %c0_i32 = arith.constant 0 : i32
    %c0_i32_0 = arith.constant 0 : i32
    return %arg0, %c0_i32 : i32, i32
  }
}

</mosaic_0001>

<llo_original>
// kernel: encoder_forward.1
$region0: #{encoder_forward.1}
  #allocation0 [shape = 'u32[]', space=smem, size = 0x4, offset = 0x4, fixed_abs, tag = 'smem constant byte address 0x4 - core index']
  #allocation1 [shape = 'u32[144,128]{1,0:T(1,128)}', space=vmem, size = 0x12000, scoped, tag = 'internal scratch']
  #allocation2 [shape = 'f32[8,128]{1,0:T(8,128)}', space=vmem, size = 0x1000, scoped, tag = 'scratch operand']
  %s0 = inlined_call_operand.vmem [shape: f32[8,16,384], index: 0, kind: input, shape index: {}]
  %s1 = inlined_call_operand.vmem [shape: s32[8,1], index: 1, kind: input, shape index: {}]
  %s2 = inlined_call_operand.vmem [shape: bf16[128,384], index: 2, kind: input, shape index: {}]
  %s3 = inlined_call_operand.vmem [shape: f32[1,384], index: 3, kind: input, shape index: {}]
  %s4 = inlined_call_operand.vmem [shape: f32[8,16,128], index: 4, kind: output, shape index: {0}]
  %s5 = inlined_call_operand.vmem [shape: f32[8,128], index: 5, kind: output, shape index: {1}]
  %6 = xla_tuple %s4, %s5
  %s7 = sld [smem:[#allocation0]]
  $region118: #{encoder_forward.1} parent=0
    _
  %s9 = ssub.s32 1, %s7
  %s10 = scalar_select 0, %s9, %s7
  $region1: #{encoder_forward.1} parent=0
    #allocation3 [shape = 'u8[196608]{0}', space=vmem, size = 0x30000, scoped, tag = 'input window, operand 0']
    #allocation4 [shape = 'u8[65536]{0}', space=vmem, size = 0x10000, scoped, tag = 'output window, operand 0']
    loop: start=0, step=1, limit=4
    $region2: #{encoder_forward.1} parent=1 // loop_pre_header
      _
    $region3: #{encoder_forward.1} parent=1 // loop_header
      %s12 = sphi 0, %s16
      %p13 = scmp.ge.s32.totalorder %s12, 4
      %s19 = sphi 0, %s31
      %s20 = sphi 0, %s27
      %s21 = sphi 0, %s19
      %s22 = sphi 0, %s20
      %s23 = sphi 0, %s21
      %s24 = sphi 0, %s22
      %s36 = sphi 0, %s38
      %s39 = sphi 0, %s36
      %s40 = sphi 0, %s39
      %s56 = sphi 0, %s40
      %s62 = sphi 0, %s64
      %s65 = sphi 0, %s62
      %s66 = sphi 0, %s65
      %s82 = sphi 0, %s66
      %s86 = sphi 0, %s86
      %s88 = sphi 0, %s86
      %s89 = sphi 0, %s88
      %s103 = sphi 0, %s89
      %s107 = sphi 0, %s107
      %s109 = sphi 0, %s107
      %s110 = sphi 0, %s109
      %s124 = sphi 0, %s110
      %s132 = sphi 0, %s134
      %s135 = sphi 0, %s132
      %s136 = sphi 0, %s135
      %s152 = sphi 0, %s136
      %s158 = sphi 0, %s160
      %s161 = sphi 0, %s158
      %s162 = sphi 0, %s161
      %s178 = sphi 0, %s162
    $region4: #{encoder_forward.1} parent=1 // loop_header_branch
      %15 = sbr.rel (%p13) target = $region8
    $region5: #{encoder_forward.1} parent=1 // loop_body
      %s17 = ssub.s32 %s12, 1
      %s18 = ssub.s32 %s12, 2
      %s25 = sadd.s32 1, %s20
      %p26 = scmp.ge.s32.totalorder %s25, 2
      %s27 = scalar_select %p26, 0, %s25
      %s28 = sadd.s32 1, %s19
      %s29 = scalar_select %p26, %s28, %s19
      %p30 = scmp.ge.s32.totalorder %s29, 1
      %s31 = scalar_select %p30, 0, %s29
      %s32 = ssub.s32 %s19, %s31
      %s33 = ssub.s32 %s20, %s27
      %s34 = sor.u32 %s32, %s33
      %p35 = scmp.eq.s32.totalorder %s34, 0
      %s37 = sadd.s32 %s36, 1
      %s38 = scalar_select %p35, %s36, %s37
      %p41 = pneg %p35
      %p42 = scmp.eq.s32.totalorder %s12, 1
      %p43 = por %p41, %p42
      %p44 = scmp.ne.s32.totalorder %s36, %s39
      %p45 = scmp.eq.s32.totalorder %s12, 0
      %p46 = por %p44, %p45
      %p47 = scmp.ne.s32.totalorder %s36, %s39
      %p48 = scmp.eq.s32.totalorder %s17, 1
      %p49 = por %p47, %p48
      %p50 = scmp.ne.s32.totalorder %s39, %s40
      %p51 = scmp.eq.s32.totalorder %s17, 0
      %p52 = por %p50, %p51
      %p53 = scmp.ne.s32.totalorder %s39, %s40
      %p54 = scmp.eq.s32.totalorder %s18, 1
      %p55 = por %p53, %p54
      %p57 = scmp.ne.s32.totalorder %s40, %s56
      %p58 = scmp.eq.s32.totalorder %s18, 0
      %p59 = por %p57, %p58
      %s60 = ssub.s32 %s19, %s31
      %p61 = scmp.eq.s32.totalorder %s60, 0
      %s63 = sadd.s32 %s62, 1
      %s64 = scalar_select %p61, %s62, %s63
      %p67 = pneg %p61
      %p68 = scmp.eq.s32.totalorder %s12, 1
      %p69 = por %p67, %p68
      %p70 = scmp.ne.s32.totalorder %s62, %s65
      %p71 = scmp.eq.s32.totalorder %s12, 0
      %p72 = por %p70, %p71
      %p73 = scmp.ne.s32.totalorder %s62, %s65
      %p74 = scmp.eq.s32.totalorder %s17, 1
      %p75 = por %p73, %p74
      %p76 = scmp.ne.s32.totalorder %s65, %s66
      %p77 = scmp.eq.s32.totalorder %s17, 0
      %p78 = por %p76, %p77
      %p79 = scmp.ne.s32.totalorder %s65, %s66
      %p80 = scmp.eq.s32.totalorder %s18, 1
      %p81 = por %p79, %p80
      %p83 = scmp.ne.s32.totalorder %s66, %s82
      %p84 = scmp.eq.s32.totalorder %s18, 0
      %p85 = por %p83, %p84
      %s87 = sadd.s32 %s86, 1
      %p90 = scmp.eq.s32.totalorder %s12, 1
      %p91 = scmp.ne.s32.totalorder %s86, %s88
      %p92 = scmp.eq.s32.totalorder %s12, 0
      %p93 = por %p91, %p92
      %p94 = scmp.ne.s32.totalorder %s86, %s88
      %p95 = scmp.eq.s32.totalorder %s17, 1
      %p96 = por %p94, %p95
      %p97 = scmp.ne.s32.totalorder %s88, %s89
      %p98 = scmp.eq.s32.totalorder %s17, 0
      %p99 = por %p97, %p98
      %p100 = scmp.ne.s32.totalorder %s88, %s89
      %p101 = scmp.eq.s32.totalorder %s18, 1
      %p102 = por %p100, %p101
      %p104 = scmp.ne.s32.totalorder %s89, %s103
      %p105 = scmp.eq.s32.totalorder %s18, 0
      %p106 = por %p104, %p105
      %s108 = sadd.s32 %s107, 1
      %p111 = scmp.eq.s32.totalorder %s12, 1
      %p112 = scmp.ne.s32.totalorder %s107, %s109
      %p113 = scmp.eq.s32.totalorder %s12, 0
      %p114 = por %p112, %p113
      %p115 = scmp.ne.s32.totalorder %s107, %s109
      %p116 = scmp.eq.s32.totalorder %s17, 1
      %p117 = por %p115, %p116
      %p118 = scmp.ne.s32.totalorder %s109, %s110
      %p119 = scmp.eq.s32.totalorder %s17, 0
      %p120 = por %p118, %p119
      %p121 = scmp.ne.s32.totalorder %s109, %s110
      %p122 = scmp.eq.s32.totalorder %s18, 1
      %p123 = por %p121, %p122
      %p125 = scmp.ne.s32.totalorder %s110, %s124
      %p126 = scmp.eq.s32.totalorder %s18, 0
      %p127 = por %p125, %p126
      %s128 = ssub.s32 %s19, %s31
      %s129 = ssub.s32 %s20, %s27
      %s130 = sor.u32 %s128, %s129
      %p131 = scmp.eq.s32.totalorder %s130, 0
      %s133 = sadd.s32 %s132, 1
      %s134 = scalar_select %p131, %s132, %s133
      %p137 = pneg %p131
      %p138 = scmp.eq.s32.totalorder %s12, 1
      %p139 = por %p137, %p138
      %p140 = scmp.ne.s32.totalorder %s132, %s135
      %p141 = scmp.eq.s32.totalorder %s12, 0
      %p142 = por %p140, %p141
      %p143 = scmp.ne.s32.totalorder %s132, %s135
      %p144 = scmp.eq.s32.totalorder %s17, 1
      %p145 = por %p143, %p144
      %p146 = scmp.ne.s32.totalorder %s135, %s136
      %p147 = scmp.eq.s32.totalorder %s17, 0
      %p148 = por %p146, %p147
      %p149 = scmp.ne.s32.totalorder %s135, %s136
      %p150 = scmp.eq.s32.totalorder %s18, 1
      %p151 = por %p149, %p150
      %p153 = scmp.ne.s32.totalorder %s136, %s152
      %p154 = scmp.eq.s32.totalorder %s18, 0
      %p155 = por %p153, %p154
      %s156 = ssub.s32 %s19, %s31
      %p157 = scmp.eq.s32.totalorder %s156, 0
      %s159 = sadd.s32 %s158, 1
      %s160 = scalar_select %p157, %s158, %s159
      %p163 = pneg %p157
      %p164 = scmp.eq.s32.totalorder %s12, 1
      %p165 = por %p163, %p164
      %p166 = scmp.ne.s32.totalorder %s158, %s161
      %p167 = scmp.eq.s32.totalorder %s12, 0
      %p168 = por %p166, %p167
      %p169 = scmp.ne.s32.totalorder %s158, %s161
      %p170 = scmp.eq.s32.totalorder %s17, 1
      %p171 = por %p169, %p170
      %p172 = scmp.ne.s32.totalorder %s161, %s162
      %p173 = scmp.eq.s32.totalorder %s17, 0
      %p174 = por %p172, %p173
      %p175 = scmp.ne.s32.totalorder %s161, %s162
      %p176 = scmp.eq.s32.totalorder %s18, 1
      %p177 = por %p175, %p176
      %p179 = scmp.ne.s32.totalorder %s162, %s178
      %p180 = scmp.eq.s32.totalorder %s18, 0
      %p181 = por %p179, %p180
      %p182 = scmp.le.s32.totalorder 1, %s12
      %p183 = scmp.lt.s32.totalorder %s12, 3
      %p184 = pnand %p182, %p183
      %p185 = pneg %p184
      // Predicated region
      $region9: #{encoder_forward.1} parent=5 // pred_check
        _
      $region10: #{encoder_forward.1} parent=5 // pred_check_branch
        %187 = sbr.rel (%p184) target = $region12
      $region11: #{encoder_forward.1} parent=5 // pred_region
        %s188 = ssub.s32 %s12, 1
        // Predicated region
        $region13: #{encoder_forward.1} parent=11 // pred_check
          %p189 = pneg %p78
        $region14: #{encoder_forward.1} parent=11 // pred_check_branch
          %191 = sbr.rel (%p189) target = $region16
        $region15: #{encoder_forward.1} parent=11 // pred_region
          %p192 = scmp.lt.s32.totalorder %s21, 0
          %s193 = scalar_select %p192, %s21, 0
          %s194 = smul.addr %s193, 8
          %s195 = scalar_lea.vmem %s1, %s194
        $region16: #{encoder_forward.1} parent=11 // pred_fallthru
          _
        // Predicated region
        $region17: #{encoder_forward.1} parent=11 // pred_check
          %p196 = pneg %p99
        $region18: #{encoder_forward.1} parent=11 // pred_check_branch
          %198 = sbr.rel (%p196) target = $region20
        $region19: #{encoder_forward.1} parent=11 // pred_region
          _
        $region20: #{encoder_forward.1} parent=11 // pred_fallthru
          _
        // Predicated region
        $region21: #{encoder_forward.1} parent=11 // pred_check
          %p199 = pneg %p120
        $region22: #{encoder_forward.1} parent=11 // pred_check_branch
          %201 = sbr.rel (%p199) target = $region24
        $region23: #{encoder_forward.1} parent=11 // pred_region
          _
        $region24: #{encoder_forward.1} parent=11 // pred_fallthru
          _
      $region12: #{encoder_forward.1} parent=5 // pred_fallthru
        _
      %p202 = scmp.lt.s32.totalorder %s12, 2
      // Predicated region
      $region25: #{encoder_forward.1} parent=5 // pred_check
        %p203 = pneg %p202
      $region26: #{encoder_forward.1} parent=5 // pred_check_branch
        %205 = sbr.rel (%p203) target = $region28
      $region27: #{encoder_forward.1} parent=5 // pred_region
        // Predicated region
        $region29: #{encoder_forward.1} parent=27 // pred_check
          %p206 = pneg %p46
        $region30: #{encoder_forward.1} parent=27 // pred_check_branch
          %208 = sbr.rel (%p206) target = $region32
        $region31: #{encoder_forward.1} parent=27 // pred_region
          %s209 = sand.u32 %s36, 1
          %s210 = sand.u32 %s36, 1
          %s211 = smul.addr %s210, 192
          %s212 = scalar_lea.vmem [#allocation3], %s211
          %s213 = smul.u32 8, %s19
          %s214 = smul.addr %s20, 3
          %s215 = smul.addr %s213, 6
          %s216 = sadd.s32 %s214, %s215
          %s217 = smul.addr %s216, 8
          %s218 = scalar_lea.vmem %s0, %s217
          // Predicated region
          $region33: #{encoder_forward.1} parent=31 // pred_check
            _
          $region34: #{encoder_forward.1} parent=31 // pred_check_branch
            %220 = sbr.rel (0) target = $region36
          $region35: #{encoder_forward.1} parent=31 // pred_region
            // Predicated region
            $region37: #{encoder_forward.1} parent=35 // pred_check
              _
            $region38: #{encoder_forward.1} parent=35 // pred_check_branch
              %222 = sbr.rel (0) target = $region40
            $region39: #{encoder_forward.1} parent=35 // pred_region
              loop: start=0, step=1, limit=1
              $region41: #{encoder_forward.1} parent=39 // loop_pre_header
                _
              $region42: #{encoder_forward.1} parent=39 // loop_header
                %s224 = sphi 0, %s228
                %p225 = scmp.ge.s32.totalorder %s224, 1
                %s229 = sphi %s218, %s218
                %s230 = sphi %s212, %s212
              $region43: #{encoder_forward.1} parent=39 // loop_header_branch
                %227 = sbr.rel (%p225) target = $region47
              $region44: #{encoder_forward.1} parent=39 // loop_body
                %v231 = vld [vmem:[%s229] sm:$0xff]
                %232 = vst [vmem:[%s230] sm:$0xff] %v231
                %v233 = vld [vmem:[%s229 + $0x8] sm:$0xff]
                %234 = vst [vmem:[%s230 + $0x8] sm:$0xff] %v233
                %v235 = vld [vmem:[%s229 + $0x10] sm:$0xff]
                %236 = vst [vmem:[%s230 + $0x10] sm:$0xff] %v235
                %v237 = vld [vmem:[%s229 + $0x30] sm:$0xff]
                %238 = vst [vmem:[%s230 + $0x18] sm:$0xff] %v237
                %v239 = vld [vmem:[%s229 + $0x38] sm:$0xff]
                %240 = vst [vmem:[%s230 + $0x20] sm:$0xff] %v239
                %v241 = vld [vmem:[%s229 + $0x40] sm:$0xff]
                %242 = vst [vmem:[%s230 + $0x28] sm:$0xff] %v241
                %v243 = vld [vmem:[%s229 + $0x60] sm:$0xff]
                %244 = vst [vmem:[%s230 + $0x30] sm:$0xff] %v243
                %v245 = vld [vmem:[%s229 + $0x68] sm:$0xff]
                %246 = vst [vmem:[%s230 + $0x38] sm:$0xff] %v245
                %v247 = vld [vmem:[%s229 + $0x70] sm:$0xff]
                %248 = vst [vmem:[%s230 + $0x40] sm:$0xff] %v247
                %v249 = vld [vmem:[%s229 + $0x90] sm:$0xff]
                %250 = vst [vmem:[%s230 + $0x48] sm:$0xff] %v249
                %v251 = vld [vmem:[%s229 + $0x98] sm:$0xff]
                %252 = vst [vmem:[%s230 + $0x50] sm:$0xff] %v251
                %v253 = vld [vmem:[%s229 + $0xa0] sm:$0xff]
                %254 = vst [vmem:[%s230 + $0x58] sm:$0xff] %v253
                %v255 = vld [vmem:[%s229 + $0xc0] sm:$0xff]
                %256 = vst [vmem:[%s230 + $0x60] sm:$0xff] %v255
                %v257 = vld [vmem:[%s229 + $0xc8] sm:$0xff]
                %258 = vst [vmem:[%s230 + $0x68] sm:$0xff] %v257
                %v259 = vld [vmem:[%s229 + $0xd0] sm:$0xff]
                %260 = vst [vmem:[%s230 + $0x70] sm:$0xff] %v259
                %v261 = vld [vmem:[%s229 + $0xf0] sm:$0xff]
                %262 = vst [vmem:[%s230 + $0x78] sm:$0xff] %v261
                %v263 = vld [vmem:[%s229 + $0xf8] sm:$0xff]
                %264 = vst [vmem:[%s230 + $0x80] sm:$0xff] %v263
                %v265 = vld [vmem:[%s229 + $0x100] sm:$0xff]
                %266 = vst [vmem:[%s230 + $0x88] sm:$0xff] %v265
                %v267 = vld [vmem:[%s229 + $0x120] sm:$0xff]
                %268 = vst [vmem:[%s230 + $0x90] sm:$0xff] %v267
                %v269 = vld [vmem:[%s229 + $0x128] sm:$0xff]
                %270 = vst [vmem:[%s230 + $0x98] sm:$0xff] %v269
                %v271 = vld [vmem:[%s229 + $0x130] sm:$0xff]
                %272 = vst [vmem:[%s230 + $0xa0] sm:$0xff] %v271
                %v273 = vld [vmem:[%s229 + $0x150] sm:$0xff]
                %274 = vst [vmem:[%s230 + $0xa8] sm:$0xff] %v273
                %v275 = vld [vmem:[%s229 + $0x158] sm:$0xff]
                %276 = vst [vmem:[%s230 + $0xb0] sm:$0xff] %v275
                %v277 = vld [vmem:[%s229 + $0x160] sm:$0xff]
                %278 = vst [vmem:[%s230 + $0xb8] sm:$0xff] %v277
              $region45: #{encoder_forward.1} parent=39 // loop_footer
                %s228 = sadd.s32 1, %s224
              $region46: #{encoder_forward.1} parent=39 // loop_footer_branch
                %223 = sbr.rel target = $region42
              $region47: #{encoder_forward.1} parent=39 // loop_exit
                _
            $region40: #{encoder_forward.1} parent=35 // pred_fallthru
              _
            // Predicated region
            $region48: #{encoder_forward.1} parent=35 // pred_check
              _
            $region49: #{encoder_forward.1} parent=35 // pred_check_branch
              %280 = sbr.rel target = $region51
            $region50: #{encoder_forward.1} parent=35 // pred_region
              _
            $region51: #{encoder_forward.1} parent=35 // pred_fallthru
              _
          $region36: #{encoder_forward.1} parent=31 // pred_fallthru
            _
          %281 = vnop
        $region32: #{encoder_forward.1} parent=27 // pred_fallthru
          _
      $region28: #{encoder_forward.1} parent=5 // pred_fallthru
        _
      %p282 = scmp.le.s32.totalorder 1, %s12
      %p283 = scmp.lt.s32.totalorder %s12, 3
      %p284 = pnand %p282, %p283
      %p285 = pneg %p284
      // Predicated region
      $region52: #{encoder_forward.1} parent=5 // pred_check
        _
      $region53: #{encoder_forward.1} parent=5 // pred_check_branch
        %287 = sbr.rel (%p284) target = $region55
      $region54: #{encoder_forward.1} parent=5 // pred_region
        %s288 = ssub.s32 %s12, 1
        %s289 = sand.u32 %s39, 1
        %s290 = sand.u32 %s39, 1
        %s291 = smul.addr %s290, 192
        %s292 = scalar_lea.vmem [#allocation3], %s291
        // Predicated region
        $region56: #{encoder_forward.1} parent=54 // pred_check
          %p293 = pneg %p52
        $region57: #{encoder_forward.1} parent=54 // pred_check_branch
          %295 = sbr.rel (%p293) target = $region59
        $region58: #{encoder_forward.1} parent=54 // pred_region
          _
        $region59: #{encoder_forward.1} parent=54 // pred_fallthru
          _
        %s296 = sand.u32 %s39, 1
        %s297 = sand.u32 %s39, 1
        %s298 = smul.addr %s297, 192
        %s299 = scalar_lea.vmem [#allocation3], %s298
        %p300 = pneg %p52
        %p301 = pneg %p49
        %p302 = scmp.lt.s32.totalorder %s21, 0
        %s303 = scalar_select %p302, %s21, 0
        %s304 = smul.addr %s303, 8
        %s305 = scalar_lea.vmem %s1, %s304
        %p306 = pneg %p78
        %p307 = pneg %p75
        %p308 = pneg %p99
        %p309 = pneg %p96
        %p310 = pneg %p120
        %p311 = pneg %p117
        %p312 = pneg %p148
        %p313 = pneg %p145
        %s314 = sand.u32 %s135, 1
        %s315 = sand.u32 %s135, 1
        %s316 = smul.addr %s315, 64
        %s317 = scalar_lea.vmem [#allocation4], %s316
        %p318 = pneg %p174
        %p319 = pneg %p171
        %p320 = scmp.lt.s32.totalorder %s21, 0
        %s321 = scalar_select %p320, %s21, 0
        %s322 = smul.addr %s321, 8
        %s323 = scalar_lea.vmem %s5, %s322
        %s324 = smul.u32 8, %s21
        %p325 = scmp.lt.s32.totalorder %s21, 0
        %s326 = scalar_select %p325, %s21, 0
        %s327 = smul.addr %s326, 8
        %s328 = scalar_lea.vmem %s1, %s327
        %s329 = smul.u32 8, %s21
        %p330 = scmp.lt.s32.totalorder %s21, 0
        %s331 = scalar_select %p330, %s21, 0
        %s332 = smul.addr %s331, 8
        %s333 = scalar_lea.vmem %s5, %s332
        %p335 = scmp.eq.s32.totalorder %s22, 0
        // Predicated region
        $region60: #{encoder_forward.1} parent=54 // pred_check
          %p336 = pneg %p335
        $region61: #{encoder_forward.1} parent=54 // pred_check_branch
          %338 = sbr.rel (%p336) target = $region63
        $region62: #{encoder_forward.1} parent=54 // pred_region
          %339 = vst [vmem:[#allocation2] sm:$0xff] 0.0
        $region63: #{encoder_forward.1} parent=54 // pred_fallthru
          _
        %v340 = vld [vmem:[%s328] sm:$0xff]
        %v341 = vld [vmem:[%s2] sm:$0xff]
        %v342 = vld [vmem:[%s2 + $0x8] sm:$0xf]
        %v343 = vld [vmem:[%s2 + $0xc] sm:$0xff]
        %v344 = vld [vmem:[%s2 + $0x14] sm:$0xf]
        %v345 = vld [vmem:[%s2 + $0x18] sm:$0xff]
        %v346 = vld [vmem:[%s2 + $0x20] sm:$0xf]
        %v347 = vld [vmem:[%s2 + $0x24] sm:$0xff]
        %v348 = vld [vmem:[%s2 + $0x2c] sm:$0xf]
        %v349 = vld [vmem:[%s2 + $0x30] sm:$0xff]
        %v350 = vld [vmem:[%s2 + $0x38] sm:$0xf]
        %v351 = vld [vmem:[%s2 + $0x3c] sm:$0xff]
        %v352 = vld [vmem:[%s2 + $0x44] sm:$0xf]
        %v353 = vld [vmem:[%s2 + $0x48] sm:$0xff]
        %v354 = vld [vmem:[%s2 + $0x50] sm:$0xf]
        %v355 = vld [vmem:[%s2 + $0x54] sm:$0xff]
        %v356 = vld [vmem:[%s2 + $0x5c] sm:$0xf]
        %v357 = vld [vmem:[%s2 + $0x60] sm:$0xff]
        %v358 = vld [vmem:[%s2 + $0x68] sm:$0xf]
        %v359 = vld [vmem:[%s2 + $0x6c] sm:$0xff]
        %v360 = vld [vmem:[%s2 + $0x74] sm:$0xf]
        %v361 = vld [vmem:[%s2 + $0x78] sm:$0xff]
        %v362 = vld [vmem:[%s2 + $0x80] sm:$0xf]
        %v363 = vld [vmem:[%s2 + $0x84] sm:$0xff]
        %v364 = vld [vmem:[%s2 + $0x8c] sm:$0xf]
        %v365 = vld [vmem:[%s2 + $0x90] sm:$0xff]
        %v366 = vld [vmem:[%s2 + $0x98] sm:$0xf]
        %v367 = vld [vmem:[%s2 + $0x9c] sm:$0xff]
        %v368 = vld [vmem:[%s2 + $0xa4] sm:$0xf]
        %v369 = vld [vmem:[%s2 + $0xa8] sm:$0xff]
        %v370 = vld [vmem:[%s2 + $0xb0] sm:$0xf]
        %v371 = vld [vmem:[%s2 + $0xb4] sm:$0xff]
        %v372 = vld [vmem:[%s2 + $0xbc] sm:$0xf]
        %v373 = vld [vmem:[%s3] sm:$0x7]
        %v375 = vlaneseq
        %v376 = vshrl.u32 %v375, 7
        %v377 = vsub.s32 0, %v376
        %v378 = vrot.slane %v373, %v377
        %v379 = vlaneseq
        %v380 = vshrl.u32 %v379, 7
        %v381 = vsub.s32 1, %v380
        %v382 = vrot.slane %v373, %v381
        %v383 = vlaneseq
        %v384 = vshrl.u32 %v383, 7
        %v385 = vsub.s32 2, %v384
        %v386 = vrot.slane %v373, %v385
        %s390 = smul.u32 %s22, 8
        %v391 = vld [vmem:[#allocation2] sm:$0xff]
        %v392 = vld [vmem:[%s292] ss:$8 sm:$0x7]
        %s393 = scalar_lea.vmem %s292, 24 [#allocation3]
        %v394 = vld [vmem:[%s393] ss:$8 sm:$0x7]
        %s395 = scalar_lea.vmem %s292, 48 [#allocation3]
        %v396 = vld [vmem:[%s395] ss:$8 sm:$0x7]
        %s397 = scalar_lea.vmem %s292, 72 [#allocation3]
        %v398 = vld [vmem:[%s397] ss:$8 sm:$0x7]
        %s399 = scalar_lea.vmem %s292, 96 [#allocation3]
        %v400 = vld [vmem:[%s399] ss:$8 sm:$0x7]
        %s401 = scalar_lea.vmem %s292, 120 [#allocation3]
        %v402 = vld [vmem:[%s401] ss:$8 sm:$0x7]
        %s403 = scalar_lea.vmem %s292, 144 [#allocation3]
        %v404 = vld [vmem:[%s403] ss:$8 sm:$0x7]
        %s405 = scalar_lea.vmem %s292, 168 [#allocation3]
        %v406 = vld [vmem:[%s405] ss:$8 sm:$0x7]
        %v407 = vpack.c.bf16 %v391, %v391
        %v440 = vunpack.c.l.b16 %v341
        %v441 = vunpack.c.h.b16 %v341
        %v442 = vunpack.c.l.b16 %v342
        %v443 = vunpack.c.l.b16 %v343
        %v444 = vunpack.c.h.b16 %v343
        %v445 = vunpack.c.l.b16 %v344
        %v446 = vunpack.c.l.b16 %v345
        %v447 = vunpack.c.h.b16 %v345
        %v448 = vunpack.c.l.b16 %v346
        %v449 = vunpack.c.l.b16 %v347
        %v450 = vunpack.c.h.b16 %v347
        %v451 = vunpack.c.l.b16 %v348
        %v452 = vunpack.c.l.b16 %v349
        %v453 = vunpack.c.h.b16 %v349
        %v454 = vunpack.c.l.b16 %v350
        %v455 = vunpack.c.l.b16 %v351
        %v456 = vunpack.c.h.b16 %v351
        %v457 = vunpack.c.l.b16 %v352
        %v458 = vunpack.c.l.b16 %v353
        %v459 = vunpack.c.h.b16 %v353
        %v460 = vunpack.c.l.b16 %v354
        %v461 = vunpack.c.l.b16 %v355
        %v462 = vunpack.c.h.b16 %v355
        %v463 = vunpack.c.l.b16 %v356
        %v464 = vunpack.c.l.b16 %v357
        %v465 = vunpack.c.h.b16 %v357
        %v466 = vunpack.c.l.b16 %v358
        %v467 = vunpack.c.l.b16 %v359
        %v468 = vunpack.c.h.b16 %v359
        %v469 = vunpack.c.l.b16 %v360
        %v470 = vunpack.c.l.b16 %v361
        %v471 = vunpack.c.h.b16 %v361
        %v472 = vunpack.c.l.b16 %v362
        %v473 = vunpack.c.l.b16 %v363
        %v474 = vunpack.c.h.b16 %v363
        %v475 = vunpack.c.l.b16 %v364
        %v476 = vunpack.c.l.b16 %v365
        %v477 = vunpack.c.h.b16 %v365
        %v478 = vunpack.c.l.b16 %v366
        %v479 = vunpack.c.l.b16 %v367
        %v480 = vunpack.c.h.b16 %v367
        %v481 = vunpack.c.l.b16 %v368
        %v482 = vunpack.c.l.b16 %v369
        %v483 = vunpack.c.h.b16 %v369
        %v484 = vunpack.c.l.b16 %v370
        %v485 = vunpack.c.l.b16 %v371
        %v486 = vunpack.c.h.b16 %v371
        %v487 = vunpack.c.l.b16 %v372
        %v488 = vpack.c.b16 %v443, %v440
        %v489 = vpack.c.b16 %v444, %v441
        %v490 = vpack.c.b16 %v445, %v442
        %v491 = vpack.c.b16 %v449, %v446
        %v492 = vpack.c.b16 %v450, %v447
        %v493 = vpack.c.b16 %v451, %v448
        %v494 = vpack.c.b16 %v455, %v452
        %v495 = vpack.c.b16 %v456, %v453
        %v496 = vpack.c.b16 %v457, %v454
        %v497 = vpack.c.b16 %v461, %v458
        %v498 = vpack.c.b16 %v462, %v459
        %v499 = vpack.c.b16 %v463, %v460
        %v500 = vpack.c.b16 %v467, %v464
        %v501 = vpack.c.b16 %v468, %v465
        %v502 = vpack.c.b16 %v469, %v466
        %v503 = vpack.c.b16 %v473, %v470
        %v504 = vpack.c.b16 %v474, %v471
        %v505 = vpack.c.b16 %v475, %v472
        %v506 = vpack.c.b16 %v479, %v476
        %v507 = vpack.c.b16 %v480, %v477
        %v508 = vpack.c.b16 %v481, %v478
        %v509 = vpack.c.b16 %v485, %v482
        %v510 = vpack.c.b16 %v486, %v483
        %v511 = vpack.c.b16 %v487, %v484
        %536 = vmatprep.subr.bf16.mxu0 %v489
        %537 = vmatpush1.bf16.msra.mxu0 %v488
        %538 = vmatprep.subr.bf16.mxu0 %v492
        %539 = vmatpush1.bf16.msra.mxu0 %v491
        %540 = vmatprep.subr.bf16.mxu0 %v495
        %541 = vmatpush1.bf16.msra.mxu0 %v494
        %542 = vmatprep.subr.bf16.mxu0 %v498
        %543 = vmatpush1.bf16.msra.mxu0 %v497
        %544 = vmatprep.subr.bf16.mxu0 %v501
        %545 = vmatpush1.bf16.msra.mxu0 %v500
        %546 = vmatprep.subr.bf16.mxu0 %v504
        %547 = vmatpush1.bf16.msra.mxu0 %v503
        %548 = vmatprep.subr.bf16.mxu0 %v507
        %549 = vmatpush1.bf16.msra.mxu0 %v506
        %550 = vmatprep.subr.bf16.mxu0 %v510
        %551 = vmatpush1.bf16.msra.mxu0 %v509
        %552 = vmatprep.subr.bf16.mxu0 0
        %553 = vmatpush1.bf16.msra.mxu0 0
        %554 = vmatprep.subr.bf16.mxu0 0
        %555 = vmatpush1.bf16.msra.mxu0 0
        %556 = vmatprep.subr.bf16.mxu0 0
        %557 = vmatpush1.bf16.msra.mxu0 0
        %558 = vmatprep.subr.bf16.mxu0 0
        %559 = vmatpush1.bf16.msra.mxu0 0
        %560 = vmatprep.subr.bf16.mxu0 0
        %561 = vmatpush1.bf16.msra.mxu0 0
        %562 = vmatprep.subr.bf16.mxu0 0
        %563 = vmatpush1.bf16.msra.mxu0 0
        %564 = vmatprep.subr.bf16.mxu0 0
        %565 = vmatpush1.bf16.msra.mxu0 0
        %566 = vmatprep.subr.bf16.mxu0 0
        %567 = vmatpush1.bf16.msra.mxu0 0
        %568 = vmatprep.mubr.bf16.mxu0 0
        %569 = vmatmul.mubr.bf16.gmra.mrb[0].mxu0 %v407
        %v570 = vpop.f32.mrb[0].mxu0
        %v571 = vadd.f32 %v378, %v570
        %v572 = vpop.f32.mrb[0].mxu0
        %v573 = vadd.f32 %v382, %v572
        %v574 = vpop.f32.mrb[0].mxu0
        %v575 = vpop.f32.mrb[0].mxu0
        %576 = vdwg.mxu0
        %577 = vmatprep.subr.bf16.mxu0 0
        %578 = vmatpush1.bf16.msra.mxu0 %v490
        %579 = vmatprep.subr.bf16.mxu0 0
        %580 = vmatpush1.bf16.msra.mxu0 %v493
        %581 = vmatprep.subr.bf16.mxu0 0
        %582 = vmatpush1.bf16.msra.mxu0 %v496
        %583 = vmatprep.subr.bf16.mxu0 0
        %584 = vmatpush1.bf16.msra.mxu0 %v499
        %585 = vmatprep.subr.bf16.mxu0 0
        %586 = vmatpush1.bf16.msra.mxu0 %v502
        %587 = vmatprep.subr.bf16.mxu0 0
        %588 = vmatpush1.bf16.msra.mxu0 %v505
        %589 = vmatprep.subr.bf16.mxu0 0
        %590 = vmatpush1.bf16.msra.mxu0 %v508
        %591 = vmatprep.subr.bf16.mxu0 0
        %592 = vmatpush1.bf16.msra.mxu0 %v511
        %593 = vmatprep.subr.bf16.mxu0 0
        %594 = vmatpush1.bf16.msra.mxu0 0
        %595 = vmatprep.subr.bf16.mxu0 0
        %596 = vmatpush1.bf16.msra.mxu0 0
        %597 = vmatprep.subr.bf16.mxu0 0
        %598 = vmatpush1.bf16.msra.mxu0 0
        %599 = vmatprep.subr.bf16.mxu0 0
        %600 = vmatpush1.bf16.msra.mxu0 0
        %601 = vmatprep.subr.bf16.mxu0 0
        %602 = vmatpush1.bf16.msra.mxu0 0
        %603 = vmatprep.subr.bf16.mxu0 0
        %604 = vmatpush1.bf16.msra.mxu0 0
        %605 = vmatprep.subr.bf16.mxu0 0
        %606 = vmatpush1.bf16.msra.mxu0 0
        %607 = vmatprep.subr.bf16.mxu0 0
        %608 = vmatpush1.bf16.msra.mxu0 0
        %609 = vmatprep.mubr.bf16.mxu0 0
        %610 = vmatmul.mubr.bf16.gmra.mrb[0].mxu0 %v407
        %v611 = vpop.f32.mrb[0].mxu0
        %v612 = vadd.f32 %v386, %v611
        %v613 = vpop.f32.mrb[0].mxu0
        %v614 = vpop.f32.mrb[0].mxu0
        %v615 = vpop.f32.mrb[0].mxu0
        %616 = vdwg.mxu0
        %v618 = vcombine.high %v571, %v571
        %v620 = vunpack.c.l.s4 1966171168
        %v621 = vunpack.c.0.s8 %v620
        %v622 = vlaneseq
        %v623 = vshrl.u32 %v622, 7
        %v624 = vsub.s32 %v621, %v623
        %v625 = vrot.slane %v571, %v624
        %v627 = vunpack.c.l.s4 1966171168
        %v628 = vunpack.c.0.s8 %v627
        %v629 = vlaneseq
        %v630 = vshrl.u32 %v629, 7
        %v631 = vsub.s32 %v628, %v630
        %v632 = vrot.slane %v618, %v631
        %v633 = vcombine.high %v625, %v625
        %v634 = vcombine.high %v632, %v632
        %v636 = vunpack.c.l.s4 1966171168
        %v637 = vunpack.c.0.s8 %v636
        %v638 = vlaneseq
        %v639 = vshrl.u32 %v638, 7
        %v640 = vsub.s32 %v637, %v639
        %v641 = vrot.slane %v625, %v640
        %v643 = vunpack.c.l.s4 1966171168
        %v644 = vunpack.c.0.s8 %v643
        %v645 = vlaneseq
        %v646 = vshrl.u32 %v645, 7
        %v647 = vsub.s32 %v644, %v646
        %v648 = vrot.slane %v632, %v647
        %v650 = vunpack.c.l.s4 1966171168
        %v651 = vunpack.c.0.s8 %v650
        %v652 = vlaneseq
        %v653 = vshrl.u32 %v652, 7
        %v654 = vsub.s32 %v651, %v653
        %v655 = vrot.slane %v633, %v654
        %v657 = vunpack.c.l.s4 1966171168
        %v658 = vunpack.c.0.s8 %v657
        %v659 = vlaneseq
        %v660 = vshrl.u32 %v659, 7
        %v661 = vsub.s32 %v658, %v660
        %v662 = vrot.slane %v634, %v661
        %v663 = vcombine.high %v641, %v641
        %v664 = vcombine.high %v648, %v648
        %v665 = vcombine.high %v655, %v655
        %v666 = vcombine.high %v662, %v662
        %v675 = vadd.f32 %v392, %v641
        %v676 = vadd.f32 %v394, %v655
        %v677 = vadd.f32 %v396, %v663
        %v678 = vadd.f32 %v398, %v665
        %v679 = vadd.f32 %v400, %v648
        %v680 = vadd.f32 %v402, %v662
        %v681 = vadd.f32 %v404, %v664
        %v682 = vadd.f32 %v406, %v666
        %v683 = vxor.u32 %v675, 2147483648
        %v684 = vxor.u32 %v676, 2147483648
        %v685 = vxor.u32 %v677, 2147483648
        %v686 = vxor.u32 %v678, 2147483648
        %v687 = vxor.u32 %v679, 2147483648
        %v688 = vxor.u32 %v680, 2147483648
        %v689 = vxor.u32 %v681, 2147483648
        %v690 = vxor.u32 %v682, 2147483648
        %v691 = vmul.f32 %v683, 1.442695
        %v692 = vpow.pop %v691
        %v693 = vmul.f32 %v684, 1.442695
        %v694 = vpow.pop %v693
        %v695 = vmul.f32 %v685, 1.442695
        %v696 = vpow.pop %v695
        %v697 = vmul.f32 %v686, 1.442695
        %v698 = vpow.pop %v697
        %v699 = vmul.f32 %v687, 1.442695
        %v700 = vpow.pop %v699
        %v701 = vmul.f32 %v688, 1.442695
        %v702 = vpow.pop %v701
        %v703 = vmul.f32 %v689, 1.442695
        %v704 = vpow.pop %v703
        %v705 = vmul.f32 %v690, 1.442695
        %v706 = vpow.pop %v705
        %v707 = vadd.f32 %v692, 1.0
        %v708 = vadd.f32 %v694, 1.0
        %v709 = vadd.f32 %v696, 1.0
        %v710 = vadd.f32 %v698, 1.0
        %v711 = vadd.f32 %v700, 1.0
        %v712 = vadd.f32 %v702, 1.0
        %v713 = vadd.f32 %v704, 1.0
        %v714 = vadd.f32 %v706, 1.0
        %v715 = vrcp.pop %v707
        %v716 = vmul.f32 1.0, %v715
        %v717 = vrcp.pop %v708
        %v718 = vmul.f32 1.0, %v717
        %v719 = vrcp.pop %v709
        %v720 = vmul.f32 1.0, %v719
        %v721 = vrcp.pop %v710
        %v722 = vmul.f32 1.0, %v721
        %v723 = vrcp.pop %v711
        %v724 = vmul.f32 1.0, %v723
        %v725 = vrcp.pop %v712
        %v726 = vmul.f32 1.0, %v725
        %v727 = vrcp.pop %v713
        %v728 = vmul.f32 1.0, %v727
        %v729 = vrcp.pop %v714
        %v730 = vmul.f32 1.0, %v729
        %v739 = vrot.slane %v392, 1
        %v740 = vrot.slane %v394, 1
        %v741 = vrot.slane %v396, 1
        %v742 = vrot.slane %v398, 1
        %v743 = vrot.slane %v400, 1
        %v744 = vrot.slane %v402, 1
        %v745 = vrot.slane %v404, 1
        %v746 = vrot.slane %v406, 1
        %v756 = vcombine.high %v573, %v573
        %v758 = vunpack.c.l.s4 1966171168
        %v759 = vunpack.c.0.s8 %v758
        %v760 = vlaneseq
        %v761 = vshrl.u32 %v760, 7
        %v762 = vsub.s32 %v759, %v761
        %v763 = vrot.slane %v573, %v762
        %v765 = vunpack.c.l.s4 1966171168
        %v766 = vunpack.c.0.s8 %v765
        %v767 = vlaneseq
        %v768 = vshrl.u32 %v767, 7
        %v769 = vsub.s32 %v766, %v768
        %v770 = vrot.slane %v756, %v769
        %v771 = vcombine.high %v763, %v763
        %v772 = vcombine.high %v770, %v770
        %v774 = vunpack.c.l.s4 1966171168
        %v775 = vunpack.c.0.s8 %v774
        %v776 = vlaneseq
        %v777 = vshrl.u32 %v776, 7
        %v778 = vsub.s32 %v775, %v777
        %v779 = vrot.slane %v763, %v778
        %v781 = vunpack.c.l.s4 1966171168
        %v782 = vunpack.c.0.s8 %v781
        %v783 = vlaneseq
        %v784 = vshrl.u32 %v783, 7
        %v785 = vsub.s32 %v782, %v784
        %v786 = vrot.slane %v770, %v785
        %v788 = vunpack.c.l.s4 1966171168
        %v789 = vunpack.c.0.s8 %v788
        %v790 = vlaneseq
        %v791 = vshrl.u32 %v790, 7
        %v792 = vsub.s32 %v789, %v791
        %v793 = vrot.slane %v771, %v792
        %v795 = vunpack.c.l.s4 1966171168
        %v796 = vunpack.c.0.s8 %v795
        %v797 = vlaneseq
        %v798 = vshrl.u32 %v797, 7
        %v799 = vsub.s32 %v796, %v798
        %v800 = vrot.slane %v772, %v799
        %v801 = vcombine.high %v779, %v779
        %v802 = vcombine.high %v786, %v786
        %v803 = vcombine.high %v793, %v793
        %v804 = vcombine.high %v800, %v800
        %v813 = vadd.f32 %v739, %v779
        %v814 = vadd.f32 %v740, %v793
        %v815 = vadd.f32 %v741, %v801
        %v816 = vadd.f32 %v742, %v803
        %v817 = vadd.f32 %v743, %v786
        %v818 = vadd.f32 %v744, %v800
        %v819 = vadd.f32 %v745, %v802
        %v820 = vadd.f32 %v746, %v804
        %v821 = vxor.u32 %v813, 2147483648
        %v822 = vxor.u32 %v814, 2147483648
        %v823 = vxor.u32 %v815, 2147483648
        %v824 = vxor.u32 %v816, 2147483648
        %v825 = vxor.u32 %v817, 2147483648
        %v826 = vxor.u32 %v818, 2147483648
        %v827 = vxor.u32 %v819, 2147483648
        %v828 = vxor.u32 %v820, 2147483648
        %v829 = vmul.f32 %v821, 1.442695
        %v830 = vpow.pop %v829
        %v831 = vmul.f32 %v822, 1.442695
        %v832 = vpow.pop %v831
        %v833 = vmul.f32 %v823, 1.442695
        %v834 = vpow.pop %v833
        %v835 = vmul.f32 %v824, 1.442695
        %v836 = vpow.pop %v835
        %v837 = vmul.f32 %v825, 1.442695
        %v838 = vpow.pop %v837
        %v839 = vmul.f32 %v826, 1.442695
        %v840 = vpow.pop %v839
        %v841 = vmul.f32 %v827, 1.442695
        %v842 = vpow.pop %v841
        %v843 = vmul.f32 %v828, 1.442695
        %v844 = vpow.pop %v843
        %v845 = vadd.f32 %v830, 1.0
        %v846 = vadd.f32 %v832, 1.0
        %v847 = vadd.f32 %v834, 1.0
        %v848 = vadd.f32 %v836, 1.0
        %v849 = vadd.f32 %v838, 1.0
        %v850 = vadd.f32 %v840, 1.0
        %v851 = vadd.f32 %v842, 1.0
        %v852 = vadd.f32 %v844, 1.0
        %v853 = vrcp.pop %v845
        %v854 = vmul.f32 1.0, %v853
        %v855 = vrcp.pop %v846
        %v856 = vmul.f32 1.0, %v855
        %v857 = vrcp.pop %v847
        %v858 = vmul.f32 1.0, %v857
        %v859 = vrcp.pop %v848
        %v860 = vmul.f32 1.0, %v859
        %v861 = vrcp.pop %v849
        %v862 = vmul.f32 1.0, %v861
        %v863 = vrcp.pop %v850
        %v864 = vmul.f32 1.0, %v863
        %v865 = vrcp.pop %v851
        %v866 = vmul.f32 1.0, %v865
        %v867 = vrcp.pop %v852
        %v868 = vmul.f32 1.0, %v867
        %v870 = vcombine.high %v612, %v612
        %v872 = vunpack.c.l.s4 1966171168
        %v873 = vunpack.c.0.s8 %v872
        %v874 = vlaneseq
        %v875 = vshrl.u32 %v874, 7
        %v876 = vsub.s32 %v873, %v875
        %v877 = vrot.slane %v612, %v876
        %v879 = vunpack.c.l.s4 1966171168
        %v880 = vunpack.c.0.s8 %v879
        %v881 = vlaneseq
        %v882 = vshrl.u32 %v881, 7
        %v883 = vsub.s32 %v880, %v882
        %v884 = vrot.slane %v870, %v883
        %v885 = vcombine.high %v877, %v877
        %v886 = vcombine.high %v884, %v884
        %v888 = vunpack.c.l.s4 1966171168
        %v889 = vunpack.c.0.s8 %v888
        %v890 = vlaneseq
        %v891 = vshrl.u32 %v890, 7
        %v892 = vsub.s32 %v889, %v891
        %v893 = vrot.slane %v877, %v892
        %v895 = vunpack.c.l.s4 1966171168
        %v896 = vunpack.c.0.s8 %v895
        %v897 = vlaneseq
        %v898 = vshrl.u32 %v897, 7
        %v899 = vsub.s32 %v896, %v898
        %v900 = vrot.slane %v884, %v899
        %v902 = vunpack.c.l.s4 1966171168
        %v903 = vunpack.c.0.s8 %v902
        %v904 = vlaneseq
        %v905 = vshrl.u32 %v904, 7
        %v906 = vsub.s32 %v903, %v905
        %v907 = vrot.slane %v885, %v906
        %v909 = vunpack.c.l.s4 1966171168
        %v910 = vunpack.c.0.s8 %v909
        %v911 = vlaneseq
        %v912 = vshrl.u32 %v911, 7
        %v913 = vsub.s32 %v910, %v912
        %v914 = vrot.slane %v886, %v913
        %v915 = vcombine.high %v893, %v893
        %v916 = vcombine.high %v900, %v900
        %v917 = vcombine.high %v907, %v907
        %v918 = vcombine.high %v914, %v914
        %v927 = vmul.f32 %v716, %v893
        %v928 = vmul.f32 %v718, %v907
        %v929 = vmul.f32 %v720, %v915
        %v930 = vmul.f32 %v722, %v917
        %v931 = vmul.f32 %v724, %v900
        %v932 = vmul.f32 %v726, %v914
        %v933 = vmul.f32 %v728, %v916
        %v934 = vmul.f32 %v730, %v918
        %v935 = vrot.slane %v392, 2
        %v936 = vrot.slane %v394, 2
        %v937 = vrot.slane %v396, 2
        %v938 = vrot.slane %v398, 2
        %v939 = vrot.slane %v400, 2
        %v940 = vrot.slane %v402, 2
        %v941 = vrot.slane %v404, 2
        %v942 = vrot.slane %v406, 2
        %v951 = vadd.f32 %v935, %v927
        %v952 = vadd.f32 %v936, %v928
        %v953 = vadd.f32 %v937, %v929
        %v954 = vadd.f32 %v938, %v930
        %v955 = vadd.f32 %v939, %v931
        %v956 = vadd.f32 %v940, %v932
        %v957 = vadd.f32 %v941, %v933
        %v958 = vadd.f32 %v942, %v934
        %v959 = vtanh.pop %v951
        %v960 = vtanh.pop %v952
        %v961 = vtanh.pop %v953
        %v962 = vtanh.pop %v954
        %v963 = vtanh.pop %v955
        %v964 = vtanh.pop %v956
        %v965 = vtanh.pop %v957
        %v966 = vtanh.pop %v958
        %v975 = vcombine.low %v959, %v960
        %v976 = vcombine.low %v961, %v962
        %v977 = vcombine.low %v963, %v964
        %v978 = vcombine.low %v965, %v966
        %v980 = vunpack.c.l.s4 1966171168
        %v981 = vunpack.c.0.s8 %v980
        %v982 = vlaneseq
        %v983 = vshrl.u32 %v982, 7
        %v984 = vsub.s32 %v981, %v983
        %v985 = vrot.slane %v975, %v984
        %v987 = vunpack.c.l.s4 1966171168
        %v988 = vunpack.c.0.s8 %v987
        %v989 = vlaneseq
        %v990 = vshrl.u32 %v989, 7
        %v991 = vsub.s32 %v988, %v990
        %v992 = vrot.slane %v976, %v991
        %v994 = vunpack.c.l.s4 1966171168
        %v995 = vunpack.c.0.s8 %v994
        %v996 = vlaneseq
        %v997 = vshrl.u32 %v996, 7
        %v998 = vsub.s32 %v995, %v997
        %v999 = vrot.slane %v977, %v998
        %v1001 = vunpack.c.l.s4 1966171168
        %v1002 = vunpack.c.0.s8 %v1001
        %v1003 = vlaneseq
        %v1004 = vshrl.u32 %v1003, 7
        %v1005 = vsub.s32 %v1002, %v1004
        %v1006 = vrot.slane %v978, %v1005
        %v1007 = vcombine.low %v985, %v992
        %v1008 = vcombine.low %v999, %v1006
        %v1010 = vunpack.c.l.s4 1966171168
        %v1011 = vunpack.c.0.s8 %v1010
        %v1012 = vlaneseq
        %v1013 = vshrl.u32 %v1012, 7
        %v1014 = vsub.s32 %v1011, %v1013
        %v1015 = vrot.slane %v1007, %v1014
        %v1017 = vunpack.c.l.s4 1966171168
        %v1018 = vunpack.c.0.s8 %v1017
        %v1019 = vlaneseq
        %v1020 = vshrl.u32 %v1019, 7
        %v1021 = vsub.s32 %v1018, %v1020
        %v1022 = vrot.slane %v1008, %v1021
        %v1023 = vcombine.low %v1015, %v1022
        %v1025 = vsub.f32 %v391, %v1023
        %v1027 = vcombine.high %v1025, %v1025
        %v1029 = vunpack.c.l.s4 1966171168
        %v1030 = vunpack.c.0.s8 %v1029
        %v1031 = vlaneseq
        %v1032 = vshrl.u32 %v1031, 7
        %v1033 = vsub.s32 %v1030, %v1032
        %v1034 = vrot.slane %v1025, %v1033
        %v1036 = vunpack.c.l.s4 1966171168
        %v1037 = vunpack.c.0.s8 %v1036
        %v1038 = vlaneseq
        %v1039 = vshrl.u32 %v1038, 7
        %v1040 = vsub.s32 %v1037, %v1039
        %v1041 = vrot.slane %v1027, %v1040
        %v1042 = vcombine.high %v1034, %v1034
        %v1043 = vcombine.high %v1041, %v1041
        %v1045 = vunpack.c.l.s4 1966171168
        %v1046 = vunpack.c.0.s8 %v1045
        %v1047 = vlaneseq
        %v1048 = vshrl.u32 %v1047, 7
        %v1049 = vsub.s32 %v1046, %v1048
        %v1050 = vrot.slane %v1034, %v1049
        %v1052 = vunpack.c.l.s4 1966171168
        %v1053 = vunpack.c.0.s8 %v1052
        %v1054 = vlaneseq
        %v1055 = vshrl.u32 %v1054, 7
        %v1056 = vsub.s32 %v1053, %v1055
        %v1057 = vrot.slane %v1041, %v1056
        %v1059 = vunpack.c.l.s4 1966171168
        %v1060 = vunpack.c.0.s8 %v1059
        %v1061 = vlaneseq
        %v1062 = vshrl.u32 %v1061, 7
        %v1063 = vsub.s32 %v1060, %v1062
        %v1064 = vrot.slane %v1042, %v1063
        %v1066 = vunpack.c.l.s4 1966171168
        %v1067 = vunpack.c.0.s8 %v1066
        %v1068 = vlaneseq
        %v1069 = vshrl.u32 %v1068, 7
        %v1070 = vsub.s32 %v1067, %v1069
        %v1071 = vrot.slane %v1043, %v1070
        %v1072 = vcombine.high %v1050, %v1050
        %v1073 = vcombine.high %v1057, %v1057
        %v1074 = vcombine.high %v1064, %v1064
        %v1075 = vcombine.high %v1071, %v1071
        %v1084 = vmul.f32 %v854, %v1050
        %v1085 = vmul.f32 %v856, %v1064
        %v1086 = vmul.f32 %v858, %v1072
        %v1087 = vmul.f32 %v860, %v1074
        %v1088 = vmul.f32 %v862, %v1057
        %v1089 = vmul.f32 %v864, %v1071
        %v1090 = vmul.f32 %v866, %v1073
        %v1091 = vmul.f32 %v868, %v1075
        %v1092 = vadd.f32 %v959, %v1084
        %v1093 = vadd.f32 %v960, %v1085
        %v1094 = vadd.f32 %v961, %v1086
        %v1095 = vadd.f32 %v962, %v1087
        %v1096 = vadd.f32 %v963, %v1088
        %v1097 = vadd.f32 %v964, %v1089
        %v1098 = vadd.f32 %v965, %v1090
        %v1099 = vadd.f32 %v966, %v1091
        %v1100 = vstv %s390
        %vm1101 = vcmp.lt.s32.totalorder %v1100, %v340
        %v1102 = vsel %vm1101, 1, 0
        %1103 = vset.pattern.permute.xlu0 0
        %1104 = vperm.xlu0 %1103, %v1102
        %v1105 = vpop.permute.xlu0 %1104
        %vm1106 = vcmp.eq.s32.totalorder %v1105, 1
        %v1115 = vcombine.low %v1092, %v1093
        %v1116 = vcombine.low %v1094, %v1095
        %v1117 = vcombine.low %v1096, %v1097
        %v1118 = vcombine.low %v1098, %v1099
        %v1120 = vunpack.c.l.s4 1966171168
        %v1121 = vunpack.c.0.s8 %v1120
        %v1122 = vlaneseq
        %v1123 = vshrl.u32 %v1122, 7
        %v1124 = vsub.s32 %v1121, %v1123
        %v1125 = vrot.slane %v1115, %v1124
        %v1127 = vunpack.c.l.s4 1966171168
        %v1128 = vunpack.c.0.s8 %v1127
        %v1129 = vlaneseq
        %v1130 = vshrl.u32 %v1129, 7
        %v1131 = vsub.s32 %v1128, %v1130
        %v1132 = vrot.slane %v1116, %v1131
        %v1134 = vunpack.c.l.s4 1966171168
        %v1135 = vunpack.c.0.s8 %v1134
        %v1136 = vlaneseq
        %v1137 = vshrl.u32 %v1136, 7
        %v1138 = vsub.s32 %v1135, %v1137
        %v1139 = vrot.slane %v1117, %v1138
        %v1141 = vunpack.c.l.s4 1966171168
        %v1142 = vunpack.c.0.s8 %v1141
        %v1143 = vlaneseq
        %v1144 = vshrl.u32 %v1143, 7
        %v1145 = vsub.s32 %v1142, %v1144
        %v1146 = vrot.slane %v1118, %v1145
        %v1147 = vcombine.low %v1125, %v1132
        %v1148 = vcombine.low %v1139, %v1146
        %v1150 = vunpack.c.l.s4 1966171168
        %v1151 = vunpack.c.0.s8 %v1150
        %v1152 = vlaneseq
        %v1153 = vshrl.u32 %v1152, 7
        %v1154 = vsub.s32 %v1151, %v1153
        %v1155 = vrot.slane %v1147, %v1154
        %v1157 = vunpack.c.l.s4 1966171168
        %v1158 = vunpack.c.0.s8 %v1157
        %v1159 = vlaneseq
        %v1160 = vshrl.u32 %v1159, 7
        %v1161 = vsub.s32 %v1158, %v1160
        %v1162 = vrot.slane %v1148, %v1161
        %v1163 = vcombine.low %v1155, %v1162
        %v1165 = vsel %vm1106, %v1163, %v391
        %v1166 = vsel %vm1106, %v1163, 0.0
        %v1168 = vcombine.high %v1166, %v1166
        %v1170 = vunpack.c.l.s4 1966171168
        %v1171 = vunpack.c.0.s8 %v1170
        %v1172 = vlaneseq
        %v1173 = vshrl.u32 %v1172, 7
        %v1174 = vsub.s32 %v1171, %v1173
        %v1175 = vrot.slane %v1166, %v1174
        %v1177 = vunpack.c.l.s4 1966171168
        %v1178 = vunpack.c.0.s8 %v1177
        %v1179 = vlaneseq
        %v1180 = vshrl.u32 %v1179, 7
        %v1181 = vsub.s32 %v1178, %v1180
        %v1182 = vrot.slane %v1168, %v1181
        %v1183 = vcombine.high %v1175, %v1175
        %v1184 = vcombine.high %v1182, %v1182
        %v1186 = vunpack.c.l.s4 1966171168
        %v1187 = vunpack.c.0.s8 %v1186
        %v1188 = vlaneseq
        %v1189 = vshrl.u32 %v1188, 7
        %v1190 = vsub.s32 %v1187, %v1189
        %v1191 = vrot.slane %v1175, %v1190
        %v1193 = vunpack.c.l.s4 1966171168
        %v1194 = vunpack.c.0.s8 %v1193
        %v1195 = vlaneseq
        %v1196 = vshrl.u32 %v1195, 7
        %v1197 = vsub.s32 %v1194, %v1196
        %v1198 = vrot.slane %v1182, %v1197
        %v1200 = vunpack.c.l.s4 1966171168
        %v1201 = vunpack.c.0.s8 %v1200
        %v1202 = vlaneseq
        %v1203 = vshrl.u32 %v1202, 7
        %v1204 = vsub.s32 %v1201, %v1203
        %v1205 = vrot.slane %v1183, %v1204
        %v1207 = vunpack.c.l.s4 1966171168
        %v1208 = vunpack.c.0.s8 %v1207
        %v1209 = vlaneseq
        %v1210 = vshrl.u32 %v1209, 7
        %v1211 = vsub.s32 %v1208, %v1210
        %v1212 = vrot.slane %v1184, %v1211
        %v1213 = vcombine.high %v1191, %v1191
        %v1214 = vcombine.high %v1198, %v1198
        %v1215 = vcombine.high %v1205, %v1205
        %v1216 = vcombine.high %v1212, %v1212
        %1225 = vst [vmem:[%s317] sm:$0x1] %v1191
        %1226 = vst [vmem:[%s317 + $0x8] sm:$0x1] %v1205
        %1227 = vst [vmem:[%s317 + $0x10] sm:$0x1] %v1213
        %1228 = vst [vmem:[%s317 + $0x18] sm:$0x1] %v1215
        %1229 = vst [vmem:[%s317 + $0x20] sm:$0x1] %v1198
        %1230 = vst [vmem:[%s317 + $0x28] sm:$0x1] %v1212
        %1231 = vst [vmem:[%s317 + $0x30] sm:$0x1] %v1214
        %1232 = vst [vmem:[%s317 + $0x38] sm:$0x1] %v1216
        %s1233 = scalar_lea.vmem %s292, 1 [#allocation3]
        %v1234 = vld [vmem:[%s1233] ss:$8 sm:$0x7]
        %s1235 = scalar_lea.vmem %s292, 25 [#allocation3]
        %v1236 = vld [vmem:[%s1235] ss:$8 sm:$0x7]
        %s1237 = scalar_lea.vmem %s292, 49 [#allocation3]
        %v1238 = vld [vmem:[%s1237] ss:$8 sm:$0x7]
        %s1239 = scalar_lea.vmem %s292, 73 [#allocation3]
        %v1240 = vld [vmem:[%s1239] ss:$8 sm:$0x7]
        %s1241 = scalar_lea.vmem %s292, 97 [#allocation3]
        %v1242 = vld [vmem:[%s1241] ss:$8 sm:$0x7]
        %s1243 = scalar_lea.vmem %s292, 121 [#allocation3]
        %v1244 = vld [vmem:[%s1243] ss:$8 sm:$0x7]
        %s1245 = scalar_lea.vmem %s292, 145 [#allocation3]
        %v1246 = vld [vmem:[%s1245] ss:$8 sm:$0x7]
        %s1247 = scalar_lea.vmem %s292, 169 [#allocation3]
        %v1248 = vld [vmem:[%s1247] ss:$8 sm:$0x7]
        %v1249 = vpack.c.bf16 %v1165, %v1165
        %1250 = vmatprep.subr.bf16.mxu0 %v489
        %1251 = vmatpush1.bf16.msra.mxu0 %v488
        %1252 = vmatprep.subr.bf16.mxu0 %v492
        %1253 = vmatpush1.bf16.msra.mxu0 %v491
        %1254 = vmatprep.subr.bf16.mxu0 %v495
        %1255 = vmatpush1.bf16.msra.mxu0 %v494
        %1256 = vmatprep.subr.bf16.mxu0 %v498
        %1257 = vmatpush1.bf16.msra.mxu0 %v497
        %1258 = vmatprep.subr.bf16.mxu0 %v501
        %1259 = vmatpush1.bf16.msra.mxu0 %v500
        %1260 = vmatprep.subr.bf16.mxu0 %v504
        %1261 = vmatpush1.bf16.msra.mxu0 %v503
        %1262 = vmatprep.subr.bf16.mxu0 %v507
        %1263 = vmatpush1.bf16.msra.mxu0 %v506
        %1264 = vmatprep.subr.bf16.mxu0 %v510
        %1265 = vmatpush1.bf16.msra.mxu0 %v509
        %1266 = vmatprep.subr.bf16.mxu0 0
        %1267 = vmatpush1.bf16.msra.mxu0 0
        %1268 = vmatprep.subr.bf16.mxu0 0
        %1269 = vmatpush1.bf16.msra.mxu0 0
        %1270 = vmatprep.subr.bf16.mxu0 0
        %1271 = vmatpush1.bf16.msra.mxu0 0
        %1272 = vmatprep.subr.bf16.mxu0 0
        %1273 = vmatpush1.bf16.msra.mxu0 0
        %1274 = vmatprep.subr.bf16.mxu0 0
        %1275 = vmatpush1.bf16.msra.mxu0 0
        %1276 = vmatprep.subr.bf16.mxu0 0
        %1277 = vmatpush1.bf16.msra.mxu0 0
        %1278 = vmatprep.subr.bf16.mxu0 0
        %1279 = vmatpush1.bf16.msra.mxu0 0
        %1280 = vmatprep.subr.bf16.mxu0 0
        %1281 = vmatpush1.bf16.msra.mxu0 0
        %1282 = vmatprep.mubr.bf16.mxu0 0
        %1283 = vmatmul.mubr.bf16.gmra.mrb[0].mxu0 %v1249
        %v1284 = vpop.f32.mrb[0].mxu0
        %v1285 = vadd.f32 %v378, %v1284
        %v1286 = vpop.f32.mrb[0].mxu0
        %v1287 = vadd.f32 %v382, %v1286
        %v1288 = vpop.f32.mrb[0].mxu0
        %v1289 = vpop.f32.mrb[0].mxu0
        %1290 = vdwg.mxu0
        %1291 = vmatprep.subr.bf16.mxu0 0
        %1292 = vmatpush1.bf16.msra.mxu0 %v490
        %1293 = vmatprep.subr.bf16.mxu0 0
        %1294 = vmatpush1.bf16.msra.mxu0 %v493
        %1295 = vmatprep.subr.bf16.mxu0 0
        %1296 = vmatpush1.bf16.msra.mxu0 %v496
        %1297 = vmatprep.subr.bf16.mxu0 0
        %1298 = vmatpush1.bf16.msra.mxu0 %v499
        %1299 = vmatprep.subr.bf16.mxu0 0
        %1300 = vmatpush1.bf16.msra.mxu0 %v502
        %1301 = vmatprep.subr.bf16.mxu0 0
        %1302 = vmatpush1.bf16.msra.mxu0 %v505
        %1303 = vmatprep.subr.bf16.mxu0 0
        %1304 = vmatpush1.bf16.msra.mxu0 %v508
        %1305 = vmatprep.subr.bf16.mxu0 0
        %1306 = vmatpush1.bf16.msra.mxu0 %v511
        %1307 = vmatprep.subr.bf16.mxu0 0
        %1308 = vmatpush1.bf16.msra.mxu0 0
        %1309 = vmatprep.subr.bf16.mxu0 0
        %1310 = vmatpush1.bf16.msra.mxu0 0
        %1311 = vmatprep.subr.bf16.mxu0 0
        %1312 = vmatpush1.bf16.msra.mxu0 0
        %1313 = vmatprep.subr.bf16.mxu0 0
        %1314 = vmatpush1.bf16.msra.mxu0 0
        %1315 = vmatprep.subr.bf16.mxu0 0
        %1316 = vmatpush1.bf16.msra.mxu0 0
        %1317 = vmatprep.subr.bf16.mxu0 0
        %1318 = vmatpush1.bf16.msra.mxu0 0
        %1319 = vmatprep.subr.bf16.mxu0 0
        %1320 = vmatpush1.bf16.msra.mxu0 0
        %1321 = vmatprep.subr.bf16.mxu0 0
        %1322 = vmatpush1.bf16.msra.mxu0 0
        %1323 = vmatprep.mubr.bf16.mxu0 0
        %1324 = vmatmul.mubr.bf16.gmra.mrb[0].mxu0 %v1249
        %v1325 = vpop.f32.mrb[0].mxu0
        %v1326 = vadd.f32 %v386, %v1325
        %v1327 = vpop.f32.mrb[0].mxu0
        %v1328 = vpop.f32.mrb[0].mxu0
        %v1329 = vpop.f32.mrb[0].mxu0
        %1330 = vdwg.mxu0
        %v1332 = vcombine.high %v1285, %v1285
        %v1334 = vunpack.c.l.s4 1966171168
        %v1335 = vunpack.c.0.s8 %v1334
        %v1336 = vlaneseq
        %v1337 = vshrl.u32 %v1336, 7
        %v1338 = vsub.s32 %v1335, %v1337
        %v1339 = vrot.slane %v1285, %v1338
        %v1341 = vunpack.c.l.s4 1966171168
        %v1342 = vunpack.c.0.s8 %v1341
        %v1343 = vlaneseq
        %v1344 = vshrl.u32 %v1343, 7
        %v1345 = vsub.s32 %v1342, %v1344
        %v1346 = vrot.slane %v1332, %v1345
        %v1347 = vcombine.high %v1339, %v1339
        %v1348 = vcombine.high %v1346, %v1346
        %v1350 = vunpack.c.l.s4 1966171168
        %v1351 = vunpack.c.0.s8 %v1350
        %v1352 = vlaneseq
        %v1353 = vshrl.u32 %v1352, 7
        %v1354 = vsub.s32 %v1351, %v1353
        %v1355 = vrot.slane %v1339, %v1354
        %v1357 = vunpack.c.l.s4 1966171168
        %v1358 = vunpack.c.0.s8 %v1357
        %v1359 = vlaneseq
        %v1360 = vshrl.u32 %v1359, 7
        %v1361 = vsub.s32 %v1358, %v1360
        %v1362 = vrot.slane %v1346, %v1361
        %v1364 = vunpack.c.l.s4 1966171168
        %v1365 = vunpack.c.0.s8 %v1364
        %v1366 = vlaneseq
        %v1367 = vshrl.u32 %v1366, 7
        %v1368 = vsub.s32 %v1365, %v1367
        %v1369 = vrot.slane %v1347, %v1368
        %v1371 = vunpack.c.l.s4 1966171168
        %v1372 = vunpack.c.0.s8 %v1371
        %v1373 = vlaneseq
        %v1374 = vshrl.u32 %v1373, 7
        %v1375 = vsub.s32 %v1372, %v1374
        %v1376 = vrot.slane %v1348, %v1375
        %v1377 = vcombine.high %v1355, %v1355
        %v1378 = vcombine.high %v1362, %v1362
        %v1379 = vcombine.high %v1369, %v1369
        %v1380 = vcombine.high %v1376, %v1376
        %v1389 = vadd.f32 %v1234, %v1355
        %v1390 = vadd.f32 %v1236, %v1369
        %v1391 = vadd.f32 %v1238, %v1377
        %v1392 = vadd.f32 %v1240, %v1379
        %v1393 = vadd.f32 %v1242, %v1362
        %v1394 = vadd.f32 %v1244, %v1376
        %v1395 = vadd.f32 %v1246, %v1378
        %v1396 = vadd.f32 %v1248, %v1380
        %v1397 = vxor.u32 %v1389, 2147483648
        %v1398 = vxor.u32 %v1390, 2147483648
        %v1399 = vxor.u32 %v1391, 2147483648
        %v1400 = vxor.u32 %v1392, 2147483648
        %v1401 = vxor.u32 %v1393, 2147483648
        %v1402 = vxor.u32 %v1394, 2147483648
        %v1403 = vxor.u32 %v1395, 2147483648
        %v1404 = vxor.u32 %v1396, 2147483648
        %v1405 = vmul.f32 %v1397, 1.442695
        %v1406 = vpow.pop %v1405
        %v1407 = vmul.f32 %v1398, 1.442695
        %v1408 = vpow.pop %v1407
        %v1409 = vmul.f32 %v1399, 1.442695
        %v1410 = vpow.pop %v1409
        %v1411 = vmul.f32 %v1400, 1.442695
        %v1412 = vpow.pop %v1411
        %v1413 = vmul.f32 %v1401, 1.442695
        %v1414 = vpow.pop %v1413
        %v1415 = vmul.f32 %v1402, 1.442695
        %v1416 = vpow.pop %v1415
        %v1417 = vmul.f32 %v1403, 1.442695
        %v1418 = vpow.pop %v1417
        %v1419 = vmul.f32 %v1404, 1.442695
        %v1420 = vpow.pop %v1419
        %v1421 = vadd.f32 %v1406, 1.0
        %v1422 = vadd.f32 %v1408, 1.0
        %v1423 = vadd.f32 %v1410, 1.0
        %v1424 = vadd.f32 %v1412, 1.0
        %v1425 = vadd.f32 %v1414, 1.0
        %v1426 = vadd.f32 %v1416, 1.0
        %v1427 = vadd.f32 %v1418, 1.0
        %v1428 = vadd.f32 %v1420, 1.0
        %v1429 = vrcp.pop %v1421
        %v1430 = vmul.f32 1.0, %v1429
        %v1431 = vrcp.pop %v1422
        %v1432 = vmul.f32 1.0, %v1431
        %v1433 = vrcp.pop %v1423
        %v1434 = vmul.f32 1.0, %v1433
        %v1435 = vrcp.pop %v1424
        %v1436 = vmul.f32 1.0, %v1435
        %v1437 = vrcp.pop %v1425
        %v1438 = vmul.f32 1.0, %v1437
        %v1439 = vrcp.pop %v1426
        %v1440 = vmul.f32 1.0, %v1439
        %v1441 = vrcp.pop %v1427
        %v1442 = vmul.f32 1.0, %v1441
        %v1443 = vrcp.pop %v1428
        %v1444 = vmul.f32 1.0, %v1443
        %v1453 = vrot.slane %v1234, 1
        %v1454 = vrot.slane %v1236, 1
        %v1455 = vrot.slane %v1238, 1
        %v1456 = vrot.slane %v1240, 1
        %v1457 = vrot.slane %v1242, 1
        %v1458 = vrot.slane %v1244, 1
        %v1459 = vrot.slane %v1246, 1
        %v1460 = vrot.slane %v1248, 1
        %v1470 = vcombine.high %v1287, %v1287
        %v1472 = vunpack.c.l.s4 1966171168
        %v1473 = vunpack.c.0.s8 %v1472
        %v1474 = vlaneseq
        %v1475 = vshrl.u32 %v1474, 7
        %v1476 = vsub.s32 %v1473, %v1475
        %v1477 = vrot.slane %v1287, %v1476
        %v1479 = vunpack.c.l.s4 1966171168
        %v1480 = vunpack.c.0.s8 %v1479
        %v1481 = vlaneseq
        %v1482 = vshrl.u32 %v1481, 7
        %v1483 = vsub.s32 %v1480, %v1482
        %v1484 = vrot.slane %v1470, %v1483
        %v1485 = vcombine.high %v1477, %v1477
        %v1486 = vcombine.high %v1484, %v1484
        %v1488 = vunpack.c.l.s4 1966171168
        %v1489 = vunpack.c.0.s8 %v1488
        %v1490 = vlaneseq
        %v1491 = vshrl.u32 %v1490, 7
        %v1492 = vsub.s32 %v1489, %v1491
        %v1493 = vrot.slane %v1477, %v1492
        %v1495 = vunpack.c.l.s4 1966171168
        %v1496 = vunpack.c.0.s8 %v1495
        %v1497 = vlaneseq
        %v1498 = vshrl.u32 %v1497, 7
        %v1499 = vsub.s32 %v1496, %v1498
        %v1500 = vrot.slane %v1484, %v1499
        %v1502 = vunpack.c.l.s4 1966171168
        %v1503 = vunpack.c.0.s8 %v1502
        %v1504 = vlaneseq
        %v1505 = vshrl.u32 %v1504, 7
        %v1506 = vsub.s32 %v1503, %v1505
        %v1507 = vrot.slane %v1485, %v1506
        %v1509 = vunpack.c.l.s4 1966171168
        %v1510 = vunpack.c.0.s8 %v1509
        %v1511 = vlaneseq
        %v1512 = vshrl.u32 %v1511, 7
        %v1513 = vsub.s32 %v1510, %v1512
        %v1514 = vrot.slane %v1486, %v1513
        %v1515 = vcombine.high %v1493, %v1493
        %v1516 = vcombine.high %v1500, %v1500
        %v1517 = vcombine.high %v1507, %v1507
        %v1518 = vcombine.high %v1514, %v1514
        %v1527 = vadd.f32 %v1453, %v1493
        %v1528 = vadd.f32 %v1454, %v1507
        %v1529 = vadd.f32 %v1455, %v1515
        %v1530 = vadd.f32 %v1456, %v1517
        %v1531 = vadd.f32 %v1457, %v1500
        %v1532 = vadd.f32 %v1458, %v1514
        %v1533 = vadd.f32 %v1459, %v1516
        %v1534 = vadd.f32 %v1460, %v1518
        %v1535 = vxor.u32 %v1527, 2147483648
        %v1536 = vxor.u32 %v1528, 2147483648
        %v1537 = vxor.u32 %v1529, 2147483648
        %v1538 = vxor.u32 %v1530, 2147483648
        %v1539 = vxor.u32 %v1531, 2147483648
        %v1540 = vxor.u32 %v1532, 2147483648
        %v1541 = vxor.u32 %v1533, 2147483648
        %v1542 = vxor.u32 %v1534, 2147483648
        %v1543 = vmul.f32 %v1535, 1.442695
        %v1544 = vpow.pop %v1543
        %v1545 = vmul.f32 %v1536, 1.442695
        %v1546 = vpow.pop %v1545
        %v1547 = vmul.f32 %v1537, 1.442695
        %v1548 = vpow.pop %v1547
        %v1549 = vmul.f32 %v1538, 1.442695
        %v1550 = vpow.pop %v1549
        %v1551 = vmul.f32 %v1539, 1.442695
        %v1552 = vpow.pop %v1551
        %v1553 = vmul.f32 %v1540, 1.442695
        %v1554 = vpow.pop %v1553
        %v1555 = vmul.f32 %v1541, 1.442695
        %v1556 = vpow.pop %v1555
        %v1557 = vmul.f32 %v1542, 1.442695
        %v1558 = vpow.pop %v1557
        %v1559 = vadd.f32 %v1544, 1.0
        %v1560 = vadd.f32 %v1546, 1.0
        %v1561 = vadd.f32 %v1548, 1.0
        %v1562 = vadd.f32 %v1550, 1.0
        %v1563 = vadd.f32 %v1552, 1.0
        %v1564 = vadd.f32 %v1554, 1.0
        %v1565 = vadd.f32 %v1556, 1.0
        %v1566 = vadd.f32 %v1558, 1.0
        %v1567 = vrcp.pop %v1559
        %v1568 = vmul.f32 1.0, %v1567
        %v1569 = vrcp.pop %v1560
        %v1570 = vmul.f32 1.0, %v1569
        %v1571 = vrcp.pop %v1561
        %v1572 = vmul.f32 1.0, %v1571
        %v1573 = vrcp.pop %v1562
        %v1574 = vmul.f32 1.0, %v1573
        %v1575 = vrcp.pop %v1563
        %v1576 = vmul.f32 1.0, %v1575
        %v1577 = vrcp.pop %v1564
        %v1578 = vmul.f32 1.0, %v1577
        %v1579 = vrcp.pop %v1565
        %v1580 = vmul.f32 1.0, %v1579
        %v1581 = vrcp.pop %v1566
        %v1582 = vmul.f32 1.0, %v1581
        %v1584 = vcombine.high %v1326, %v1326
        %v1586 = vunpack.c.l.s4 1966171168
        %v1587 = vunpack.c.0.s8 %v1586
        %v1588 = vlaneseq
        %v1589 = vshrl.u32 %v1588, 7
        %v1590 = vsub.s32 %v1587, %v1589
        %v1591 = vrot.slane %v1326, %v1590
        %v1593 = vunpack.c.l.s4 1966171168
        %v1594 = vunpack.c.0.s8 %v1593
        %v1595 = vlaneseq
        %v1596 = vshrl.u32 %v1595, 7
        %v1597 = vsub.s32 %v1594, %v1596
        %v1598 = vrot.slane %v1584, %v1597
        %v1599 = vcombine.high %v1591, %v1591
        %v1600 = vcombine.high %v1598, %v1598
        %v1602 = vunpack.c.l.s4 1966171168
        %v1603 = vunpack.c.0.s8 %v1602
        %v1604 = vlaneseq
        %v1605 = vshrl.u32 %v1604, 7
        %v1606 = vsub.s32 %v1603, %v1605
        %v1607 = vrot.slane %v1591, %v1606
        %v1609 = vunpack.c.l.s4 1966171168
        %v1610 = vunpack.c.0.s8 %v1609
        %v1611 = vlaneseq
        %v1612 = vshrl.u32 %v1611, 7
        %v1613 = vsub.s32 %v1610, %v1612
        %v1614 = vrot.slane %v1598, %v1613
        %v1616 = vunpack.c.l.s4 1966171168
        %v1617 = vunpack.c.0.s8 %v1616
        %v1618 = vlaneseq
        %v1619 = vshrl.u32 %v1618, 7
        %v1620 = vsub.s32 %v1617, %v1619
        %v1621 = vrot.slane %v1599, %v1620
        %v1623 = vunpack.c.l.s4 1966171168
        %v1624 = vunpack.c.0.s8 %v1623
        %v1625 = vlaneseq
        %v1626 = vshrl.u32 %v1625, 7
        %v1627 = vsub.s32 %v1624, %v1626
        %v1628 = vrot.slane %v1600, %v1627
        %v1629 = vcombine.high %v1607, %v1607
        %v1630 = vcombine.high %v1614, %v1614
        %v1631 = vcombine.high %v1621, %v1621
        %v1632 = vcombine.high %v1628, %v1628
        %v1641 = vmul.f32 %v1430, %v1607
        %v1642 = vmul.f32 %v1432, %v1621
        %v1643 = vmul.f32 %v1434, %v1629
        %v1644 = vmul.f32 %v1436, %v1631
        %v1645 = vmul.f32 %v1438, %v1614
        %v1646 = vmul.f32 %v1440, %v1628
        %v1647 = vmul.f32 %v1442, %v1630
        %v1648 = vmul.f32 %v1444, %v1632
        %v1649 = vrot.slane %v1234, 2
        %v1650 = vrot.slane %v1236, 2
        %v1651 = vrot.slane %v1238, 2
        %v1652 = vrot.slane %v1240, 2
        %v1653 = vrot.slane %v1242, 2
        %v1654 = vrot.slane %v1244, 2
        %v1655 = vrot.slane %v1246, 2
        %v1656 = vrot.slane %v1248, 2
        %v1665 = vadd.f32 %v1649, %v1641
        %v1666 = vadd.f32 %v1650, %v1642
        %v1667 = vadd.f32 %v1651, %v1643
        %v1668 = vadd.f32 %v1652, %v1644
        %v1669 = vadd.f32 %v1653, %v1645
        %v1670 = vadd.f32 %v1654, %v1646
        %v1671 = vadd.f32 %v1655, %v1647
        %v1672 = vadd.f32 %v1656, %v1648
        %v1673 = vtanh.pop %v1665
        %v1674 = vtanh.pop %v1666
        %v1675 = vtanh.pop %v1667
        %v1676 = vtanh.pop %v1668
        %v1677 = vtanh.pop %v1669
        %v1678 = vtanh.pop %v1670
        %v1679 = vtanh.pop %v1671
        %v1680 = vtanh.pop %v1672
        %v1689 = vcombine.low %v1673, %v1674
        %v1690 = vcombine.low %v1675, %v1676
        %v1691 = vcombine.low %v1677, %v1678
        %v1692 = vcombine.low %v1679, %v1680
        %v1694 = vunpack.c.l.s4 1966171168
        %v1695 = vunpack.c.0.s8 %v1694
        %v1696 = vlaneseq
        %v1697 = vshrl.u32 %v1696, 7
        %v1698 = vsub.s32 %v1695, %v1697
        %v1699 = vrot.slane %v1689, %v1698
        %v1701 = vunpack.c.l.s4 1966171168
        %v1702 = vunpack.c.0.s8 %v1701
        %v1703 = vlaneseq
        %v1704 = vshrl.u32 %v1703, 7
        %v1705 = vsub.s32 %v1702, %v1704
        %v1706 = vrot.slane %v1690, %v1705
        %v1708 = vunpack.c.l.s4 1966171168
        %v1709 = vunpack.c.0.s8 %v1708
        %v1710 = vlaneseq
        %v1711 = vshrl.u32 %v1710, 7
        %v1712 = vsub.s32 %v1709, %v1711
        %v1713 = vrot.slane %v1691, %v1712
        %v1715 = vunpack.c.l.s4 1966171168
        %v1716 = vunpack.c.0.s8 %v1715
        %v1717 = vlaneseq
        %v1718 = vshrl.u32 %v1717, 7
        %v1719 = vsub.s32 %v1716, %v1718
        %v1720 = vrot.slane %v1692, %v1719
        %v1721 = vcombine.low %v1699, %v1706
        %v1722 = vcombine.low %v1713, %v1720
        %v1724 = vunpack.c.l.s4 1966171168
        %v1725 = vunpack.c.0.s8 %v1724
        %v1726 = vlaneseq
        %v1727 = vshrl.u32 %v1726, 7
        %v1728 = vsub.s32 %v1725, %v1727
        %v1729 = vrot.slane %v1721, %v1728
        %v1731 = vunpack.c.l.s4 1966171168
        %v1732 = vunpack.c.0.s8 %v1731
        %v1733 = vlaneseq
        %v1734 = vshrl.u32 %v1733, 7
        %v1735 = vsub.s32 %v1732, %v1734
        %v1736 = vrot.slane %v1722, %v1735
        %v1737 = vcombine.low %v1729, %v1736
        %v1739 = vsub.f32 %v1165, %v1737
        %v1741 = vcombine.high %v1739, %v1739
        %v1743 = vunpack.c.l.s4 1966171168
        %v1744 = vunpack.c.0.s8 %v1743
        %v1745 = vlaneseq
        %v1746 = vshrl.u32 %v1745, 7
        %v1747 = vsub.s32 %v1744, %v1746
        %v1748 = vrot.slane %v1739, %v1747
        %v1750 = vunpack.c.l.s4 1966171168
        %v1751 = vunpack.c.0.s8 %v1750
        %v1752 = vlaneseq
        %v1753 = vshrl.u32 %v1752, 7
        %v1754 = vsub.s32 %v1751, %v1753
        %v1755 = vrot.slane %v1741, %v1754
        %v1756 = vcombine.high %v1748, %v1748
        %v1757 = vcombine.high %v1755, %v1755
        %v1759 = vunpack.c.l.s4 1966171168
        %v1760 = vunpack.c.0.s8 %v1759
        %v1761 = vlaneseq
        %v1762 = vshrl.u32 %v1761, 7
        %v1763 = vsub.s32 %v1760, %v1762
        %v1764 = vrot.slane %v1748, %v1763
        %v1766 = vunpack.c.l.s4 1966171168
        %v1767 = vunpack.c.0.s8 %v1766
        %v1768 = vlaneseq
        %v1769 = vshrl.u32 %v1768, 7
        %v1770 = vsub.s32 %v1767, %v1769
        %v1771 = vrot.slane %v1755, %v1770
        %v1773 = vunpack.c.l.s4 1966171168
        %v1774 = vunpack.c.0.s8 %v1773
        %v1775 = vlaneseq
        %v1776 = vshrl.u32 %v1775, 7
        %v1777 = vsub.s32 %v1774, %v1776
        %v1778 = vrot.slane %v1756, %v1777
        %v1780 = vunpack.c.l.s4 1966171168
        %v1781 = vunpack.c.0.s8 %v1780
        %v1782 = vlaneseq
        %v1783 = vshrl.u32 %v1782, 7
        %v1784 = vsub.s32 %v1781, %v1783
        %v1785 = vrot.slane %v1757, %v1784
        %v1786 = vcombine.high %v1764, %v1764
        %v1787 = vcombine.high %v1771, %v1771
        %v1788 = vcombine.high %v1778, %v1778
        %v1789 = vcombine.high %v1785, %v1785
        %v1798 = vmul.f32 %v1568, %v1764
        %v1799 = vmul.f32 %v1570, %v1778
        %v1800 = vmul.f32 %v1572, %v1786
        %v1801 = vmul.f32 %v1574, %v1788
        %v1802 = vmul.f32 %v1576, %v1771
        %v1803 = vmul.f32 %v1578, %v1785
        %v1804 = vmul.f32 %v1580, %v1787
        %v1805 = vmul.f32 %v1582, %v1789
        %v1806 = vadd.f32 %v1673, %v1798
        %v1807 = vadd.f32 %v1674, %v1799
        %v1808 = vadd.f32 %v1675, %v1800
        %v1809 = vadd.f32 %v1676, %v1801
        %v1810 = vadd.f32 %v1677, %v1802
        %v1811 = vadd.f32 %v1678, %v1803
        %v1812 = vadd.f32 %v1679, %v1804
        %v1813 = vadd.f32 %v1680, %v1805
        %s1814 = sadd.s32 %s390, 1
        %v1815 = vstv %s1814
        %vm1816 = vcmp.lt.s32.totalorder %v1815, %v340
        %v1817 = vsel %vm1816, 1, 0
        %1818 = vset.pattern.permute.xlu0 0
        %1819 = vperm.xlu0 %1818, %v1817
        %v1820 = vpop.permute.xlu0 %1819
        %vm1821 = vcmp.eq.s32.totalorder %v1820, 1
        %v1830 = vcombine.low %v1806, %v1807
        %v1831 = vcombine.low %v1808, %v1809
        %v1832 = vcombine.low %v1810, %v1811
        %v1833 = vcombine.low %v1812, %v1813
        %v1835 = vunpack.c.l.s4 1966171168
        %v1836 = vunpack.c.0.s8 %v1835
        %v1837 = vlaneseq
        %v1838 = vshrl.u32 %v1837, 7
        %v1839 = vsub.s32 %v1836, %v1838
        %v1840 = vrot.slane %v1830, %v1839
        %v1842 = vunpack.c.l.s4 1966171168
        %v1843 = vunpack.c.0.s8 %v1842
        %v1844 = vlaneseq
        %v1845 = vshrl.u32 %v1844, 7
        %v1846 = vsub.s32 %v1843, %v1845
        %v1847 = vrot.slane %v1831, %v1846
        %v1849 = vunpack.c.l.s4 1966171168
        %v1850 = vunpack.c.0.s8 %v1849
        %v1851 = vlaneseq
        %v1852 = vshrl.u32 %v1851, 7
        %v1853 = vsub.s32 %v1850, %v1852
        %v1854 = vrot.slane %v1832, %v1853
        %v1856 = vunpack.c.l.s4 1966171168
        %v1857 = vunpack.c.0.s8 %v1856
        %v1858 = vlaneseq
        %v1859 = vshrl.u32 %v1858, 7
        %v1860 = vsub.s32 %v1857, %v1859
        %v1861 = vrot.slane %v1833, %v1860
        %v1862 = vcombine.low %v1840, %v1847
        %v1863 = vcombine.low %v1854, %v1861
        %v1865 = vunpack.c.l.s4 1966171168
        %v1866 = vunpack.c.0.s8 %v1865
        %v1867 = vlaneseq
        %v1868 = vshrl.u32 %v1867, 7
        %v1869 = vsub.s32 %v1866, %v1868
        %v1870 = vrot.slane %v1862, %v1869
        %v1872 = vunpack.c.l.s4 1966171168
        %v1873 = vunpack.c.0.s8 %v1872
        %v1874 = vlaneseq
        %v1875 = vshrl.u32 %v1874, 7
        %v1876 = vsub.s32 %v1873, %v1875
        %v1877 = vrot.slane %v1863, %v1876
        %v1878 = vcombine.low %v1870, %v1877
        %v1880 = vsel %vm1821, %v1878, %v1165
        %v1881 = vsel %vm1821, %v1878, 0.0
        %v1883 = vcombine.high %v1881, %v1881
        %v1885 = vunpack.c.l.s4 1966171168
        %v1886 = vunpack.c.0.s8 %v1885
        %v1887 = vlaneseq
        %v1888 = vshrl.u32 %v1887, 7
        %v1889 = vsub.s32 %v1886, %v1888
        %v1890 = vrot.slane %v1881, %v1889
        %v1892 = vunpack.c.l.s4 1966171168
        %v1893 = vunpack.c.0.s8 %v1892
        %v1894 = vlaneseq
        %v1895 = vshrl.u32 %v1894, 7
        %v1896 = vsub.s32 %v1893, %v1895
        %v1897 = vrot.slane %v1883, %v1896
        %v1898 = vcombine.high %v1890, %v1890
        %v1899 = vcombine.high %v1897, %v1897
        %v1901 = vunpack.c.l.s4 1966171168
        %v1902 = vunpack.c.0.s8 %v1901
        %v1903 = vlaneseq
        %v1904 = vshrl.u32 %v1903, 7
        %v1905 = vsub.s32 %v1902, %v1904
        %v1906 = vrot.slane %v1890, %v1905
        %v1908 = vunpack.c.l.s4 1966171168
        %v1909 = vunpack.c.0.s8 %v1908
        %v1910 = vlaneseq
        %v1911 = vshrl.u32 %v1910, 7
        %v1912 = vsub.s32 %v1909, %v1911
        %v1913 = vrot.slane %v1897, %v1912
        %v1915 = vunpack.c.l.s4 1966171168
        %v1916 = vunpack.c.0.s8 %v1915
        %v1917 = vlaneseq
        %v1918 = vshrl.u32 %v1917, 7
        %v1919 = vsub.s32 %v1916, %v1918
        %v1920 = vrot.slane %v1898, %v1919
        %v1922 = vunpack.c.l.s4 1966171168
        %v1923 = vunpack.c.0.s8 %v1922
        %v1924 = vlaneseq
        %v1925 = vshrl.u32 %v1924, 7
        %v1926 = vsub.s32 %v1923, %v1925
        %v1927 = vrot.slane %v1899, %v1926
        %v1928 = vcombine.high %v1906, %v1906
        %v1929 = vcombine.high %v1913, %v1913
        %v1930 = vcombine.high %v1920, %v1920
        %v1931 = vcombine.high %v1927, %v1927
        %1940 = vst [vmem:[%s317 + $0x1] sm:$0x1] %v1906
        %1941 = vst [vmem:[%s317 + $0x9] sm:$0x1] %v1920
        %1942 = vst [vmem:[%s317 + $0x11] sm:$0x1] %v1928
        %1943 = vst [vmem:[%s317 + $0x19] sm:$0x1] %v1930
        %1944 = vst [vmem:[%s317 + $0x21] sm:$0x1] %v1913
        %1945 = vst [vmem:[%s317 + $0x29] sm:$0x1] %v1927
        %1946 = vst [vmem:[%s317 + $0x31] sm:$0x1] %v1929
        %1947 = vst [vmem:[%s317 + $0x39] sm:$0x1] %v1931
        %s1948 = scalar_lea.vmem %s292, 2 [#allocation3]
        %v1949 = vld [vmem:[%s1948] ss:$8 sm:$0x7]
        %s1950 = scalar_lea.vmem %s292, 26 [#allocation3]
        %v1951 = vld [vmem:[%s1950] ss:$8 sm:$0x7]
        %s1952 = scalar_lea.vmem %s292, 50 [#allocation3]
        %v1953 = vld [vmem:[%s1952] ss:$8 sm:$0x7]
        %s1954 = scalar_lea.vmem %s292, 74 [#allocation3]
        %v1955 = vld [vmem:[%s1954] ss:$8 sm:$0x7]
        %s1956 = scalar_lea.vmem %s292, 98 [#allocation3]
        %v1957 = vld [vmem:[%s1956] ss:$8 sm:$0x7]
        %s1958 = scalar_lea.vmem %s292, 122 [#allocation3]
        %v1959 = vld [vmem:[%s1958] ss:$8 sm:$0x7]
        %s1960 = scalar_lea.vmem %s292, 146 [#allocation3]
        %v1961 = vld [vmem:[%s1960] ss:$8 sm:$0x7]
        %s1962 = scalar_lea.vmem %s292, 170 [#allocation3]
        %v1963 = vld [vmem:[%s1962] ss:$8 sm:$0x7]
        %v1964 = vpack.c.bf16 %v1880, %v1880
        %1965 = vmatprep.subr.bf16.mxu0 %v489
        %1966 = vmatpush1.bf16.msra.mxu0 %v488
        %1967 = vmatprep.subr.bf16.mxu0 %v492
        %1968 = vmatpush1.bf16.msra.mxu0 %v491
        %1969 = vmatprep.subr.bf16.mxu0 %v495
        %1970 = vmatpush1.bf16.msra.mxu0 %v494
        %1971 = vmatprep.subr.bf16.mxu0 %v498
        %1972 = vmatpush1.bf16.msra.mxu0 %v497
        %1973 = vmatprep.subr.bf16.mxu0 %v501
        %1974 = vmatpush1.bf16.msra.mxu0 %v500
        %1975 = vmatprep.subr.bf16.mxu0 %v504
        %1976 = vmatpush1.bf16.msra.mxu0 %v503
        %1977 = vmatprep.subr.bf16.mxu0 %v507
        %1978 = vmatpush1.bf16.msra.mxu0 %v506
        %1979 = vmatprep.subr.bf16.mxu0 %v510
        %1980 = vmatpush1.bf16.msra.mxu0 %v509
        %1981 = vmatprep.subr.bf16.mxu0 0
        %1982 = vmatpush1.bf16.msra.mxu0 0
        %1983 = vmatprep.subr.bf16.mxu0 0
        %1984 = vmatpush1.bf16.msra.mxu0 0
        %1985 = vmatprep.subr.bf16.mxu0 0
        %1986 = vmatpush1.bf16.msra.mxu0 0
        %1987 = vmatprep.subr.bf16.mxu0 0
        %1988 = vmatpush1.bf16.msra.mxu0 0
        %1989 = vmatprep.subr.bf16.mxu0 0
        %1990 = vmatpush1.bf16.msra.mxu0 0
        %1991 = vmatprep.subr.bf16.mxu0 0
        %1992 = vmatpush1.bf16.msra.mxu0 0
        %1993 = vmatprep.subr.bf16.mxu0 0
        %1994 = vmatpush1.bf16.msra.mxu0 0
        %1995 = vmatprep.subr.bf16.mxu0 0
        %1996 = vmatpush1.bf16.msra.mxu0 0
        %1997 = vmatprep.mubr.bf16.mxu0 0
        %1998 = vmatmul.mubr.bf16.gmra.mrb[0].mxu0 %v1964
        %v1999 = vpop.f32.mrb[0].mxu0
        %v2000 = vadd.f32 %v378, %v1999
        %v2001 = vpop.f32.mrb[0].mxu0
        %v2002 = vadd.f32 %v382, %v2001
        %v2003 = vpop.f32.mrb[0].mxu0
        %v2004 = vpop.f32.mrb[0].mxu0
        %2005 = vdwg.mxu0
        %2006 = vmatprep.subr.bf16.mxu0 0
        %2007 = vmatpush1.bf16.msra.mxu0 %v490
        %2008 = vmatprep.subr.bf16.mxu0 0
        %2009 = vmatpush1.bf16.msra.mxu0 %v493
        %2010 = vmatprep.subr.bf16.mxu0 0
        %2011 = vmatpush1.bf16.msra.mxu0 %v496
        %2012 = vmatprep.subr.bf16.mxu0 0
        %2013 = vmatpush1.bf16.msra.mxu0 %v499
        %2014 = vmatprep.subr.bf16.mxu0 0
        %2015 = vmatpush1.bf16.msra.mxu0 %v502
        %2016 = vmatprep.subr.bf16.mxu0 0
        %2017 = vmatpush1.bf16.msra.mxu0 %v505
        %2018 = vmatprep.subr.bf16.mxu0 0
        %2019 = vmatpush1.bf16.msra.mxu0 %v508
        %2020 = vmatprep.subr.bf16.mxu0 0
        %2021 = vmatpush1.bf16.msra.mxu0 %v511
        %2022 = vmatprep.subr.bf16.mxu0 0
        %2023 = vmatpush1.bf16.msra.mxu0 0
        %2024 = vmatprep.subr.bf16.mxu0 0
        %2025 = vmatpush1.bf16.msra.mxu0 0
        %2026 = vmatprep.subr.bf16.mxu0 0
        %2027 = vmatpush1.bf16.msra.mxu0 0
        %2028 = vmatprep.subr.bf16.mxu0 0
        %2029 = vmatpush1.bf16.msra.mxu0 0
        %2030 = vmatprep.subr.bf16.mxu0 0
        %2031 = vmatpush1.bf16.msra.mxu0 0
        %2032 = vmatprep.subr.bf16.mxu0 0
        %2033 = vmatpush1.bf16.msra.mxu0 0
        %2034 = vmatprep.subr.bf16.mxu0 0
        %2035 = vmatpush1.bf16.msra.mxu0 0
        %2036 = vmatprep.subr.bf16.mxu0 0
        %2037 = vmatpush1.bf16.msra.mxu0 0
        %2038 = vmatprep.mubr.bf16.mxu0 0
        %2039 = vmatmul.mubr.bf16.gmra.mrb[0].mxu0 %v1964
        %v2040 = vpop.f32.mrb[0].mxu0
        %v2041 = vadd.f32 %v386, %v2040
        %v2042 = vpop.f32.mrb[0].mxu0
        %v2043 = vpop.f32.mrb[0].mxu0
        %v2044 = vpop.f32.mrb[0].mxu0
        %2045 = vdwg.mxu0
        %v2047 = vcombine.high %v2000, %v2000
        %v2049 = vunpack.c.l.s4 1966171168
        %v2050 = vunpack.c.0.s8 %v2049
        %v2051 = vlaneseq
        %v2052 = vshrl.u32 %v2051, 7
        %v2053 = vsub.s32 %v2050, %v2052
        %v2054 = vrot.slane %v2000, %v2053
        %v2056 = vunpack.c.l.s4 1966171168
        %v2057 = vunpack.c.0.s8 %v2056
        %v2058 = vlaneseq
        %v2059 = vshrl.u32 %v2058, 7
        %v2060 = vsub.s32 %v2057, %v2059
        %v2061 = vrot.slane %v2047, %v2060
        %v2062 = vcombine.high %v2054, %v2054
        %v2063 = vcombine.high %v2061, %v2061
        %v2065 = vunpack.c.l.s4 1966171168
        %v2066 = vunpack.c.0.s8 %v2065
        %v2067 = vlaneseq
        %v2068 = vshrl.u32 %v2067, 7
        %v2069 = vsub.s32 %v2066, %v2068
        %v2070 = vrot.slane %v2054, %v2069
        %v2072 = vunpack.c.l.s4 1966171168
        %v2073 = vunpack.c.0.s8 %v2072
        %v2074 = vlaneseq
        %v2075 = vshrl.u32 %v2074, 7
        %v2076 = vsub.s32 %v2073, %v2075
        %v2077 = vrot.slane %v2061, %v2076
        %v2079 = vunpack.c.l.s4 1966171168
        %v2080 = vunpack.c.0.s8 %v2079
        %v2081 = vlaneseq
        %v2082 = vshrl.u32 %v2081, 7
        %v2083 = vsub.s32 %v2080, %v2082
        %v2084 = vrot.slane %v2062, %v2083
        %v2086 = vunpack.c.l.s4 1966171168
        %v2087 = vunpack.c.0.s8 %v2086
        %v2088 = vlaneseq
        %v2089 = vshrl.u32 %v2088, 7
        %v2090 = vsub.s32 %v2087, %v2089
        %v2091 = vrot.slane %v2063, %v2090
        %v2092 = vcombine.high %v2070, %v2070
        %v2093 = vcombine.high %v2077, %v2077
        %v2094 = vcombine.high %v2084, %v2084
        %v2095 = vcombine.high %v2091, %v2091
        %v2104 = vadd.f32 %v1949, %v2070
        %v2105 = vadd.f32 %v1951, %v2084
        %v2106 = vadd.f32 %v1953, %v2092
        %v2107 = vadd.f32 %v1955, %v2094
        %v2108 = vadd.f32 %v1957, %v2077
        %v2109 = vadd.f32 %v1959, %v2091
        %v2110 = vadd.f32 %v1961, %v2093
        %v2111 = vadd.f32 %v1963, %v2095
        %v2112 = vxor.u32 %v2104, 2147483648
        %v2113 = vxor.u32 %v2105, 2147483648
        %v2114 = vxor.u32 %v2106, 2147483648
        %v2115 = vxor.u32 %v2107, 2147483648
        %v2116 = vxor.u32 %v2108, 2147483648
        %v2117 = vxor.u32 %v2109, 2147483648
        %v2118 = vxor.u32 %v2110, 2147483648
        %v2119 = vxor.u32 %v2111, 2147483648
        %v2120 = vmul.f32 %v2112, 1.442695
        %v2121 = vpow.pop %v2120
        %v2122 = vmul.f32 %v2113, 1.442695
        %v2123 = vpow.pop %v2122
        %v2124 = vmul.f32 %v2114, 1.442695
        %v2125 = vpow.pop %v2124
        %v2126 = vmul.f32 %v2115, 1.442695
        %v2127 = vpow.pop %v2126
        %v2128 = vmul.f32 %v2116, 1.442695
        %v2129 = vpow.pop %v2128
        %v2130 = vmul.f32 %v2117, 1.442695
        %v2131 = vpow.pop %v2130
        %v2132 = vmul.f32 %v2118, 1.442695
        %v2133 = vpow.pop %v2132
        %v2134 = vmul.f32 %v2119, 1.442695
        %v2135 = vpow.pop %v2134
        %v2136 = vadd.f32 %v2121, 1.0
        %v2137 = vadd.f32 %v2123, 1.0
        %v2138 = vadd.f32 %v2125, 1.0
        %v2139 = vadd.f32 %v2127, 1.0
        %v2140 = vadd.f32 %v2129, 1.0
        %v2141 = vadd.f32 %v2131, 1.0
        %v2142 = vadd.f32 %v2133, 1.0
        %v2143 = vadd.f32 %v2135, 1.0
        %v2144 = vrcp.pop %v2136
        %v2145 = vmul.f32 1.0, %v2144
        %v2146 = vrcp.pop %v2137
        %v2147 = vmul.f32 1.0, %v2146
        %v2148 = vrcp.pop %v2138
        %v2149 = vmul.f32 1.0, %v2148
        %v2150 = vrcp.pop %v2139
        %v2151 = vmul.f32 1.0, %v2150
        %v2152 = vrcp.pop %v2140
        %v2153 = vmul.f32 1.0, %v2152
        %v2154 = vrcp.pop %v2141
        %v2155 = vmul.f32 1.0, %v2154
        %v2156 = vrcp.pop %v2142
        %v2157 = vmul.f32 1.0, %v2156
        %v2158 = vrcp.pop %v2143
        %v2159 = vmul.f32 1.0, %v2158
        %v2168 = vrot.slane %v1949, 1
        %v2169 = vrot.slane %v1951, 1
        %v2170 = vrot.slane %v1953, 1
        %v2171 = vrot.slane %v1955, 1
        %v2172 = vrot.slane %v1957, 1
        %v2173 = vrot.slane %v1959, 1
        %v2174 = vrot.slane %v1961, 1
        %v2175 = vrot.slane %v1963, 1
        %v2185 = vcombine.high %v2002, %v2002
        %v2187 = vunpack.c.l.s4 1966171168
        %v2188 = vunpack.c.0.s8 %v2187
        %v2189 = vlaneseq
        %v2190 = vshrl.u32 %v2189, 7
        %v2191 = vsub.s32 %v2188, %v2190
        %v2192 = vrot.slane %v2002, %v2191
        %v2194 = vunpack.c.l.s4 1966171168
        %v2195 = vunpack.c.0.s8 %v2194
        %v2196 = vlaneseq
        %v2197 = vshrl.u32 %v2196, 7
        %v2198 = vsub.s32 %v2195, %v2197
        %v2199 = vrot.slane %v2185, %v2198
        %v2200 = vcombine.high %v2192, %v2192
        %v2201 = vcombine.high %v2199, %v2199
        %v2203 = vunpack.c.l.s4 1966171168
        %v2204 = vunpack.c.0.s8 %v2203
        %v2205 = vlaneseq
        %v2206 = vshrl.u32 %v2205, 7
        %v2207 = vsub.s32 %v2204, %v2206
        %v2208 = vrot.slane %v2192, %v2207
        %v2210 = vunpack.c.l.s4 1966171168
        %v2211 = vunpack.c.0.s8 %v2210
        %v2212 = vlaneseq
        %v2213 = vshrl.u32 %v2212, 7
        %v2214 = vsub.s32 %v2211, %v2213
        %v2215 = vrot.slane %v2199, %v2214
        %v2217 = vunpack.c.l.s4 1966171168
        %v2218 = vunpack.c.0.s8 %v2217
        %v2219 = vlaneseq
        %v2220 = vshrl.u32 %v2219, 7
        %v2221 = vsub.s32 %v2218, %v2220
        %v2222 = vrot.slane %v2200, %v2221
        %v2224 = vunpack.c.l.s4 1966171168
        %v2225 = vunpack.c.0.s8 %v2224
        %v2226 = vlaneseq
        %v2227 = vshrl.u32 %v2226, 7
        %v2228 = vsub.s32 %v2225, %v2227
        %v2229 = vrot.slane %v2201, %v2228
        %v2230 = vcombine.high %v2208, %v2208
        %v2231 = vcombine.high %v2215, %v2215
        %v2232 = vcombine.high %v2222, %v2222
        %v2233 = vcombine.high %v2229, %v2229
        %v2242 = vadd.f32 %v2168, %v2208
        %v2243 = vadd.f32 %v2169, %v2222
        %v2244 = vadd.f32 %v2170, %v2230
        %v2245 = vadd.f32 %v2171, %v2232
        %v2246 = vadd.f32 %v2172, %v2215
        %v2247 = vadd.f32 %v2173, %v2229
        %v2248 = vadd.f32 %v2174, %v2231
        %v2249 = vadd.f32 %v2175, %v2233
        %v2250 = vxor.u32 %v2242, 2147483648
        %v2251 = vxor.u32 %v2243, 2147483648
        %v2252 = vxor.u32 %v2244, 2147483648
        %v2253 = vxor.u32 %v2245, 2147483648
        %v2254 = vxor.u32 %v2246, 2147483648
        %v2255 = vxor.u32 %v2247, 2147483648
        %v2256 = vxor.u32 %v2248, 2147483648
        %v2257 = vxor.u32 %v2249, 2147483648
        %v2258 = vmul.f32 %v2250, 1.442695
        %v2259 = vpow.pop %v2258
        %v2260 = vmul.f32 %v2251, 1.442695
        %v2261 = vpow.pop %v2260
        %v2262 = vmul.f32 %v2252, 1.442695
        %v2263 = vpow.pop %v2262
        %v2264 = vmul.f32 %v2253, 1.442695
        %v2265 = vpow.pop %v2264
        %v2266 = vmul.f32 %v2254, 1.442695
        %v2267 = vpow.pop %v2266
        %v2268 = vmul.f32 %v2255, 1.442695
        %v2269 = vpow.pop %v2268
        %v2270 = vmul.f32 %v2256, 1.442695
        %v2271 = vpow.pop %v2270
        %v2272 = vmul.f32 %v2257, 1.442695
        %v2273 = vpow.pop %v2272
        %v2274 = vadd.f32 %v2259, 1.0
        %v2275 = vadd.f32 %v2261, 1.0
        %v2276 = vadd.f32 %v2263, 1.0
        %v2277 = vadd.f32 %v2265, 1.0
        %v2278 = vadd.f32 %v2267, 1.0
        %v2279 = vadd.f32 %v2269, 1.0
        %v2280 = vadd.f32 %v2271, 1.0
        %v2281 = vadd.f32 %v2273, 1.0
        %v2282 = vrcp.pop %v2274
        %v2283 = vmul.f32 1.0, %v2282
        %v2284 = vrcp.pop %v2275
        %v2285 = vmul.f32 1.0, %v2284
        %v2286 = vrcp.pop %v2276
        %v2287 = vmul.f32 1.0, %v2286
        %v2288 = vrcp.pop %v2277
        %v2289 = vmul.f32 1.0, %v2288
        %v2290 = vrcp.pop %v2278
        %v2291 = vmul.f32 1.0, %v2290
        %v2292 = vrcp.pop %v2279
        %v2293 = vmul.f32 1.0, %v2292
        %v2294 = vrcp.pop %v2280
        %v2295 = vmul.f32 1.0, %v2294
        %v2296 = vrcp.pop %v2281
        %v2297 = vmul.f32 1.0, %v2296
        %v2299 = vcombine.high %v2041, %v2041
        %v2301 = vunpack.c.l.s4 1966171168
        %v2302 = vunpack.c.0.s8 %v2301
        %v2303 = vlaneseq
        %v2304 = vshrl.u32 %v2303, 7
        %v2305 = vsub.s32 %v2302, %v2304
        %v2306 = vrot.slane %v2041, %v2305
        %v2308 = vunpack.c.l.s4 1966171168
        %v2309 = vunpack.c.0.s8 %v2308
        %v2310 = vlaneseq
        %v2311 = vshrl.u32 %v2310, 7
        %v2312 = vsub.s32 %v2309, %v2311
        %v2313 = vrot.slane %v2299, %v2312
        %v2314 = vcombine.high %v2306, %v2306
        %v2315 = vcombine.high %v2313, %v2313
        %v2317 = vunpack.c.l.s4 1966171168
        %v2318 = vunpack.c.0.s8 %v2317
        %v2319 = vlaneseq
        %v2320 = vshrl.u32 %v2319, 7
        %v2321 = vsub.s32 %v2318, %v2320
        %v2322 = vrot.slane %v2306, %v2321
        %v2324 = vunpack.c.l.s4 1966171168
        %v2325 = vunpack.c.0.s8 %v2324
        %v2326 = vlaneseq
        %v2327 = vshrl.u32 %v2326, 7
        %v2328 = vsub.s32 %v2325, %v2327
        %v2329 = vrot.slane %v2313, %v2328
        %v2331 = vunpack.c.l.s4 1966171168
        %v2332 = vunpack.c.0.s8 %v2331
        %v2333 = vlaneseq
        %v2334 = vshrl.u32 %v2333, 7
        %v2335 = vsub.s32 %v2332, %v2334
        %v2336 = vrot.slane %v2314, %v2335
        %v2338 = vunpack.c.l.s4 1966171168
        %v2339 = vunpack.c.0.s8 %v2338
        %v2340 = vlaneseq
        %v2341 = vshrl.u32 %v2340, 7
        %v2342 = vsub.s32 %v2339, %v2341
        %v2343 = vrot.slane %v2315, %v2342
        %v2344 = vcombine.high %v2322, %v2322
        %v2345 = vcombine.high %v2329, %v2329
        %v2346 = vcombine.high %v2336, %v2336
        %v2347 = vcombine.high %v2343, %v2343
        %v2356 = vmul.f32 %v2145, %v2322
        %v2357 = vmul.f32 %v2147, %v2336
        %v2358 = vmul.f32 %v2149, %v2344
        %v2359 = vmul.f32 %v2151, %v2346
        %v2360 = vmul.f32 %v2153, %v2329
        %v2361 = vmul.f32 %v2155, %v2343
        %v2362 = vmul.f32 %v2157, %v2345
        %v2363 = vmul.f32 %v2159, %v2347
        %v2364 = vrot.slane %v1949, 2
        %v2365 = vrot.slane %v1951, 2
        %v2366 = vrot.slane %v1953, 2
        %v2367 = vrot.slane %v1955, 2
        %v2368 = vrot.slane %v1957, 2
        %v2369 = vrot.slane %v1959, 2
        %v2370 = vrot.slane %v1961, 2
        %v2371 = vrot.slane %v1963, 2
        %v2380 = vadd.f32 %v2364, %v2356
        %v2381 = vadd.f32 %v2365, %v2357
        %v2382 = vadd.f32 %v2366, %v2358
        %v2383 = vadd.f32 %v2367, %v2359
        %v2384 = vadd.f32 %v2368, %v2360
        %v2385 = vadd.f32 %v2369, %v2361
        %v2386 = vadd.f32 %v2370, %v2362
        %v2387 = vadd.f32 %v2371, %v2363
        %v2388 = vtanh.pop %v2380
        %v2389 = vtanh.pop %v2381
        %v2390 = vtanh.pop %v2382
        %v2391 = vtanh.pop %v2383
        %v2392 = vtanh.pop %v2384
        %v2393 = vtanh.pop %v2385
        %v2394 = vtanh.pop %v2386
        %v2395 = vtanh.pop %v2387
        %v2404 = vcombine.low %v2388, %v2389
        %v2405 = vcombine.low %v2390, %v2391
        %v2406 = vcombine.low %v2392, %v2393
        %v2407 = vcombine.low %v2394, %v2395
        %v2409 = vunpack.c.l.s4 1966171168
        %v2410 = vunpack.c.0.s8 %v2409
        %v2411 = vlaneseq
        %v2412 = vshrl.u32 %v2411, 7
        %v2413 = vsub.s32 %v2410, %v2412
        %v2414 = vrot.slane %v2404, %v2413
        %v2416 = vunpack.c.l.s4 1966171168
        %v2417 = vunpack.c.0.s8 %v2416
        %v2418 = vlaneseq
        %v2419 = vshrl.u32 %v2418, 7
        %v2420 = vsub.s32 %v2417, %v2419
        %v2421 = vrot.slane %v2405, %v2420
        %v2423 = vunpack.c.l.s4 1966171168
        %v2424 = vunpack.c.0.s8 %v2423
        %v2425 = vlaneseq
        %v2426 = vshrl.u32 %v2425, 7
        %v2427 = vsub.s32 %v2424, %v2426
        %v2428 = vrot.slane %v2406, %v2427
        %v2430 = vunpack.c.l.s4 1966171168
        %v2431 = vunpack.c.0.s8 %v2430
        %v2432 = vlaneseq
        %v2433 = vshrl.u32 %v2432, 7
        %v2434 = vsub.s32 %v2431, %v2433
        %v2435 = vrot.slane %v2407, %v2434
        %v2436 = vcombine.low %v2414, %v2421
        %v2437 = vcombine.low %v2428, %v2435
        %v2439 = vunpack.c.l.s4 1966171168
        %v2440 = vunpack.c.0.s8 %v2439
        %v2441 = vlaneseq
        %v2442 = vshrl.u32 %v2441, 7
        %v2443 = vsub.s32 %v2440, %v2442
        %v2444 = vrot.slane %v2436, %v2443
        %v2446 = vunpack.c.l.s4 1966171168
        %v2447 = vunpack.c.0.s8 %v2446
        %v2448 = vlaneseq
        %v2449 = vshrl.u32 %v2448, 7
        %v2450 = vsub.s32 %v2447, %v2449
        %v2451 = vrot.slane %v2437, %v2450
        %v2452 = vcombine.low %v2444, %v2451
        %v2454 = vsub.f32 %v1880, %v2452
        %v2456 = vcombine.high %v2454, %v2454
        %v2458 = vunpack.c.l.s4 1966171168
        %v2459 = vunpack.c.0.s8 %v2458
        %v2460 = vlaneseq
        %v2461 = vshrl.u32 %v2460, 7
        %v2462 = vsub.s32 %v2459, %v2461
        %v2463 = vrot.slane %v2454, %v2462
        %v2465 = vunpack.c.l.s4 1966171168
        %v2466 = vunpack.c.0.s8 %v2465
        %v2467 = vlaneseq
        %v2468 = vshrl.u32 %v2467, 7
        %v2469 = vsub.s32 %v2466, %v2468
        %v2470 = vrot.slane %v2456, %v2469
        %v2471 = vcombine.high %v2463, %v2463
        %v2472 = vcombine.high %v2470, %v2470
        %v2474 = vunpack.c.l.s4 1966171168
        %v2475 = vunpack.c.0.s8 %v2474
        %v2476 = vlaneseq
        %v2477 = vshrl.u32 %v2476, 7
        %v2478 = vsub.s32 %v2475, %v2477
        %v2479 = vrot.slane %v2463, %v2478
        %v2481 = vunpack.c.l.s4 1966171168
        %v2482 = vunpack.c.0.s8 %v2481
        %v2483 = vlaneseq
        %v2484 = vshrl.u32 %v2483, 7
        %v2485 = vsub.s32 %v2482, %v2484
        %v2486 = vrot.slane %v2470, %v2485
        %v2488 = vunpack.c.l.s4 1966171168
        %v2489 = vunpack.c.0.s8 %v2488
        %v2490 = vlaneseq
        %v2491 = vshrl.u32 %v2490, 7
        %v2492 = vsub.s32 %v2489, %v2491
        %v2493 = vrot.slane %v2471, %v2492
        %v2495 = vunpack.c.l.s4 1966171168
        %v2496 = vunpack.c.0.s8 %v2495
        %v2497 = vlaneseq
        %v2498 = vshrl.u32 %v2497, 7
        %v2499 = vsub.s32 %v2496, %v2498
        %v2500 = vrot.slane %v2472, %v2499
        %v2501 = vcombine.high %v2479, %v2479
        %v2502 = vcombine.high %v2486, %v2486
        %v2503 = vcombine.high %v2493, %v2493
        %v2504 = vcombine.high %v2500, %v2500
        %v2513 = vmul.f32 %v2283, %v2479
        %v2514 = vmul.f32 %v2285, %v2493
        %v2515 = vmul.f32 %v2287, %v2501
        %v2516 = vmul.f32 %v2289, %v2503
        %v2517 = vmul.f32 %v2291, %v2486
        %v2518 = vmul.f32 %v2293, %v2500
        %v2519 = vmul.f32 %v2295, %v2502
        %v2520 = vmul.f32 %v2297, %v2504
        %v2521 = vadd.f32 %v2388, %v2513
        %v2522 = vadd.f32 %v2389, %v2514
        %v2523 = vadd.f32 %v2390, %v2515
        %v2524 = vadd.f32 %v2391, %v2516
        %v2525 = vadd.f32 %v2392, %v2517
        %v2526 = vadd.f32 %v2393, %v2518
        %v2527 = vadd.f32 %v2394, %v2519
        %v2528 = vadd.f32 %v2395, %v2520
        %s2529 = sadd.s32 %s390, 2
        %v2530 = vstv %s2529
        %vm2531 = vcmp.lt.s32.totalorder %v2530, %v340
        %v2532 = vsel %vm2531, 1, 0
        %2533 = vset.pattern.permute.xlu0 0
        %2534 = vperm.xlu0 %2533, %v2532
        %v2535 = vpop.permute.xlu0 %2534
        %vm2536 = vcmp.eq.s32.totalorder %v2535, 1
        %v2545 = vcombine.low %v2521, %v2522
        %v2546 = vcombine.low %v2523, %v2524
        %v2547 = vcombine.low %v2525, %v2526
        %v2548 = vcombine.low %v2527, %v2528
        %v2550 = vunpack.c.l.s4 1966171168
        %v2551 = vunpack.c.0.s8 %v2550
        %v2552 = vlaneseq
        %v2553 = vshrl.u32 %v2552, 7
        %v2554 = vsub.s32 %v2551, %v2553
        %v2555 = vrot.slane %v2545, %v2554
        %v2557 = vunpack.c.l.s4 1966171168
        %v2558 = vunpack.c.0.s8 %v2557
        %v2559 = vlaneseq
        %v2560 = vshrl.u32 %v2559, 7
        %v2561 = vsub.s32 %v2558, %v2560
        %v2562 = vrot.slane %v2546, %v2561
        %v2564 = vunpack.c.l.s4 1966171168
        %v2565 = vunpack.c.0.s8 %v2564
        %v2566 = vlaneseq
        %v2567 = vshrl.u32 %v2566, 7
        %v2568 = vsub.s32 %v2565, %v2567
        %v2569 = vrot.slane %v2547, %v2568
        %v2571 = vunpack.c.l.s4 1966171168
        %v2572 = vunpack.c.0.s8 %v2571
        %v2573 = vlaneseq
        %v2574 = vshrl.u32 %v2573, 7
        %v2575 = vsub.s32 %v2572, %v2574
        %v2576 = vrot.slane %v2548, %v2575
        %v2577 = vcombine.low %v2555, %v2562
        %v2578 = vcombine.low %v2569, %v2576
        %v2580 = vunpack.c.l.s4 1966171168
        %v2581 = vunpack.c.0.s8 %v2580
        %v2582 = vlaneseq
        %v2583 = vshrl.u32 %v2582, 7
        %v2584 = vsub.s32 %v2581, %v2583
        %v2585 = vrot.slane %v2577, %v2584
        %v2587 = vunpack.c.l.s4 1966171168
        %v2588 = vunpack.c.0.s8 %v2587
        %v2589 = vlaneseq
        %v2590 = vshrl.u32 %v2589, 7
        %v2591 = vsub.s32 %v2588, %v2590
        %v2592 = vrot.slane %v2578, %v2591
        %v2593 = vcombine.low %v2585, %v2592
        %v2595 = vsel %vm2536, %v2593, %v1880
        %v2596 = vsel %vm2536, %v2593, 0.0
        %v2598 = vcombine.high %v2596, %v2596
        %v2600 = vunpack.c.l.s4 1966171168
        %v2601 = vunpack.c.0.s8 %v2600
        %v2602 = vlaneseq
        %v2603 = vshrl.u32 %v2602, 7
        %v2604 = vsub.s32 %v2601, %v2603
        %v2605 = vrot.slane %v2596, %v2604
        %v2607 = vunpack.c.l.s4 1966171168
        %v2608 = vunpack.c.0.s8 %v2607
        %v2609 = vlaneseq
        %v2610 = vshrl.u32 %v2609, 7
        %v2611 = vsub.s32 %v2608, %v2610
        %v2612 = vrot.slane %v2598, %v2611
        %v2613 = vcombine.high %v2605, %v2605
        %v2614 = vcombine.high %v2612, %v2612
        %v2616 = vunpack.c.l.s4 1966171168
        %v2617 = vunpack.c.0.s8 %v2616
        %v2618 = vlaneseq
        %v2619 = vshrl.u32 %v2618, 7
        %v2620 = vsub.s32 %v2617, %v2619
        %v2621 = vrot.slane %v2605, %v2620
        %v2623 = vunpack.c.l.s4 1966171168
        %v2624 = vunpack.c.0.s8 %v2623
        %v2625 = vlaneseq
        %v2626 = vshrl.u32 %v2625, 7
        %v2627 = vsub.s32 %v2624, %v2626
        %v2628 = vrot.slane %v2612, %v2627
        %v2630 = vunpack.c.l.s4 1966171168
        %v2631 = vunpack.c.0.s8 %v2630
        %v2632 = vlaneseq
        %v2633 = vshrl.u32 %v2632, 7
        %v2634 = vsub.s32 %v2631, %v2633
        %v2635 = vrot.slane %v2613, %v2634
        %v2637 = vunpack.c.l.s4 1966171168
        %v2638 = vunpack.c.0.s8 %v2637
        %v2639 = vlaneseq
        %v2640 = vshrl.u32 %v2639, 7
        %v2641 = vsub.s32 %v2638, %v2640
        %v2642 = vrot.slane %v2614, %v2641
        %v2643 = vcombine.high %v2621, %v2621
        %v2644 = vcombine.high %v2628, %v2628
        %v2645 = vcombine.high %v2635, %v2635
        %v2646 = vcombine.high %v2642, %v2642
        %2655 = vst [vmem:[%s317 + $0x2] sm:$0x1] %v2621
        %2656 = vst [vmem:[%s317 + $0xa] sm:$0x1] %v2635
        %2657 = vst [vmem:[%s317 + $0x12] sm:$0x1] %v2643
        %2658 = vst [vmem:[%s317 + $0x1a] sm:$0x1] %v2645
        %2659 = vst [vmem:[%s317 + $0x22] sm:$0x1] %v2628
        %2660 = vst [vmem:[%s317 + $0x2a] sm:$0x1] %v2642
        %2661 = vst [vmem:[%s317 + $0x32] sm:$0x1] %v2644
        %2662 = vst [vmem:[%s317 + $0x3a] sm:$0x1] %v2646
        %s2663 = scalar_lea.vmem %s292, 3 [#allocation3]
        %v2664 = vld [vmem:[%s2663] ss:$8 sm:$0x7]
        %s2665 = scalar_lea.vmem %s292, 27 [#allocation3]
        %v2666 = vld [vmem:[%s2665] ss:$8 sm:$0x7]
        %s2667 = scalar_lea.vmem %s292, 51 [#allocation3]
        %v2668 = vld [vmem:[%s2667] ss:$8 sm:$0x7]
        %s2669 = scalar_lea.vmem %s292, 75 [#allocation3]
        %v2670 = vld [vmem:[%s2669] ss:$8 sm:$0x7]
        %s2671 = scalar_lea.vmem %s292, 99 [#allocation3]
        %v2672 = vld [vmem:[%s2671] ss:$8 sm:$0x7]
        %s2673 = scalar_lea.vmem %s292, 123 [#allocation3]
        %v2674 = vld [vmem:[%s2673] ss:$8 sm:$0x7]
        %s2675 = scalar_lea.vmem %s292, 147 [#allocation3]
        %v2676 = vld [vmem:[%s2675] ss:$8 sm:$0x7]
        %s2677 = scalar_lea.vmem %s292, 171 [#allocation3]
        %v2678 = vld [vmem:[%s2677] ss:$8 sm:$0x7]
        %v2679 = vpack.c.bf16 %v2595, %v2595
        %2680 = vmatprep.subr.bf16.mxu0 %v489
        %2681 = vmatpush1.bf16.msra.mxu0 %v488
        %2682 = vmatprep.subr.bf16.mxu0 %v492
        %2683 = vmatpush1.bf16.msra.mxu0 %v491
        %2684 = vmatprep.subr.bf16.mxu0 %v495
        %2685 = vmatpush1.bf16.msra.mxu0 %v494
        %2686 = vmatprep.subr.bf16.mxu0 %v498
        %2687 = vmatpush1.bf16.msra.mxu0 %v497
        %2688 = vmatprep.subr.bf16.mxu0 %v501
        %2689 = vmatpush1.bf16.msra.mxu0 %v500
        %2690 = vmatprep.subr.bf16.mxu0 %v504
        %2691 = vmatpush1.bf16.msra.mxu0 %v503
        %2692 = vmatprep.subr.bf16.mxu0 %v507
        %2693 = vmatpush1.bf16.msra.mxu0 %v506
        %2694 = vmatprep.subr.bf16.mxu0 %v510
        %2695 = vmatpush1.bf16.msra.mxu0 %v509
        %2696 = vmatprep.subr.bf16.mxu0 0
        %2697 = vmatpush1.bf16.msra.mxu0 0
        %2698 = vmatprep.subr.bf16.mxu0 0
        %2699 = vmatpush1.bf16.msra.mxu0 0
        %2700 = vmatprep.subr.bf16.mxu0 0
        %2701 = vmatpush1.bf16.msra.mxu0 0
        %2702 = vmatprep.subr.bf16.mxu0 0
        %2703 = vmatpush1.bf16.msra.mxu0 0
        %2704 = vmatprep.subr.bf16.mxu0 0
        %2705 = vmatpush1.bf16.msra.mxu0 0
        %2706 = vmatprep.subr.bf16.mxu0 0
        %2707 = vmatpush1.bf16.msra.mxu0 0
        %2708 = vmatprep.subr.bf16.mxu0 0
        %2709 = vmatpush1.bf16.msra.mxu0 0
        %2710 = vmatprep.subr.bf16.mxu0 0
        %2711 = vmatpush1.bf16.msra.mxu0 0
        %2712 = vmatprep.mubr.bf16.mxu0 0
        %2713 = vmatmul.mubr.bf16.gmra.mrb[0].mxu0 %v2679
        %v2714 = vpop.f32.mrb[0].mxu0
        %v2715 = vadd.f32 %v378, %v2714
        %v2716 = vpop.f32.mrb[0].mxu0
        %v2717 = vadd.f32 %v382, %v2716
        %v2718 = vpop.f32.mrb[0].mxu0
        %v2719 = vpop.f32.mrb[0].mxu0
        %2720 = vdwg.mxu0
        %2721 = vmatprep.subr.bf16.mxu0 0
        %2722 = vmatpush1.bf16.msra.mxu0 %v490
        %2723 = vmatprep.subr.bf16.mxu0 0
        %2724 = vmatpush1.bf16.msra.mxu0 %v493
        %2725 = vmatprep.subr.bf16.mxu0 0
        %2726 = vmatpush1.bf16.msra.mxu0 %v496
        %2727 = vmatprep.subr.bf16.mxu0 0
        %2728 = vmatpush1.bf16.msra.mxu0 %v499
        %2729 = vmatprep.subr.bf16.mxu0 0
        %2730 = vmatpush1.bf16.msra.mxu0 %v502
        %2731 = vmatprep.subr.bf16.mxu0 0
        %2732 = vmatpush1.bf16.msra.mxu0 %v505
        %2733 = vmatprep.subr.bf16.mxu0 0
        %2734 = vmatpush1.bf16.msra.mxu0 %v508
        %2735 = vmatprep.subr.bf16.mxu0 0
        %2736 = vmatpush1.bf16.msra.mxu0 %v511
        %2737 = vmatprep.subr.bf16.mxu0 0
        %2738 = vmatpush1.bf16.msra.mxu0 0
        %2739 = vmatprep.subr.bf16.mxu0 0
        %2740 = vmatpush1.bf16.msra.mxu0 0
        %2741 = vmatprep.subr.bf16.mxu0 0
        %2742 = vmatpush1.bf16.msra.mxu0 0
        %2743 = vmatprep.subr.bf16.mxu0 0
        %2744 = vmatpush1.bf16.msra.mxu0 0
        %2745 = vmatprep.subr.bf16.mxu0 0
        %2746 = vmatpush1.bf16.msra.mxu0 0
        %2747 = vmatprep.subr.bf16.mxu0 0
        %2748 = vmatpush1.bf16.msra.mxu0 0
        %2749 = vmatprep.subr.bf16.mxu0 0
        %2750 = vmatpush1.bf16.msra.mxu0 0
        %2751 = vmatprep.subr.bf16.mxu0 0
        %2752 = vmatpush1.bf16.msra.mxu0 0
        %2753 = vmatprep.mubr.bf16.mxu0 0
        %2754 = vmatmul.mubr.bf16.gmra.mrb[0].mxu0 %v2679
        %v2755 = vpop.f32.mrb[0].mxu0
        %v2756 = vadd.f32 %v386, %v2755
        %v2757 = vpop.f32.mrb[0].mxu0
        %v2758 = vpop.f32.mrb[0].mxu0
        %v2759 = vpop.f32.mrb[0].mxu0
        %2760 = vdwg.mxu0
        %v2762 = vcombine.high %v2715, %v2715
        %v2764 = vunpack.c.l.s4 1966171168
        %v2765 = vunpack.c.0.s8 %v2764
        %v2766 = vlaneseq
        %v2767 = vshrl.u32 %v2766, 7
        %v2768 = vsub.s32 %v2765, %v2767
        %v2769 = vrot.slane %v2715, %v2768
        %v2771 = vunpack.c.l.s4 1966171168
        %v2772 = vunpack.c.0.s8 %v2771
        %v2773 = vlaneseq
        %v2774 = vshrl.u32 %v2773, 7
        %v2775 = vsub.s32 %v2772, %v2774
        %v2776 = vrot.slane %v2762, %v2775
        %v2777 = vcombine.high %v2769, %v2769
        %v2778 = vcombine.high %v2776, %v2776
        %v2780 = vunpack.c.l.s4 1966171168
        %v2781 = vunpack.c.0.s8 %v2780
        %v2782 = vlaneseq
        %v2783 = vshrl.u32 %v2782, 7
        %v2784 = vsub.s32 %v2781, %v2783
        %v2785 = vrot.slane %v2769, %v2784
        %v2787 = vunpack.c.l.s4 1966171168
        %v2788 = vunpack.c.0.s8 %v2787
        %v2789 = vlaneseq
        %v2790 = vshrl.u32 %v2789, 7
        %v2791 = vsub.s32 %v2788, %v2790
        %v2792 = vrot.slane %v2776, %v2791
        %v2794 = vunpack.c.l.s4 1966171168
        %v2795 = vunpack.c.0.s8 %v2794
        %v2796 = vlaneseq
        %v2797 = vshrl.u32 %v2796, 7
        %v2798 = vsub.s32 %v2795, %v2797
        %v2799 = vrot.slane %v2777, %v2798
        %v2801 = vunpack.c.l.s4 1966171168
        %v2802 = vunpack.c.0.s8 %v2801
        %v2803 = vlaneseq
        %v2804 = vshrl.u32 %v2803, 7
        %v2805 = vsub.s32 %v2802, %v2804
        %v2806 = vrot.slane %v2778, %v2805
        %v2807 = vcombine.high %v2785, %v2785
        %v2808 = vcombine.high %v2792, %v2792
        %v2809 = vcombine.high %v2799, %v2799
        %v2810 = vcombine.high %v2806, %v2806
        %v2819 = vadd.f32 %v2664, %v2785
        %v2820 = vadd.f32 %v2666, %v2799
        %v2821 = vadd.f32 %v2668, %v2807
        %v2822 = vadd.f32 %v2670, %v2809
        %v2823 = vadd.f32 %v2672, %v2792
        %v2824 = vadd.f32 %v2674, %v2806
        %v2825 = vadd.f32 %v2676, %v2808
        %v2826 = vadd.f32 %v2678, %v2810
        %v2827 = vxor.u32 %v2819, 2147483648
        %v2828 = vxor.u32 %v2820, 2147483648
        %v2829 = vxor.u32 %v2821, 2147483648
        %v2830 = vxor.u32 %v2822, 2147483648
        %v2831 = vxor.u32 %v2823, 2147483648
        %v2832 = vxor.u32 %v2824, 2147483648
        %v2833 = vxor.u32 %v2825, 2147483648
        %v2834 = vxor.u32 %v2826, 2147483648
        %v2835 = vmul.f32 %v2827, 1.442695
        %v2836 = vpow.pop %v2835
        %v2837 = vmul.f32 %v2828, 1.442695
        %v2838 = vpow.pop %v2837
        %v2839 = vmul.f32 %v2829, 1.442695
        %v2840 = vpow.pop %v2839
        %v2841 = vmul.f32 %v2830, 1.442695
        %v2842 = vpow.pop %v2841
        %v2843 = vmul.f32 %v2831, 1.442695
        %v2844 = vpow.pop %v2843
        %v2845 = vmul.f32 %v2832, 1.442695
        %v2846 = vpow.pop %v2845
        %v2847 = vmul.f32 %v2833, 1.442695
        %v2848 = vpow.pop %v2847
        %v2849 = vmul.f32 %v2834, 1.442695
        %v2850 = vpow.pop %v2849
        %v2851 = vadd.f32 %v2836, 1.0
        %v2852 = vadd.f32 %v2838, 1.0
        %v2853 = vadd.f32 %v2840, 1.0
        %v2854 = vadd.f32 %v2842, 1.0
        %v2855 = vadd.f32 %v2844, 1.0
        %v2856 = vadd.f32 %v2846, 1.0
        %v2857 = vadd.f32 %v2848, 1.0
        %v2858 = vadd.f32 %v2850, 1.0
        %v2859 = vrcp.pop %v2851
        %v2860 = vmul.f32 1.0, %v2859
        %v2861 = vrcp.pop %v2852
        %v2862 = vmul.f32 1.0, %v2861
        %v2863 = vrcp.pop %v2853
        %v2864 = vmul.f32 1.0, %v2863
        %v2865 = vrcp.pop %v2854
        %v2866 = vmul.f32 1.0, %v2865
        %v2867 = vrcp.pop %v2855
        %v2868 = vmul.f32 1.0, %v2867
        %v2869 = vrcp.pop %v2856
        %v2870 = vmul.f32 1.0, %v2869
        %v2871 = vrcp.pop %v2857
        %v2872 = vmul.f32 1.0, %v2871
        %v2873 = vrcp.pop %v2858
        %v2874 = vmul.f32 1.0, %v2873
        %v2883 = vrot.slane %v2664, 1
        %v2884 = vrot.slane %v2666, 1
        %v2885 = vrot.slane %v2668, 1
        %v2886 = vrot.slane %v2670, 1
        %v2887 = vrot.slane %v2672, 1
        %v2888 = vrot.slane %v2674, 1
        %v2889 = vrot.slane %v2676, 1
        %v2890 = vrot.slane %v2678, 1
        %v2900 = vcombine.high %v2717, %v2717
        %v2902 = vunpack.c.l.s4 1966171168
        %v2903 = vunpack.c.0.s8 %v2902
        %v2904 = vlaneseq
        %v2905 = vshrl.u32 %v2904, 7
        %v2906 = vsub.s32 %v2903, %v2905
        %v2907 = vrot.slane %v2717, %v2906
        %v2909 = vunpack.c.l.s4 1966171168
        %v2910 = vunpack.c.0.s8 %v2909
        %v2911 = vlaneseq
        %v2912 = vshrl.u32 %v2911, 7
        %v2913 = vsub.s32 %v2910, %v2912
        %v2914 = vrot.slane %v2900, %v2913
        %v2915 = vcombine.high %v2907, %v2907
        %v2916 = vcombine.high %v2914, %v2914
        %v2918 = vunpack.c.l.s4 1966171168
        %v2919 = vunpack.c.0.s8 %v2918
        %v2920 = vlaneseq
        %v2921 = vshrl.u32 %v2920, 7
        %v2922 = vsub.s32 %v2919, %v2921
        %v2923 = vrot.slane %v2907, %v2922
        %v2925 = vunpack.c.l.s4 1966171168
        %v2926 = vunpack.c.0.s8 %v2925
        %v2927 = vlaneseq
        %v2928 = vshrl.u32 %v2927, 7
        %v2929 = vsub.s32 %v2926, %v2928
        %v2930 = vrot.slane %v2914, %v2929
        %v2932 = vunpack.c.l.s4 1966171168
        %v2933 = vunpack.c.0.s8 %v2932
        %v2934 = vlaneseq
        %v2935 = vshrl.u32 %v2934, 7
        %v2936 = vsub.s32 %v2933, %v2935
        %v2937 = vrot.slane %v2915, %v2936
        %v2939 = vunpack.c.l.s4 1966171168
        %v2940 = vunpack.c.0.s8 %v2939
        %v2941 = vlaneseq
        %v2942 = vshrl.u32 %v2941, 7
        %v2943 = vsub.s32 %v2940, %v2942
        %v2944 = vrot.slane %v2916, %v2943
        %v2945 = vcombine.high %v2923, %v2923
        %v2946 = vcombine.high %v2930, %v2930
        %v2947 = vcombine.high %v2937, %v2937
        %v2948 = vcombine.high %v2944, %v2944
        %v2957 = vadd.f32 %v2883, %v2923
        %v2958 = vadd.f32 %v2884, %v2937
        %v2959 = vadd.f32 %v2885, %v2945
        %v2960 = vadd.f32 %v2886, %v2947
        %v2961 = vadd.f32 %v2887, %v2930
        %v2962 = vadd.f32 %v2888, %v2944
        %v2963 = vadd.f32 %v2889, %v2946
        %v2964 = vadd.f32 %v2890, %v2948
        %v2965 = vxor.u32 %v2957, 2147483648
        %v2966 = vxor.u32 %v2958, 2147483648
        %v2967 = vxor.u32 %v2959, 2147483648
        %v2968 = vxor.u32 %v2960, 2147483648
        %v2969 = vxor.u32 %v2961, 2147483648
        %v2970 = vxor.u32 %v2962, 2147483648
        %v2971 = vxor.u32 %v2963, 2147483648
        %v2972 = vxor.u32 %v2964, 2147483648
        %v2973 = vmul.f32 %v2965, 1.442695
        %v2974 = vpow.pop %v2973
        %v2975 = vmul.f32 %v2966, 1.442695
        %v2976 = vpow.pop %v2975
        %v2977 = vmul.f32 %v2967, 1.442695
        %v2978 = vpow.pop %v2977
        %v2979 = vmul.f32 %v2968, 1.442695
        %v2980 = vpow.pop %v2979
        %v2981 = vmul.f32 %v2969, 1.442695
        %v2982 = vpow.pop %v2981
        %v2983 = vmul.f32 %v2970, 1.442695
        %v2984 = vpow.pop %v2983
        %v2985 = vmul.f32 %v2971, 1.442695
        %v2986 = vpow.pop %v2985
        %v2987 = vmul.f32 %v2972, 1.442695
        %v2988 = vpow.pop %v2987
        %v2989 = vadd.f32 %v2974, 1.0
        %v2990 = vadd.f32 %v2976, 1.0
        %v2991 = vadd.f32 %v2978, 1.0
        %v2992 = vadd.f32 %v2980, 1.0
        %v2993 = vadd.f32 %v2982, 1.0
        %v2994 = vadd.f32 %v2984, 1.0
        %v2995 = vadd.f32 %v2986, 1.0
        %v2996 = vadd.f32 %v2988, 1.0
        %v2997 = vrcp.pop %v2989
        %v2998 = vmul.f32 1.0, %v2997
        %v2999 = vrcp.pop %v2990
        %v3000 = vmul.f32 1.0, %v2999
        %v3001 = vrcp.pop %v2991
        %v3002 = vmul.f32 1.0, %v3001
        %v3003 = vrcp.pop %v2992
        %v3004 = vmul.f32 1.0, %v3003
        %v3005 = vrcp.pop %v2993
        %v3006 = vmul.f32 1.0, %v3005
        %v3007 = vrcp.pop %v2994
        %v3008 = vmul.f32 1.0, %v3007
        %v3009 = vrcp.pop %v2995
        %v3010 = vmul.f32 1.0, %v3009
        %v3011 = vrcp.pop %v2996
        %v3012 = vmul.f32 1.0, %v3011
        %v3014 = vcombine.high %v2756, %v2756
        %v3016 = vunpack.c.l.s4 1966171168
        %v3017 = vunpack.c.0.s8 %v3016
        %v3018 = vlaneseq
        %v3019 = vshrl.u32 %v3018, 7
        %v3020 = vsub.s32 %v3017, %v3019
        %v3021 = vrot.slane %v2756, %v3020
        %v3023 = vunpack.c.l.s4 1966171168
        %v3024 = vunpack.c.0.s8 %v3023
        %v3025 = vlaneseq
        %v3026 = vshrl.u32 %v3025, 7
        %v3027 = vsub.s32 %v3024, %v3026
        %v3028 = vrot.slane %v3014, %v3027
        %v3029 = vcombine.high %v3021, %v3021
        %v3030 = vcombine.high %v3028, %v3028
        %v3032 = vunpack.c.l.s4 1966171168
        %v3033 = vunpack.c.0.s8 %v3032
        %v3034 = vlaneseq
        %v3035 = vshrl.u32 %v3034, 7
        %v3036 = vsub.s32 %v3033, %v3035
        %v3037 = vrot.slane %v3021, %v3036
        %v3039 = vunpack.c.l.s4 1966171168
        %v3040 = vunpack.c.0.s8 %v3039
        %v3041 = vlaneseq
        %v3042 = vshrl.u32 %v3041, 7
        %v3043 = vsub.s32 %v3040, %v3042
        %v3044 = vrot.slane %v3028, %v3043
        %v3046 = vunpack.c.l.s4 1966171168
        %v3047 = vunpack.c.0.s8 %v3046
        %v3048 = vlaneseq
        %v3049 = vshrl.u32 %v3048, 7
        %v3050 = vsub.s32 %v3047, %v3049
        %v3051 = vrot.slane %v3029, %v3050
        %v3053 = vunpack.c.l.s4 1966171168
        %v3054 = vunpack.c.0.s8 %v3053
        %v3055 = vlaneseq
        %v3056 = vshrl.u32 %v3055, 7
        %v3057 = vsub.s32 %v3054, %v3056
        %v3058 = vrot.slane %v3030, %v3057
        %v3059 = vcombine.high %v3037, %v3037
        %v3060 = vcombine.high %v3044, %v3044
        %v3061 = vcombine.high %v3051, %v3051
        %v3062 = vcombine.high %v3058, %v3058
        %v3071 = vmul.f32 %v2860, %v3037
        %v3072 = vmul.f32 %v2862, %v3051
        %v3073 = vmul.f32 %v2864, %v3059
        %v3074 = vmul.f32 %v2866, %v3061
        %v3075 = vmul.f32 %v2868, %v3044
        %v3076 = vmul.f32 %v2870, %v3058
        %v3077 = vmul.f32 %v2872, %v3060
        %v3078 = vmul.f32 %v2874, %v3062
        %v3079 = vrot.slane %v2664, 2
        %v3080 = vrot.slane %v2666, 2
        %v3081 = vrot.slane %v2668, 2
        %v3082 = vrot.slane %v2670, 2
        %v3083 = vrot.slane %v2672, 2
        %v3084 = vrot.slane %v2674, 2
        %v3085 = vrot.slane %v2676, 2
        %v3086 = vrot.slane %v2678, 2
        %v3095 = vadd.f32 %v3079, %v3071
        %v3096 = vadd.f32 %v3080, %v3072
        %v3097 = vadd.f32 %v3081, %v3073
        %v3098 = vadd.f32 %v3082, %v3074
        %v3099 = vadd.f32 %v3083, %v3075
        %v3100 = vadd.f32 %v3084, %v3076
        %v3101 = vadd.f32 %v3085, %v3077
        %v3102 = vadd.f32 %v3086, %v3078
        %v3103 = vtanh.pop %v3095
        %v3104 = vtanh.pop %v3096
        %v3105 = vtanh.pop %v3097
        %v3106 = vtanh.pop %v3098
        %v3107 = vtanh.pop %v3099
        %v3108 = vtanh.pop %v3100
        %v3109 = vtanh.pop %v3101
        %v3110 = vtanh.pop %v3102
        %v3119 = vcombine.low %v3103, %v3104
        %v3120 = vcombine.low %v3105, %v3106
        %v3121 = vcombine.low %v3107, %v3108
        %v3122 = vcombine.low %v3109, %v3110
        %v3124 = vunpack.c.l.s4 1966171168
        %v3125 = vunpack.c.0.s8 %v3124
        %v3126 = vlaneseq
        %v3127 = vshrl.u32 %v3126, 7
        %v3128 = vsub.s32 %v3125, %v3127
        %v3129 = vrot.slane %v3119, %v3128
        %v3131 = vunpack.c.l.s4 1966171168
        %v3132 = vunpack.c.0.s8 %v3131
        %v3133 = vlaneseq
        %v3134 = vshrl.u32 %v3133, 7
        %v3135 = vsub.s32 %v3132, %v3134
        %v3136 = vrot.slane %v3120, %v3135
        %v3138 = vunpack.c.l.s4 1966171168
        %v3139 = vunpack.c.0.s8 %v3138
        %v3140 = vlaneseq
        %v3141 = vshrl.u32 %v3140, 7
        %v3142 = vsub.s32 %v3139, %v3141
        %v3143 = vrot.slane %v3121, %v3142
        %v3145 = vunpack.c.l.s4 1966171168
        %v3146 = vunpack.c.0.s8 %v3145
        %v3147 = vlaneseq
        %v3148 = vshrl.u32 %v3147, 7
        %v3149 = vsub.s32 %v3146, %v3148
        %v3150 = vrot.slane %v3122, %v3149
        %v3151 = vcombine.low %v3129, %v3136
        %v3152 = vcombine.low %v3143, %v3150
        %v3154 = vunpack.c.l.s4 1966171168
        %v3155 = vunpack.c.0.s8 %v3154
        %v3156 = vlaneseq
        %v3157 = vshrl.u32 %v3156, 7
        %v3158 = vsub.s32 %v3155, %v3157
        %v3159 = vrot.slane %v3151, %v3158
        %v3161 = vunpack.c.l.s4 1966171168
        %v3162 = vunpack.c.0.s8 %v3161
        %v3163 = vlaneseq
        %v3164 = vshrl.u32 %v3163, 7
        %v3165 = vsub.s32 %v3162, %v3164
        %v3166 = vrot.slane %v3152, %v3165
        %v3167 = vcombine.low %v3159, %v3166
        %v3169 = vsub.f32 %v2595, %v3167
        %v3171 = vcombine.high %v3169, %v3169
        %v3173 = vunpack.c.l.s4 1966171168
        %v3174 = vunpack.c.0.s8 %v3173
        %v3175 = vlaneseq
        %v3176 = vshrl.u32 %v3175, 7
        %v3177 = vsub.s32 %v3174, %v3176
        %v3178 = vrot.slane %v3169, %v3177
        %v3180 = vunpack.c.l.s4 1966171168
        %v3181 = vunpack.c.0.s8 %v3180
        %v3182 = vlaneseq
        %v3183 = vshrl.u32 %v3182, 7
        %v3184 = vsub.s32 %v3181, %v3183
        %v3185 = vrot.slane %v3171, %v3184
        %v3186 = vcombine.high %v3178, %v3178
        %v3187 = vcombine.high %v3185, %v3185
        %v3189 = vunpack.c.l.s4 1966171168
        %v3190 = vunpack.c.0.s8 %v3189
        %v3191 = vlaneseq
        %v3192 = vshrl.u32 %v3191, 7
        %v3193 = vsub.s32 %v3190, %v3192
        %v3194 = vrot.slane %v3178, %v3193
        %v3196 = vunpack.c.l.s4 1966171168
        %v3197 = vunpack.c.0.s8 %v3196
        %v3198 = vlaneseq
        %v3199 = vshrl.u32 %v3198, 7
        %v3200 = vsub.s32 %v3197, %v3199
        %v3201 = vrot.slane %v3185, %v3200
        %v3203 = vunpack.c.l.s4 1966171168
        %v3204 = vunpack.c.0.s8 %v3203
        %v3205 = vlaneseq
        %v3206 = vshrl.u32 %v3205, 7
        %v3207 = vsub.s32 %v3204, %v3206
        %v3208 = vrot.slane %v3186, %v3207
        %v3210 = vunpack.c.l.s4 1966171168
        %v3211 = vunpack.c.0.s8 %v3210
        %v3212 = vlaneseq
        %v3213 = vshrl.u32 %v3212, 7
        %v3214 = vsub.s32 %v3211, %v3213
        %v3215 = vrot.slane %v3187, %v3214
        %v3216 = vcombine.high %v3194, %v3194
        %v3217 = vcombine.high %v3201, %v3201
        %v3218 = vcombine.high %v3208, %v3208
        %v3219 = vcombine.high %v3215, %v3215
        %v3228 = vmul.f32 %v2998, %v3194
        %v3229 = vmul.f32 %v3000, %v3208
        %v3230 = vmul.f32 %v3002, %v3216
        %v3231 = vmul.f32 %v3004, %v3218
        %v3232 = vmul.f32 %v3006, %v3201
        %v3233 = vmul.f32 %v3008, %v3215
        %v3234 = vmul.f32 %v3010, %v3217
        %v3235 = vmul.f32 %v3012, %v3219
        %v3236 = vadd.f32 %v3103, %v3228
        %v3237 = vadd.f32 %v3104, %v3229
        %v3238 = vadd.f32 %v3105, %v3230
        %v3239 = vadd.f32 %v3106, %v3231
        %v3240 = vadd.f32 %v3107, %v3232
        %v3241 = vadd.f32 %v3108, %v3233
        %v3242 = vadd.f32 %v3109, %v3234
        %v3243 = vadd.f32 %v3110, %v3235
        %s3244 = sadd.s32 %s390, 3
        %v3245 = vstv %s3244
        %vm3246 = vcmp.lt.s32.totalorder %v3245, %v340
        %v3247 = vsel %vm3246, 1, 0
        %3248 = vset.pattern.permute.xlu0 0
        %3249 = vperm.xlu0 %3248, %v3247
        %v3250 = vpop.permute.xlu0 %3249
        %vm3251 = vcmp.eq.s32.totalorder %v3250, 1
        %v3260 = vcombine.low %v3236, %v3237
        %v3261 = vcombine.low %v3238, %v3239
        %v3262 = vcombine.low %v3240, %v3241
        %v3263 = vcombine.low %v3242, %v3243
        %v3265 = vunpack.c.l.s4 1966171168
        %v3266 = vunpack.c.0.s8 %v3265
        %v3267 = vlaneseq
        %v3268 = vshrl.u32 %v3267, 7
        %v3269 = vsub.s32 %v3266, %v3268
        %v3270 = vrot.slane %v3260, %v3269
        %v3272 = vunpack.c.l.s4 1966171168
        %v3273 = vunpack.c.0.s8 %v3272
        %v3274 = vlaneseq
        %v3275 = vshrl.u32 %v3274, 7
        %v3276 = vsub.s32 %v3273, %v3275
        %v3277 = vrot.slane %v3261, %v3276
        %v3279 = vunpack.c.l.s4 1966171168
        %v3280 = vunpack.c.0.s8 %v3279
        %v3281 = vlaneseq
        %v3282 = vshrl.u32 %v3281, 7
        %v3283 = vsub.s32 %v3280, %v3282
        %v3284 = vrot.slane %v3262, %v3283
        %v3286 = vunpack.c.l.s4 1966171168
        %v3287 = vunpack.c.0.s8 %v3286
        %v3288 = vlaneseq
        %v3289 = vshrl.u32 %v3288, 7
        %v3290 = vsub.s32 %v3287, %v3289
        %v3291 = vrot.slane %v3263, %v3290
        %v3292 = vcombine.low %v3270, %v3277
        %v3293 = vcombine.low %v3284, %v3291
        %v3295 = vunpack.c.l.s4 1966171168
        %v3296 = vunpack.c.0.s8 %v3295
        %v3297 = vlaneseq
        %v3298 = vshrl.u32 %v3297, 7
        %v3299 = vsub.s32 %v3296, %v3298
        %v3300 = vrot.slane %v3292, %v3299
        %v3302 = vunpack.c.l.s4 1966171168
        %v3303 = vunpack.c.0.s8 %v3302
        %v3304 = vlaneseq
        %v3305 = vshrl.u32 %v3304, 7
        %v3306 = vsub.s32 %v3303, %v3305
        %v3307 = vrot.slane %v3293, %v3306
        %v3308 = vcombine.low %v3300, %v3307
        %v3310 = vsel %vm3251, %v3308, %v2595
        %v3311 = vsel %vm3251, %v3308, 0.0
        %v3313 = vcombine.high %v3311, %v3311
        %v3315 = vunpack.c.l.s4 1966171168
        %v3316 = vunpack.c.0.s8 %v3315
        %v3317 = vlaneseq
        %v3318 = vshrl.u32 %v3317, 7
        %v3319 = vsub.s32 %v3316, %v3318
        %v3320 = vrot.slane %v3311, %v3319
        %v3322 = vunpack.c.l.s4 1966171168
        %v3323 = vunpack.c.0.s8 %v3322
        %v3324 = vlaneseq
        %v3325 = vshrl.u32 %v3324, 7
        %v3326 = vsub.s32 %v3323, %v3325
        %v3327 = vrot.slane %v3313, %v3326
        %v3328 = vcombine.high %v3320, %v3320
        %v3329 = vcombine.high %v3327, %v3327
        %v3331 = vunpack.c.l.s4 1966171168
        %v3332 = vunpack.c.0.s8 %v3331
        %v3333 = vlaneseq
        %v3334 = vshrl.u32 %v3333, 7
        %v3335 = vsub.s32 %v3332, %v3334
        %v3336 = vrot.slane %v3320, %v3335
        %v3338 = vunpack.c.l.s4 1966171168
        %v3339 = vunpack.c.0.s8 %v3338
        %v3340 = vlaneseq
        %v3341 = vshrl.u32 %v3340, 7
        %v3342 = vsub.s32 %v3339, %v3341
        %v3343 = vrot.slane %v3327, %v3342
        %v3345 = vunpack.c.l.s4 1966171168
        %v3346 = vunpack.c.0.s8 %v3345
        %v3347 = vlaneseq
        %v3348 = vshrl.u32 %v3347, 7
        %v3349 = vsub.s32 %v3346, %v3348
        %v3350 = vrot.slane %v3328, %v3349
        %v3352 = vunpack.c.l.s4 1966171168
        %v3353 = vunpack.c.0.s8 %v3352
        %v3354 = vlaneseq
        %v3355 = vshrl.u32 %v3354, 7
        %v3356 = vsub.s32 %v3353, %v3355
        %v3357 = vrot.slane %v3329, %v3356
        %v3358 = vcombine.high %v3336, %v3336
        %v3359 = vcombine.high %v3343, %v3343
        %v3360 = vcombine.high %v3350, %v3350
        %v3361 = vcombine.high %v3357, %v3357
        %3370 = vst [vmem:[%s317 + $0x3] sm:$0x1] %v3336
        %3371 = vst [vmem:[%s317 + $0xb] sm:$0x1] %v3350
        %3372 = vst [vmem:[%s317 + $0x13] sm:$0x1] %v3358
        %3373 = vst [vmem:[%s317 + $0x1b] sm:$0x1] %v3360
        %3374 = vst [vmem:[%s317 + $0x23] sm:$0x1] %v3343
        %3375 = vst [vmem:[%s317 + $0x2b] sm:$0x1] %v3357
        %3376 = vst [vmem:[%s317 + $0x33] sm:$0x1] %v3359
        %3377 = vst [vmem:[%s317 + $0x3b] sm:$0x1] %v3361
        %s3378 = scalar_lea.vmem %s292, 4 [#allocation3]
        %v3379 = vld [vmem:[%s3378] ss:$8 sm:$0x7]
        %s3380 = scalar_lea.vmem %s292, 28 [#allocation3]
        %v3381 = vld [vmem:[%s3380] ss:$8 sm:$0x7]
        %s3382 = scalar_lea.vmem %s292, 52 [#allocation3]
        %v3383 = vld [vmem:[%s3382] ss:$8 sm:$0x7]
        %s3384 = scalar_lea.vmem %s292, 76 [#allocation3]
        %v3385 = vld [vmem:[%s3384] ss:$8 sm:$0x7]
        %s3386 = scalar_lea.vmem %s292, 100 [#allocation3]
        %v3387 = vld [vmem:[%s3386] ss:$8 sm:$0x7]
        %s3388 = scalar_lea.vmem %s292, 124 [#allocation3]
        %v3389 = vld [vmem:[%s3388] ss:$8 sm:$0x7]
        %s3390 = scalar_lea.vmem %s292, 148 [#allocation3]
        %v3391 = vld [vmem:[%s3390] ss:$8 sm:$0x7]
        %s3392 = scalar_lea.vmem %s292, 172 [#allocation3]
        %v3393 = vld [vmem:[%s3392] ss:$8 sm:$0x7]
        %v3394 = vpack.c.bf16 %v3310, %v3310
        %3395 = vmatprep.subr.bf16.mxu0 %v489
        %3396 = vmatpush1.bf16.msra.mxu0 %v488
        %3397 = vmatprep.subr.bf16.mxu0 %v492
        %3398 = vmatpush1.bf16.msra.mxu0 %v491
        %3399 = vmatprep.subr.bf16.mxu0 %v495
        %3400 = vmatpush1.bf16.msra.mxu0 %v494
        %3401 = vmatprep.subr.bf16.mxu0 %v498
        %3402 = vmatpush1.bf16.msra.mxu0 %v497
        %3403 = vmatprep.subr.bf16.mxu0 %v501
        %3404 = vmatpush1.bf16.msra.mxu0 %v500
        %3405 = vmatprep.subr.bf16.mxu0 %v504
        %3406 = vmatpush1.bf16.msra.mxu0 %v503
        %3407 = vmatprep.subr.bf16.mxu0 %v507
        %3408 = vmatpush1.bf16.msra.mxu0 %v506
        %3409 = vmatprep.subr.bf16.mxu0 %v510
        %3410 = vmatpush1.bf16.msra.mxu0 %v509
        %3411 = vmatprep.subr.bf16.mxu0 0
        %3412 = vmatpush1.bf16.msra.mxu0 0
        %3413 = vmatprep.subr.bf16.mxu0 0
        %3414 = vmatpush1.bf16.msra.mxu0 0
        %3415 = vmatprep.subr.bf16.mxu0 0
        %3416 = vmatpush1.bf16.msra.mxu0 0
        %3417 = vmatprep.subr.bf16.mxu0 0
        %3418 = vmatpush1.bf16.msra.mxu0 0
        %3419 = vmatprep.subr.bf16.mxu0 0
        %3420 = vmatpush1.bf16.msra.mxu0 0
        %3421 = vmatprep.subr.bf16.mxu0 0
        %3422 = vmatpush1.bf16.msra.mxu0 0
        %3423 = vmatprep.subr.bf16.mxu0 0
        %3424 = vmatpush1.bf16.msra.mxu0 0
        %3425 = vmatprep.subr.bf16.mxu0 0
        %3426 = vmatpush1.bf16.msra.mxu0 0
        %3427 = vmatprep.mubr.bf16.mxu0 0
        %3428 = vmatmul.mubr.bf16.gmra.mrb[0].mxu0 %v3394
        %v3429 = vpop.f32.mrb[0].mxu0
        %v3430 = vadd.f32 %v378, %v3429
        %v3431 = vpop.f32.mrb[0].mxu0
        %v3432 = vadd.f32 %v382, %v3431
        %v3433 = vpop.f32.mrb[0].mxu0
        %v3434 = vpop.f32.mrb[0].mxu0
        %3435 = vdwg.mxu0
        %3436 = vmatprep.subr.bf16.mxu0 0
        %3437 = vmatpush1.bf16.msra.mxu0 %v490
        %3438 = vmatprep.subr.bf16.mxu0 0
        %3439 = vmatpush1.bf16.msra.mxu0 %v493
        %3440 = vmatprep.subr.bf16.mxu0 0
        %3441 = vmatpush1.bf16.msra.mxu0 %v496
        %3442 = vmatprep.subr.bf16.mxu0 0
        %3443 = vmatpush1.bf16.msra.mxu0 %v499
        %3444 = vmatprep.subr.bf16.mxu0 0
        %3445 = vmatpush1.bf16.msra.mxu0 %v502
        %3446 = vmatprep.subr.bf16.mxu0 0
        %3447 = vmatpush1.bf16.msra.mxu0 %v505
        %3448 = vmatprep.subr.bf16.mxu0 0
        %3449 = vmatpush1.bf16.msra.mxu0 %v508
        %3450 = vmatprep.subr.bf16.mxu0 0
        %3451 = vmatpush1.bf16.msra.mxu0 %v511
        %3452 = vmatprep.subr.bf16.mxu0 0
        %3453 = vmatpush1.bf16.msra.mxu0 0
        %3454 = vmatprep.subr.bf16.mxu0 0
        %3455 = vmatpush1.bf16.msra.mxu0 0
        %3456 = vmatprep.subr.bf16.mxu0 0
        %3457 = vmatpush1.bf16.msra.mxu0 0
        %3458 = vmatprep.subr.bf16.mxu0 0
        %3459 = vmatpush1.bf16.msra.mxu0 0
        %3460 = vmatprep.subr.bf16.mxu0 0
        %3461 = vmatpush1.bf16.msra.mxu0 0
        %3462 = vmatprep.subr.bf16.mxu0 0
        %3463 = vmatpush1.bf16.msra.mxu0 0
        %3464 = vmatprep.subr.bf16.mxu0 0
        %3465 = vmatpush1.bf16.msra.mxu0 0
        %3466 = vmatprep.subr.bf16.mxu0 0
        %3467 = vmatpush1.bf16.msra.mxu0 0
        %3468 = vmatprep.mubr.bf16.mxu0 0
        %3469 = vmatmul.mubr.bf16.gmra.mrb[0].mxu0 %v3394
        %v3470 = vpop.f32.mrb[0].mxu0
        %v3471 = vadd.f32 %v386, %v3470
        %v3472 = vpop.f32.mrb[0].mxu0
        %v3473 = vpop.f32.mrb[0].mxu0
        %v3474 = vpop.f32.mrb[0].mxu0
        %3475 = vdwg.mxu0
        %v3477 = vcombine.high %v3430, %v3430
        %v3479 = vunpack.c.l.s4 1966171168
        %v3480 = vunpack.c.0.s8 %v3479
        %v3481 = vlaneseq
        %v3482 = vshrl.u32 %v3481, 7
        %v3483 = vsub.s32 %v3480, %v3482
        %v3484 = vrot.slane %v3430, %v3483
        %v3486 = vunpack.c.l.s4 1966171168
        %v3487 = vunpack.c.0.s8 %v3486
        %v3488 = vlaneseq
        %v3489 = vshrl.u32 %v3488, 7
        %v3490 = vsub.s32 %v3487, %v3489
        %v3491 = vrot.slane %v3477, %v3490
        %v3492 = vcombine.high %v3484, %v3484
        %v3493 = vcombine.high %v3491, %v3491
        %v3495 = vunpack.c.l.s4 1966171168
        %v3496 = vunpack.c.0.s8 %v3495
        %v3497 = vlaneseq
        %v3498 = vshrl.u32 %v3497, 7
        %v3499 = vsub.s32 %v3496, %v3498
        %v3500 = vrot.slane %v3484, %v3499
        %v3502 = vunpack.c.l.s4 1966171168
        %v3503 = vunpack.c.0.s8 %v3502
        %v3504 = vlaneseq
        %v3505 = vshrl.u32 %v3504, 7
        %v3506 = vsub.s32 %v3503, %v3505
        %v3507 = vrot.slane %v3491, %v3506
        %v3509 = vunpack.c.l.s4 1966171168
        %v3510 = vunpack.c.0.s8 %v3509
        %v3511 = vlaneseq
        %v3512 = vshrl.u32 %v3511, 7
        %v3513 = vsub.s32 %v3510, %v3512
        %v3514 = vrot.slane %v3492, %v3513
        %v3516 = vunpack.c.l.s4 1966171168
        %v3517 = vunpack.c.0.s8 %v3516
        %v3518 = vlaneseq
        %v3519 = vshrl.u32 %v3518, 7
        %v3520 = vsub.s32 %v3517, %v3519
        %v3521 = vrot.slane %v3493, %v3520
        %v3522 = vcombine.high %v3500, %v3500
        %v3523 = vcombine.high %v3507, %v3507
        %v3524 = vcombine.high %v3514, %v3514
        %v3525 = vcombine.high %v3521, %v3521
        %v3534 = vadd.f32 %v3379, %v3500
        %v3535 = vadd.f32 %v3381, %v3514
        %v3536 = vadd.f32 %v3383, %v3522
        %v3537 = vadd.f32 %v3385, %v3524
        %v3538 = vadd.f32 %v3387, %v3507
        %v3539 = vadd.f32 %v3389, %v3521
        %v3540 = vadd.f32 %v3391, %v3523
        %v3541 = vadd.f32 %v3393, %v3525
        %v3542 = vxor.u32 %v3534, 2147483648
        %v3543 = vxor.u32 %v3535, 2147483648
        %v3544 = vxor.u32 %v3536, 2147483648
        %v3545 = vxor.u32 %v3537, 2147483648
        %v3546 = vxor.u32 %v3538, 2147483648
        %v3547 = vxor.u32 %v3539, 2147483648
        %v3548 = vxor.u32 %v3540, 2147483648
        %v3549 = vxor.u32 %v3541, 2147483648
        %v3550 = vmul.f32 %v3542, 1.442695
        %v3551 = vpow.pop %v3550
        %v3552 = vmul.f32 %v3543, 1.442695
        %v3553 = vpow.pop %v3552
        %v3554 = vmul.f32 %v3544, 1.442695
        %v3555 = vpow.pop %v3554
        %v3556 = vmul.f32 %v3545, 1.442695
        %v3557 = vpow.pop %v3556
        %v3558 = vmul.f32 %v3546, 1.442695
        %v3559 = vpow.pop %v3558
        %v3560 = vmul.f32 %v3547, 1.442695
        %v3561 = vpow.pop %v3560
        %v3562 = vmul.f32 %v3548, 1.442695
        %v3563 = vpow.pop %v3562
        %v3564 = vmul.f32 %v3549, 1.442695
        %v3565 = vpow.pop %v3564
        %v3566 = vadd.f32 %v3551, 1.0
        %v3567 = vadd.f32 %v3553, 1.0
        %v3568 = vadd.f32 %v3555, 1.0
        %v3569 = vadd.f32 %v3557, 1.0
        %v3570 = vadd.f32 %v3559, 1.0
        %v3571 = vadd.f32 %v3561, 1.0
        %v3572 = vadd.f32 %v3563, 1.0
        %v3573 = vadd.f32 %v3565, 1.0
        %v3574 = vrcp.pop %v3566
        %v3575 = vmul.f32 1.0, %v3574
        %v3576 = vrcp.pop %v3567
        %v3577 = vmul.f32 1.0, %v3576
        %v3578 = vrcp.pop %v3568
        %v3579 = vmul.f32 1.0, %v3578
        %v3580 = vrcp.pop %v3569
        %v3581 = vmul.f32 1.0, %v3580
        %v3582 = vrcp.pop %v3570
        %v3583 = vmul.f32 1.0, %v3582
        %v3584 = vrcp.pop %v3571
        %v3585 = vmul.f32 1.0, %v3584
        %v3586 = vrcp.pop %v3572
        %v3587 = vmul.f32 1.0, %v3586
        %v3588 = vrcp.pop %v3573
        %v3589 = vmul.f32 1.0, %v3588
        %v3598 = vrot.slane %v3379, 1
        %v3599 = vrot.slane %v3381, 1
        %v3600 = vrot.slane %v3383, 1
        %v3601 = vrot.slane %v3385, 1
        %v3602 = vrot.slane %v3387, 1
        %v3603 = vrot.slane %v3389, 1
        %v3604 = vrot.slane %v3391, 1
        %v3605 = vrot.slane %v3393, 1
        %v3615 = vcombine.high %v3432, %v3432
        %v3617 = vunpack.c.l.s4 1966171168
        %v3618 = vunpack.c.0.s8 %v3617
        %v3619 = vlaneseq
        %v3620 = vshrl.u32 %v3619, 7
        %v3621 = vsub.s32 %v3618, %v3620
        %v3622 = vrot.slane %v3432, %v3621
        %v3624 = vunpack.c.l.s4 1966171168
        %v3625 = vunpack.c.0.s8 %v3624
        %v3626 = vlaneseq
        %v3627 = vshrl.u32 %v3626, 7
        %v3628 = vsub.s32 %v3625, %v3627
        %v3629 = vrot.slane %v3615, %v3628
        %v3630 = vcombine.high %v3622, %v3622
        %v3631 = vcombine.high %v3629, %v3629
        %v3633 = vunpack.c.l.s4 1966171168
        %v3634 = vunpack.c.0.s8 %v3633
        %v3635 = vlaneseq
        %v3636 = vshrl.u32 %v3635, 7
        %v3637 = vsub.s32 %v3634, %v3636
        %v3638 = vrot.slane %v3622, %v3637
        %v3640 = vunpack.c.l.s4 1966171168
        %v3641 = vunpack.c.0.s8 %v3640
        %v3642 = vlaneseq
        %v3643 = vshrl.u32 %v3642, 7
        %v3644 = vsub.s32 %v3641, %v3643
        %v3645 = vrot.slane %v3629, %v3644
        %v3647 = vunpack.c.l.s4 1966171168
        %v3648 = vunpack.c.0.s8 %v3647
        %v3649 = vlaneseq
        %v3650 = vshrl.u32 %v3649, 7
        %v3651 = vsub.s32 %v3648, %v3650
        %v3652 = vrot.slane %v3630, %v3651
        %v3654 = vunpack.c.l.s4 1966171168
        %v3655 = vunpack.c.0.s8 %v3654
        %v3656 = vlaneseq
        %v3657 = vshrl.u32 %v3656, 7
        %v3658 = vsub.s32 %v3655, %v3657
        %v3659 = vrot.slane %v3631, %v3658
        %v3660 = vcombine.high %v3638, %v3638
        %v3661 = vcombine.high %v3645, %v3645
        %v3662 = vcombine.high %v3652, %v3652
        %v3663 = vcombine.high %v3659, %v3659
        %v3672 = vadd.f32 %v3598, %v3638
        %v3673 = vadd.f32 %v3599, %v3652
        %v3674 = vadd.f32 %v3600, %v3660
        %v3675 = vadd.f32 %v3601, %v3662
        %v3676 = vadd.f32 %v3602, %v3645
        %v3677 = vadd.f32 %v3603, %v3659
        %v3678 = vadd.f32 %v3604, %v3661
        %v3679 = vadd.f32 %v3605, %v3663
        %v3680 = vxor.u32 %v3672, 2147483648
        %v3681 = vxor.u32 %v3673, 2147483648
        %v3682 = vxor.u32 %v3674, 2147483648
        %v3683 = vxor.u32 %v3675, 2147483648
        %v3684 = vxor.u32 %v3676, 2147483648
        %v3685 = vxor.u32 %v3677, 2147483648
        %v3686 = vxor.u32 %v3678, 2147483648
        %v3687 = vxor.u32 %v3679, 2147483648
        %v3688 = vmul.f32 %v3680, 1.442695
        %v3689 = vpow.pop %v3688
        %v3690 = vmul.f32 %v3681, 1.442695
        %v3691 = vpow.pop %v3690
        %v3692 = vmul.f32 %v3682, 1.442695
        %v3693 = vpow.pop %v3692
        %v3694 = vmul.f32 %v3683, 1.442695
        %v3695 = vpow.pop %v3694
        %v3696 = vmul.f32 %v3684, 1.442695
        %v3697 = vpow.pop %v3696
        %v3698 = vmul.f32 %v3685, 1.442695
        %v3699 = vpow.pop %v3698
        %v3700 = vmul.f32 %v3686, 1.442695
        %v3701 = vpow.pop %v3700
        %v3702 = vmul.f32 %v3687, 1.442695
        %v3703 = vpow.pop %v3702
        %v3704 = vadd.f32 %v3689, 1.0
        %v3705 = vadd.f32 %v3691, 1.0
        %v3706 = vadd.f32 %v3693, 1.0
        %v3707 = vadd.f32 %v3695, 1.0
        %v3708 = vadd.f32 %v3697, 1.0
        %v3709 = vadd.f32 %v3699, 1.0
        %v3710 = vadd.f32 %v3701, 1.0
        %v3711 = vadd.f32 %v3703, 1.0
        %v3712 = vrcp.pop %v3704
        %v3713 = vmul.f32 1.0, %v3712
        %v3714 = vrcp.pop %v3705
        %v3715 = vmul.f32 1.0, %v3714
        %v3716 = vrcp.pop %v3706
        %v3717 = vmul.f32 1.0, %v3716
        %v3718 = vrcp.pop %v3707
        %v3719 = vmul.f32 1.0, %v3718
        %v3720 = vrcp.pop %v3708
        %v3721 = vmul.f32 1.0, %v3720
        %v3722 = vrcp.pop %v3709
        %v3723 = vmul.f32 1.0, %v3722
        %v3724 = vrcp.pop %v3710
        %v3725 = vmul.f32 1.0, %v3724
        %v3726 = vrcp.pop %v3711
        %v3727 = vmul.f32 1.0, %v3726
        %v3729 = vcombine.high %v3471, %v3471
        %v3731 = vunpack.c.l.s4 1966171168
        %v3732 = vunpack.c.0.s8 %v3731
        %v3733 = vlaneseq
        %v3734 = vshrl.u32 %v3733, 7
        %v3735 = vsub.s32 %v3732, %v3734
        %v3736 = vrot.slane %v3471, %v3735
        %v3738 = vunpack.c.l.s4 1966171168
        %v3739 = vunpack.c.0.s8 %v3738
        %v3740 = vlaneseq
        %v3741 = vshrl.u32 %v3740, 7
        %v3742 = vsub.s32 %v3739, %v3741
        %v3743 = vrot.slane %v3729, %v3742
        %v3744 = vcombine.high %v3736, %v3736
        %v3745 = vcombine.high %v3743, %v3743
        %v3747 = vunpack.c.l.s4 1966171168
        %v3748 = vunpack.c.0.s8 %v3747
        %v3749 = vlaneseq
        %v3750 = vshrl.u32 %v3749, 7
        %v3751 = vsub.s32 %v3748, %v3750
        %v3752 = vrot.slane %v3736, %v3751
        %v3754 = vunpack.c.l.s4 1966171168
        %v3755 = vunpack.c.0.s8 %v3754
        %v3756 = vlaneseq
        %v3757 = vshrl.u32 %v3756, 7
        %v3758 = vsub.s32 %v3755, %v3757
        %v3759 = vrot.slane %v3743, %v3758
        %v3761 = vunpack.c.l.s4 1966171168
        %v3762 = vunpack.c.0.s8 %v3761
        %v3763 = vlaneseq
        %v3764 = vshrl.u32 %v3763, 7
        %v3765 = vsub.s32 %v3762, %v3764
        %v3766 = vrot.slane %v3744, %v3765
        %v3768 = vunpack.c.l.s4 1966171168
        %v3769 = vunpack.c.0.s8 %v3768
        %v3770 = vlaneseq
        %v3771 = vshrl.u32 %v3770, 7
        %v3772 = vsub.s32 %v3769, %v3771
        %v3773 = vrot.slane %v3745, %v3772
        %v3774 = vcombine.high %v3752, %v3752
        %v3775 = vcombine.high %v3759, %v3759
        %v3776 = vcombine.high %v3766, %v3766
        %v3777 = vcombine.high %v3773, %v3773
        %v3786 = vmul.f32 %v3575, %v3752
        %v3787 = vmul.f32 %v3577, %v3766
        %v3788 = vmul.f32 %v3579, %v3774
        %v3789 = vmul.f32 %v3581, %v3776
        %v3790 = vmul.f32 %v3583, %v3759
        %v3791 = vmul.f32 %v3585, %v3773
        %v3792 = vmul.f32 %v3587, %v3775
        %v3793 = vmul.f32 %v3589, %v3777
        %v3794 = vrot.slane %v3379, 2
        %v3795 = vrot.slane %v3381, 2
        %v3796 = vrot.slane %v3383, 2
        %v3797 = vrot.slane %v3385, 2
        %v3798 = vrot.slane %v3387, 2
        %v3799 = vrot.slane %v3389, 2
        %v3800 = vrot.slane %v3391, 2
        %v3801 = vrot.slane %v3393, 2
        %v3810 = vadd.f32 %v3794, %v3786
        %v3811 = vadd.f32 %v3795, %v3787
        %v3812 = vadd.f32 %v3796, %v3788
        %v3813 = vadd.f32 %v3797, %v3789
        %v3814 = vadd.f32 %v3798, %v3790
        %v3815 = vadd.f32 %v3799, %v3791
        %v3816 = vadd.f32 %v3800, %v3792
        %v3817 = vadd.f32 %v3801, %v3793
        %v3818 = vtanh.pop %v3810
        %v3819 = vtanh.pop %v3811
        %v3820 = vtanh.pop %v3812
        %v3821 = vtanh.pop %v3813
        %v3822 = vtanh.pop %v3814
        %v3823 = vtanh.pop %v3815
        %v3824 = vtanh.pop %v3816
        %v3825 = vtanh.pop %v3817
        %v3834 = vcombine.low %v3818, %v3819
        %v3835 = vcombine.low %v3820, %v3821
        %v3836 = vcombine.low %v3822, %v3823
        %v3837 = vcombine.low %v3824, %v3825
        %v3839 = vunpack.c.l.s4 1966171168
        %v3840 = vunpack.c.0.s8 %v3839
        %v3841 = vlaneseq
        %v3842 = vshrl.u32 %v3841, 7
        %v3843 = vsub.s32 %v3840, %v3842
        %v3844 = vrot.slane %v3834, %v3843
        %v3846 = vunpack.c.l.s4 1966171168
        %v3847 = vunpack.c.0.s8 %v3846
        %v3848 = vlaneseq
        %v3849 = vshrl.u32 %v3848, 7
        %v3850 = vsub.s32 %v3847, %v3849
        %v3851 = vrot.slane %v3835, %v3850
        %v3853 = vunpack.c.l.s4 1966171168
        %v3854 = vunpack.c.0.s8 %v3853
        %v3855 = vlaneseq
        %v3856 = vshrl.u32 %v3855, 7
        %v3857 = vsub.s32 %v3854, %v3856
        %v3858 = vrot.slane %v3836, %v3857
        %v3860 = vunpack.c.l.s4 1966171168
        %v3861 = vunpack.c.0.s8 %v3860
        %v3862 = vlaneseq
        %v3863 = vshrl.u32 %v3862, 7
        %v3864 = vsub.s32 %v3861, %v3863
        %v3865 = vrot.slane %v3837, %v3864
        %v3866 = vcombine.low %v3844, %v3851
        %v3867 = vcombine.low %v3858, %v3865
        %v3869 = vunpack.c.l.s4 1966171168
        %v3870 = vunpack.c.0.s8 %v3869
        %v3871 = vlaneseq
        %v3872 = vshrl.u32 %v3871, 7
        %v3873 = vsub.s32 %v3870, %v3872
        %v3874 = vrot.slane %v3866, %v3873
        %v3876 = vunpack.c.l.s4 1966171168
        %v3877 = vunpack.c.0.s8 %v3876
        %v3878 = vlaneseq
        %v3879 = vshrl.u32 %v3878, 7
        %v3880 = vsub.s32 %v3877, %v3879
        %v3881 = vrot.slane %v3867, %v3880
        %v3882 = vcombine.low %v3874, %v3881
        %v3884 = vsub.f32 %v3310, %v3882
        %v3886 = vcombine.high %v3884, %v3884
        %v3888 = vunpack.c.l.s4 1966171168
        %v3889 = vunpack.c.0.s8 %v3888
        %v3890 = vlaneseq
        %v3891 = vshrl.u32 %v3890, 7
        %v3892 = vsub.s32 %v3889, %v3891
        %v3893 = vrot.slane %v3884, %v3892
        %v3895 = vunpack.c.l.s4 1966171168
        %v3896 = vunpack.c.0.s8 %v3895
        %v3897 = vlaneseq
        %v3898 = vshrl.u32 %v3897, 7
        %v3899 = vsub.s32 %v3896, %v3898
        %v3900 = vrot.slane %v3886, %v3899
        %v3901 = vcombine.high %v3893, %v3893
        %v3902 = vcombine.high %v3900, %v3900
        %v3904 = vunpack.c.l.s4 1966171168
        %v3905 = vunpack.c.0.s8 %v3904
        %v3906 = vlaneseq
        %v3907 = vshrl.u32 %v3906, 7
        %v3908 = vsub.s32 %v3905, %v3907
        %v3909 = vrot.slane %v3893, %v3908
        %v3911 = vunpack.c.l.s4 1966171168
        %v3912 = vunpack.c.0.s8 %v3911
        %v3913 = vlaneseq
        %v3914 = vshrl.u32 %v3913, 7
        %v3915 = vsub.s32 %v3912, %v3914
        %v3916 = vrot.slane %v3900, %v3915
        %v3918 = vunpack.c.l.s4 1966171168
        %v3919 = vunpack.c.0.s8 %v3918
        %v3920 = vlaneseq
        %v3921 = vshrl.u32 %v3920, 7
        %v3922 = vsub.s32 %v3919, %v3921
        %v3923 = vrot.slane %v3901, %v3922
        %v3925 = vunpack.c.l.s4 1966171168
        %v3926 = vunpack.c.0.s8 %v3925
        %v3927 = vlaneseq
        %v3928 = vshrl.u32 %v3927, 7
        %v3929 = vsub.s32 %v3926, %v3928
        %v3930 = vrot.slane %v3902, %v3929
        %v3931 = vcombine.high %v3909, %v3909
        %v3932 = vcombine.high %v3916, %v3916
        %v3933 = vcombine.high %v3923, %v3923
        %v3934 = vcombine.high %v3930, %v3930
        %v3943 = vmul.f32 %v3713, %v3909
        %v3944 = vmul.f32 %v3715, %v3923
        %v3945 = vmul.f32 %v3717, %v3931
        %v3946 = vmul.f32 %v3719, %v3933
        %v3947 = vmul.f32 %v3721, %v3916
        %v3948 = vmul.f32 %v3723, %v3930
        %v3949 = vmul.f32 %v3725, %v3932
        %v3950 = vmul.f32 %v3727, %v3934
        %v3951 = vadd.f32 %v3818, %v3943
        %v3952 = vadd.f32 %v3819, %v3944
        %v3953 = vadd.f32 %v3820, %v3945
        %v3954 = vadd.f32 %v3821, %v3946
        %v3955 = vadd.f32 %v3822, %v3947
        %v3956 = vadd.f32 %v3823, %v3948
        %v3957 = vadd.f32 %v3824, %v3949
        %v3958 = vadd.f32 %v3825, %v3950
        %s3959 = sadd.s32 %s390, 4
        %v3960 = vstv %s3959
        %vm3961 = vcmp.lt.s32.totalorder %v3960, %v340
        %v3962 = vsel %vm3961, 1, 0
        %3963 = vset.pattern.permute.xlu0 0
        %3964 = vperm.xlu0 %3963, %v3962
        %v3965 = vpop.permute.xlu0 %3964
        %vm3966 = vcmp.eq.s32.totalorder %v3965, 1
        %v3975 = vcombine.low %v3951, %v3952
        %v3976 = vcombine.low %v3953, %v3954
        %v3977 = vcombine.low %v3955, %v3956
        %v3978 = vcombine.low %v3957, %v3958
        %v3980 = vunpack.c.l.s4 1966171168
        %v3981 = vunpack.c.0.s8 %v3980
        %v3982 = vlaneseq
        %v3983 = vshrl.u32 %v3982, 7
        %v3984 = vsub.s32 %v3981, %v3983
        %v3985 = vrot.slane %v3975, %v3984
        %v3987 = vunpack.c.l.s4 1966171168
        %v3988 = vunpack.c.0.s8 %v3987
        %v3989 = vlaneseq
        %v3990 = vshrl.u32 %v3989, 7
        %v3991 = vsub.s32 %v3988, %v3990
        %v3992 = vrot.slane %v3976, %v3991
        %v3994 = vunpack.c.l.s4 1966171168
        %v3995 = vunpack.c.0.s8 %v3994
        %v3996 = vlaneseq
        %v3997 = vshrl.u32 %v3996, 7
        %v3998 = vsub.s32 %v3995, %v3997
        %v3999 = vrot.slane %v3977, %v3998
        %v4001 = vunpack.c.l.s4 1966171168
        %v4002 = vunpack.c.0.s8 %v4001
        %v4003 = vlaneseq
        %v4004 = vshrl.u32 %v4003, 7
        %v4005 = vsub.s32 %v4002, %v4004
        %v4006 = vrot.slane %v3978, %v4005
        %v4007 = vcombine.low %v3985, %v3992
        %v4008 = vcombine.low %v3999, %v4006
        %v4010 = vunpack.c.l.s4 1966171168
        %v4011 = vunpack.c.0.s8 %v4010
        %v4012 = vlaneseq
        %v4013 = vshrl.u32 %v4012, 7
        %v4014 = vsub.s32 %v4011, %v4013
        %v4015 = vrot.slane %v4007, %v4014
        %v4017 = vunpack.c.l.s4 1966171168
        %v4018 = vunpack.c.0.s8 %v4017
        %v4019 = vlaneseq
        %v4020 = vshrl.u32 %v4019, 7
        %v4021 = vsub.s32 %v4018, %v4020
        %v4022 = vrot.slane %v4008, %v4021
        %v4023 = vcombine.low %v4015, %v4022
        %v4025 = vsel %vm3966, %v4023, %v3310
        %v4026 = vsel %vm3966, %v4023, 0.0
        %v4028 = vcombine.high %v4026, %v4026
        %v4030 = vunpack.c.l.s4 1966171168
        %v4031 = vunpack.c.0.s8 %v4030
        %v4032 = vlaneseq
        %v4033 = vshrl.u32 %v4032, 7
        %v4034 = vsub.s32 %v4031, %v4033
        %v4035 = vrot.slane %v4026, %v4034
        %v4037 = vunpack.c.l.s4 1966171168
        %v4038 = vunpack.c.0.s8 %v4037
        %v4039 = vlaneseq
        %v4040 = vshrl.u32 %v4039, 7
        %v4041 = vsub.s32 %v4038, %v4040
        %v4042 = vrot.slane %v4028, %v4041
        %v4043 = vcombine.high %v4035, %v4035
        %v4044 = vcombine.high %v4042, %v4042
        %v4046 = vunpack.c.l.s4 1966171168
        %v4047 = vunpack.c.0.s8 %v4046
        %v4048 = vlaneseq
        %v4049 = vshrl.u32 %v4048, 7
        %v4050 = vsub.s32 %v4047, %v4049
        %v4051 = vrot.slane %v4035, %v4050
        %v4053 = vunpack.c.l.s4 1966171168
        %v4054 = vunpack.c.0.s8 %v4053
        %v4055 = vlaneseq
        %v4056 = vshrl.u32 %v4055, 7
        %v4057 = vsub.s32 %v4054, %v4056
        %v4058 = vrot.slane %v4042, %v4057
        %v4060 = vunpack.c.l.s4 1966171168
        %v4061 = vunpack.c.0.s8 %v4060
        %v4062 = vlaneseq
        %v4063 = vshrl.u32 %v4062, 7
        %v4064 = vsub.s32 %v4061, %v4063
        %v4065 = vrot.slane %v4043, %v4064
        %v4067 = vunpack.c.l.s4 1966171168
        %v4068 = vunpack.c.0.s8 %v4067
        %v4069 = vlaneseq
        %v4070 = vshrl.u32 %v4069, 7
        %v4071 = vsub.s32 %v4068, %v4070
        %v4072 = vrot.slane %v4044, %v4071
        %v4073 = vcombine.high %v4051, %v4051
        %v4074 = vcombine.high %v4058, %v4058
        %v4075 = vcombine.high %v4065, %v4065
        %v4076 = vcombine.high %v4072, %v4072
        %4085 = vst [vmem:[%s317 + $0x4] sm:$0x1] %v4051
        %4086 = vst [vmem:[%s317 + $0xc] sm:$0x1] %v4065
        %4087 = vst [vmem:[%s317 + $0x14] sm:$0x1] %v4073
        %4088 = vst [vmem:[%s317 + $0x1c] sm:$0x1] %v4075
        %4089 = vst [vmem:[%s317 + $0x24] sm:$0x1] %v4058
        %4090 = vst [vmem:[%s317 + $0x2c] sm:$0x1] %v4072
        %4091 = vst [vmem:[%s317 + $0x34] sm:$0x1] %v4074
        %4092 = vst [vmem:[%s317 + $0x3c] sm:$0x1] %v4076
        %s4093 = scalar_lea.vmem %s292, 5 [#allocation3]
        %v4094 = vld [vmem:[%s4093] ss:$8 sm:$0x7]
        %s4095 = scalar_lea.vmem %s292, 29 [#allocation3]
        %v4096 = vld [vmem:[%s4095] ss:$8 sm:$0x7]
        %s4097 = scalar_lea.vmem %s292, 53 [#allocation3]
        %v4098 = vld [vmem:[%s4097] ss:$8 sm:$0x7]
        %s4099 = scalar_lea.vmem %s292, 77 [#allocation3]
        %v4100 = vld [vmem:[%s4099] ss:$8 sm:$0x7]
        %s4101 = scalar_lea.vmem %s292, 101 [#allocation3]
        %v4102 = vld [vmem:[%s4101] ss:$8 sm:$0x7]
        %s4103 = scalar_lea.vmem %s292, 125 [#allocation3]
        %v4104 = vld [vmem:[%s4103] ss:$8 sm:$0x7]
        %s4105 = scalar_lea.vmem %s292, 149 [#allocation3]
        %v4106 = vld [vmem:[%s4105] ss:$8 sm:$0x7]
        %s4107 = scalar_lea.vmem %s292, 173 [#allocation3]
        %v4108 = vld [vmem:[%s4107] ss:$8 sm:$0x7]
        %v4109 = vpack.c.bf16 %v4025, %v4025
        %4110 = vmatprep.subr.bf16.mxu0 %v489
        %4111 = vmatpush1.bf16.msra.mxu0 %v488
        %4112 = vmatprep.subr.bf16.mxu0 %v492
        %4113 = vmatpush1.bf16.msra.mxu0 %v491
        %4114 = vmatprep.subr.bf16.mxu0 %v495
        %4115 = vmatpush1.bf16.msra.mxu0 %v494
        %4116 = vmatprep.subr.bf16.mxu0 %v498
        %4117 = vmatpush1.bf16.msra.mxu0 %v497
        %4118 = vmatprep.subr.bf16.mxu0 %v501
        %4119 = vmatpush1.bf16.msra.mxu0 %v500
        %4120 = vmatprep.subr.bf16.mxu0 %v504
        %4121 = vmatpush1.bf16.msra.mxu0 %v503
        %4122 = vmatprep.subr.bf16.mxu0 %v507
        %4123 = vmatpush1.bf16.msra.mxu0 %v506
        %4124 = vmatprep.subr.bf16.mxu0 %v510
        %4125 = vmatpush1.bf16.msra.mxu0 %v509
        %4126 = vmatprep.subr.bf16.mxu0 0
        %4127 = vmatpush1.bf16.msra.mxu0 0
        %4128 = vmatprep.subr.bf16.mxu0 0
        %4129 = vmatpush1.bf16.msra.mxu0 0
        %4130 = vmatprep.subr.bf16.mxu0 0
        %4131 = vmatpush1.bf16.msra.mxu0 0
        %4132 = vmatprep.subr.bf16.mxu0 0
        %4133 = vmatpush1.bf16.msra.mxu0 0
        %4134 = vmatprep.subr.bf16.mxu0 0
        %4135 = vmatpush1.bf16.msra.mxu0 0
        %4136 = vmatprep.subr.bf16.mxu0 0
        %4137 = vmatpush1.bf16.msra.mxu0 0
        %4138 = vmatprep.subr.bf16.mxu0 0
        %4139 = vmatpush1.bf16.msra.mxu0 0
        %4140 = vmatprep.subr.bf16.mxu0 0
        %4141 = vmatpush1.bf16.msra.mxu0 0
        %4142 = vmatprep.mubr.bf16.mxu0 0
        %4143 = vmatmul.mubr.bf16.gmra.mrb[0].mxu0 %v4109
        %v4144 = vpop.f32.mrb[0].mxu0
        %v4145 = vadd.f32 %v378, %v4144
        %v4146 = vpop.f32.mrb[0].mxu0
        %v4147 = vadd.f32 %v382, %v4146
        %v4148 = vpop.f32.mrb[0].mxu0
        %v4149 = vpop.f32.mrb[0].mxu0
        %4150 = vdwg.mxu0
        %4151 = vmatprep.subr.bf16.mxu0 0
        %4152 = vmatpush1.bf16.msra.mxu0 %v490
        %4153 = vmatprep.subr.bf16.mxu0 0
        %4154 = vmatpush1.bf16.msra.mxu0 %v493
        %4155 = vmatprep.subr.bf16.mxu0 0
        %4156 = vmatpush1.bf16.msra.mxu0 %v496
        %4157 = vmatprep.subr.bf16.mxu0 0
        %4158 = vmatpush1.bf16.msra.mxu0 %v499
        %4159 = vmatprep.subr.bf16.mxu0 0
        %4160 = vmatpush1.bf16.msra.mxu0 %v502
        %4161 = vmatprep.subr.bf16.mxu0 0
        %4162 = vmatpush1.bf16.msra.mxu0 %v505
        %4163 = vmatprep.subr.bf16.mxu0 0
        %4164 = vmatpush1.bf16.msra.mxu0 %v508
        %4165 = vmatprep.subr.bf16.mxu0 0
        %4166 = vmatpush1.bf16.msra.mxu0 %v511
        %4167 = vmatprep.subr.bf16.mxu0 0
        %4168 = vmatpush1.bf16.msra.mxu0 0
        %4169 = vmatprep.subr.bf16.mxu0 0
        %4170 = vmatpush1.bf16.msra.mxu0 0
        %4171 = vmatprep.subr.bf16.mxu0 0
        %4172 = vmatpush1.bf16.msra.mxu0 0
        %4173 = vmatprep.subr.bf16.mxu0 0
        %4174 = vmatpush1.bf16.msra.mxu0 0
        %4175 = vmatprep.subr.bf16.mxu0 0
        %4176 = vmatpush1.bf16.msra.mxu0 0
        %4177 = vmatprep.subr.bf16.mxu0 0
        %4178 = vmatpush1.bf16.msra.mxu0 0
        %4179 = vmatprep.subr.bf16.mxu0 0
        %4180 = vmatpush1.bf16.msra.mxu0 0
        %4181 = vmatprep.subr.bf16.mxu0 0
        %4182 = vmatpush1.bf16.msra.mxu0 0
        %4183 = vmatprep.mubr.bf16.mxu0 0
        %4184 = vmatmul.mubr.bf16.gmra.mrb[0].mxu0 %v4109
        %v4185 = vpop.f32.mrb[0].mxu0
        %v4186 = vadd.f32 %v386, %v4185
        %v4187 = vpop.f32.mrb[0].mxu0
        %v4188 = vpop.f32.mrb[0].mxu0
        %v4189 = vpop.f32.mrb[0].mxu0
        %4190 = vdwg.mxu0
        %v4192 = vcombine.high %v4145, %v4145
        %v4194 = vunpack.c.l.s4 1966171168
        %v4195 = vunpack.c.0.s8 %v4194
        %v4196 = vlaneseq
        %v4197 = vshrl.u32 %v4196, 7
        %v4198 = vsub.s32 %v4195, %v4197
        %v4199 = vrot.slane %v4145, %v4198
        %v4201 = vunpack.c.l.s4 1966171168
        %v4202 = vunpack.c.0.s8 %v4201
        %v4203 = vlaneseq
        %v4204 = vshrl.u32 %v4203, 7
        %v4205 = vsub.s32 %v4202, %v4204
        %v4206 = vrot.slane %v4192, %v4205
        %v4207 = vcombine.high %v4199, %v4199
        %v4208 = vcombine.high %v4206, %v4206
        %v4210 = vunpack.c.l.s4 1966171168
        %v4211 = vunpack.c.0.s8 %v4210
        %v4212 = vlaneseq
        %v4213 = vshrl.u32 %v4212, 7
        %v4214 = vsub.s32 %v4211, %v4213
        %v4215 = vrot.slane %v4199, %v4214
        %v4217 = vunpack.c.l.s4 1966171168
        %v4218 = vunpack.c.0.s8 %v4217
        %v4219 = vlaneseq
        %v4220 = vshrl.u32 %v4219, 7
        %v4221 = vsub.s32 %v4218, %v4220
        %v4222 = vrot.slane %v4206, %v4221
        %v4224 = vunpack.c.l.s4 1966171168
        %v4225 = vunpack.c.0.s8 %v4224
        %v4226 = vlaneseq
        %v4227 = vshrl.u32 %v4226, 7
        %v4228 = vsub.s32 %v4225, %v4227
        %v4229 = vrot.slane %v4207, %v4228
        %v4231 = vunpack.c.l.s4 1966171168
        %v4232 = vunpack.c.0.s8 %v4231
        %v4233 = vlaneseq
        %v4234 = vshrl.u32 %v4233, 7
        %v4235 = vsub.s32 %v4232, %v4234
        %v4236 = vrot.slane %v4208, %v4235
        %v4237 = vcombine.high %v4215, %v4215
        %v4238 = vcombine.high %v4222, %v4222
        %v4239 = vcombine.high %v4229, %v4229
        %v4240 = vcombine.high %v4236, %v4236
        %v4249 = vadd.f32 %v4094, %v4215
        %v4250 = vadd.f32 %v4096, %v4229
        %v4251 = vadd.f32 %v4098, %v4237
        %v4252 = vadd.f32 %v4100, %v4239
        %v4253 = vadd.f32 %v4102, %v4222
        %v4254 = vadd.f32 %v4104, %v4236
        %v4255 = vadd.f32 %v4106, %v4238
        %v4256 = vadd.f32 %v4108, %v4240
        %v4257 = vxor.u32 %v4249, 2147483648
        %v4258 = vxor.u32 %v4250, 2147483648
        %v4259 = vxor.u32 %v4251, 2147483648
        %v4260 = vxor.u32 %v4252, 2147483648
        %v4261 = vxor.u32 %v4253, 2147483648
        %v4262 = vxor.u32 %v4254, 2147483648
        %v4263 = vxor.u32 %v4255, 2147483648
        %v4264 = vxor.u32 %v4256, 2147483648
        %v4265 = vmul.f32 %v4257, 1.442695
        %v4266 = vpow.pop %v4265
        %v4267 = vmul.f32 %v4258, 1.442695
        %v4268 = vpow.pop %v4267
        %v4269 = vmul.f32 %v4259, 1.442695
        %v4270 = vpow.pop %v4269
        %v4271 = vmul.f32 %v4260, 1.442695
        %v4272 = vpow.pop %v4271
        %v4273 = vmul.f32 %v4261, 1.442695
        %v4274 = vpow.pop %v4273
        %v4275 = vmul.f32 %v4262, 1.442695
        %v4276 = vpow.pop %v4275
        %v4277 = vmul.f32 %v4263, 1.442695
        %v4278 = vpow.pop %v4277
        %v4279 = vmul.f32 %v4264, 1.442695
        %v4280 = vpow.pop %v4279
        %v4281 = vadd.f32 %v4266, 1.0
        %v4282 = vadd.f32 %v4268, 1.0
        %v4283 = vadd.f32 %v4270, 1.0
        %v4284 = vadd.f32 %v4272, 1.0
        %v4285 = vadd.f32 %v4274, 1.0
        %v4286 = vadd.f32 %v4276, 1.0
        %v4287 = vadd.f32 %v4278, 1.0
        %v4288 = vadd.f32 %v4280, 1.0
        %v4289 = vrcp.pop %v4281
        %v4290 = vmul.f32 1.0, %v4289
        %v4291 = vrcp.pop %v4282
        %v4292 = vmul.f32 1.0, %v4291
        %v4293 = vrcp.pop %v4283
        %v4294 = vmul.f32 1.0, %v4293
        %v4295 = vrcp.pop %v4284
        %v4296 = vmul.f32 1.0, %v4295
        %v4297 = vrcp.pop %v4285
        %v4298 = vmul.f32 1.0, %v4297
        %v4299 = vrcp.pop %v4286
        %v4300 = vmul.f32 1.0, %v4299
        %v4301 = vrcp.pop %v4287
        %v4302 = vmul.f32 1.0, %v4301
        %v4303 = vrcp.pop %v4288
        %v4304 = vmul.f32 1.0, %v4303
        %v4313 = vrot.slane %v4094, 1
        %v4314 = vrot.slane %v4096, 1
        %v4315 = vrot.slane %v4098, 1
        %v4316 = vrot.slane %v4100, 1
        %v4317 = vrot.slane %v4102, 1
        %v4318 = vrot.slane %v4104, 1
        %v4319 = vrot.slane %v4106, 1
        %v4320 = vrot.slane %v4108, 1
        %v4330 = vcombine.high %v4147, %v4147
        %v4332 = vunpack.c.l.s4 1966171168
        %v4333 = vunpack.c.0.s8 %v4332
        %v4334 = vlaneseq
        %v4335 = vshrl.u32 %v4334, 7
        %v4336 = vsub.s32 %v4333, %v4335
        %v4337 = vrot.slane %v4147, %v4336
        %v4339 = vunpack.c.l.s4 1966171168
        %v4340 = vunpack.c.0.s8 %v4339
        %v4341 = vlaneseq
        %v4342 = vshrl.u32 %v4341, 7
        %v4343 = vsub.s32 %v4340, %v4342
        %v4344 = vrot.slane %v4330, %v4343
        %v4345 = vcombine.high %v4337, %v4337
        %v4346 = vcombine.high %v4344, %v4344
        %v4348 = vunpack.c.l.s4 1966171168
        %v4349 = vunpack.c.0.s8 %v4348
        %v4350 = vlaneseq
        %v4351 = vshrl.u32 %v4350, 7
        %v4352 = vsub.s32 %v4349, %v4351
        %v4353 = vrot.slane %v4337, %v4352
        %v4355 = vunpack.c.l.s4 1966171168
        %v4356 = vunpack.c.0.s8 %v4355
        %v4357 = vlaneseq
        %v4358 = vshrl.u32 %v4357, 7
        %v4359 = vsub.s32 %v4356, %v4358
        %v4360 = vrot.slane %v4344, %v4359
        %v4362 = vunpack.c.l.s4 1966171168
        %v4363 = vunpack.c.0.s8 %v4362
        %v4364 = vlaneseq
        %v4365 = vshrl.u32 %v4364, 7
        %v4366 = vsub.s32 %v4363, %v4365
        %v4367 = vrot.slane %v4345, %v4366
        %v4369 = vunpack.c.l.s4 1966171168
        %v4370 = vunpack.c.0.s8 %v4369
        %v4371 = vlaneseq
        %v4372 = vshrl.u32 %v4371, 7
        %v4373 = vsub.s32 %v4370, %v4372
        %v4374 = vrot.slane %v4346, %v4373
        %v4375 = vcombine.high %v4353, %v4353
        %v4376 = vcombine.high %v4360, %v4360
        %v4377 = vcombine.high %v4367, %v4367
        %v4378 = vcombine.high %v4374, %v4374
        %v4387 = vadd.f32 %v4313, %v4353
        %v4388 = vadd.f32 %v4314, %v4367
        %v4389 = vadd.f32 %v4315, %v4375
        %v4390 = vadd.f32 %v4316, %v4377
        %v4391 = vadd.f32 %v4317, %v4360
        %v4392 = vadd.f32 %v4318, %v4374
        %v4393 = vadd.f32 %v4319, %v4376
        %v4394 = vadd.f32 %v4320, %v4378
        %v4395 = vxor.u32 %v4387, 2147483648
        %v4396 = vxor.u32 %v4388, 2147483648
        %v4397 = vxor.u32 %v4389, 2147483648
        %v4398 = vxor.u32 %v4390, 2147483648
        %v4399 = vxor.u32 %v4391, 2147483648
        %v4400 = vxor.u32 %v4392, 2147483648
        %v4401 = vxor.u32 %v4393, 2147483648
        %v4402 = vxor.u32 %v4394, 2147483648
        %v4403 = vmul.f32 %v4395, 1.442695
        %v4404 = vpow.pop %v4403
        %v4405 = vmul.f32 %v4396, 1.442695
        %v4406 = vpow.pop %v4405
        %v4407 = vmul.f32 %v4397, 1.442695
        %v4408 = vpow.pop %v4407
        %v4409 = vmul.f32 %v4398, 1.442695
        %v4410 = vpow.pop %v4409
        %v4411 = vmul.f32 %v4399, 1.442695
        %v4412 = vpow.pop %v4411
        %v4413 = vmul.f32 %v4400, 1.442695
        %v4414 = vpow.pop %v4413
        %v4415 = vmul.f32 %v4401, 1.442695
        %v4416 = vpow.pop %v4415
        %v4417 = vmul.f32 %v4402, 1.442695
        %v4418 = vpow.pop %v4417
        %v4419 = vadd.f32 %v4404, 1.0
        %v4420 = vadd.f32 %v4406, 1.0
        %v4421 = vadd.f32 %v4408, 1.0
        %v4422 = vadd.f32 %v4410, 1.0
        %v4423 = vadd.f32 %v4412, 1.0
        %v4424 = vadd.f32 %v4414, 1.0
        %v4425 = vadd.f32 %v4416, 1.0
        %v4426 = vadd.f32 %v4418, 1.0
        %v4427 = vrcp.pop %v4419
        %v4428 = vmul.f32 1.0, %v4427
        %v4429 = vrcp.pop %v4420
        %v4430 = vmul.f32 1.0, %v4429
        %v4431 = vrcp.pop %v4421
        %v4432 = vmul.f32 1.0, %v4431
        %v4433 = vrcp.pop %v4422
        %v4434 = vmul.f32 1.0, %v4433
        %v4435 = vrcp.pop %v4423
        %v4436 = vmul.f32 1.0, %v4435
        %v4437 = vrcp.pop %v4424
        %v4438 = vmul.f32 1.0, %v4437
        %v4439 = vrcp.pop %v4425
        %v4440 = vmul.f32 1.0, %v4439
        %v4441 = vrcp.pop %v4426
        %v4442 = vmul.f32 1.0, %v4441
        %v4444 = vcombine.high %v4186, %v4186
        %v4446 = vunpack.c.l.s4 1966171168
        %v4447 = vunpack.c.0.s8 %v4446
        %v4448 = vlaneseq
        %v4449 = vshrl.u32 %v4448, 7
        %v4450 = vsub.s32 %v4447, %v4449
        %v4451 = vrot.slane %v4186, %v4450
        %v4453 = vunpack.c.l.s4 1966171168
        %v4454 = vunpack.c.0.s8 %v4453
        %v4455 = vlaneseq
        %v4456 = vshrl.u32 %v4455, 7
        %v4457 = vsub.s32 %v4454, %v4456
        %v4458 = vrot.slane %v4444, %v4457
        %v4459 = vcombine.high %v4451, %v4451
        %v4460 = vcombine.high %v4458, %v4458
        %v4462 = vunpack.c.l.s4 1966171168
        %v4463 = vunpack.c.0.s8 %v4462
        %v4464 = vlaneseq
        %v4465 = vshrl.u32 %v4464, 7
        %v4466 = vsub.s32 %v4463, %v4465
        %v4467 = vrot.slane %v4451, %v4466
        %v4469 = vunpack.c.l.s4 1966171168
        %v4470 = vunpack.c.0.s8 %v4469
        %v4471 = vlaneseq
        %v4472 = vshrl.u32 %v4471, 7
        %v4473 = vsub.s32 %v4470, %v4472
        %v4474 = vrot.slane %v4458, %v4473
        %v4476 = vunpack.c.l.s4 1966171168
        %v4477 = vunpack.c.0.s8 %v4476
        %v4478 = vlaneseq
        %v4479 = vshrl.u32 %v4478, 7
        %v4480 = vsub.s32 %v4477, %v4479
        %v4481 = vrot.slane %v4459, %v4480
        %v4483 = vunpack.c.l.s4 1966171168
        %v4484 = vunpack.c.0.s8 %v4483
        %v4485 = vlaneseq
        %v4486 = vshrl.u32 %v4485, 7
        %v4487 = vsub.s32 %v4484, %v4486
        %v4488 = vrot.slane %v4460, %v4487
        %v4489 = vcombine.high %v4467, %v4467
        %v4490 = vcombine.high %v4474, %v4474
        %v4491 = vcombine.high %v4481, %v4481
        %v4492 = vcombine.high %v4488, %v4488
        %v4501 = vmul.f32 %v4290, %v4467
        %v4502 = vmul.f32 %v4292, %v4481
        %v4503 = vmul.f32 %v4294, %v4489
        %v4504 = vmul.f32 %v4296, %v4491
        %v4505 = vmul.f32 %v4298, %v4474
        %v4506 = vmul.f32 %v4300, %v4488
        %v4507 = vmul.f32 %v4302, %v4490
        %v4508 = vmul.f32 %v4304, %v4492
        %v4509 = vrot.slane %v4094, 2
        %v4510 = vrot.slane %v4096, 2
        %v4511 = vrot.slane %v4098, 2
        %v4512 = vrot.slane %v4100, 2
        %v4513 = vrot.slane %v4102, 2
        %v4514 = vrot.slane %v4104, 2
        %v4515 = vrot.slane %v4106, 2
        %v4516 = vrot.slane %v4108, 2
        %v4525 = vadd.f32 %v4509, %v4501
        %v4526 = vadd.f32 %v4510, %v4502
        %v4527 = vadd.f32 %v4511, %v4503
        %v4528 = vadd.f32 %v4512, %v4504
        %v4529 = vadd.f32 %v4513, %v4505
        %v4530 = vadd.f32 %v4514, %v4506
        %v4531 = vadd.f32 %v4515, %v4507
        %v4532 = vadd.f32 %v4516, %v4508
        %v4533 = vtanh.pop %v4525
        %v4534 = vtanh.pop %v4526
        %v4535 = vtanh.pop %v4527
        %v4536 = vtanh.pop %v4528
        %v4537 = vtanh.pop %v4529
        %v4538 = vtanh.pop %v4530
        %v4539 = vtanh.pop %v4531
        %v4540 = vtanh.pop %v4532
        %v4549 = vcombine.low %v4533, %v4534
        %v4550 = vcombine.low %v4535, %v4536
        %v4551 = vcombine.low %v4537, %v4538
        %v4552 = vcombine.low %v4539, %v4540
        %v4554 = vunpack.c.l.s4 1966171168
        %v4555 = vunpack.c.0.s8 %v4554
        %v4556 = vlaneseq
        %v4557 = vshrl.u32 %v4556, 7
        %v4558 = vsub.s32 %v4555, %v4557
        %v4559 = vrot.slane %v4549, %v4558
        %v4561 = vunpack.c.l.s4 1966171168
        %v4562 = vunpack.c.0.s8 %v4561
        %v4563 = vlaneseq
        %v4564 = vshrl.u32 %v4563, 7
        %v4565 = vsub.s32 %v4562, %v4564
        %v4566 = vrot.slane %v4550, %v4565
        %v4568 = vunpack.c.l.s4 1966171168
        %v4569 = vunpack.c.0.s8 %v4568
        %v4570 = vlaneseq
        %v4571 = vshrl.u32 %v4570, 7
        %v4572 = vsub.s32 %v4569, %v4571
        %v4573 = vrot.slane %v4551, %v4572
        %v4575 = vunpack.c.l.s4 1966171168
        %v4576 = vunpack.c.0.s8 %v4575
        %v4577 = vlaneseq
        %v4578 = vshrl.u32 %v4577, 7
        %v4579 = vsub.s32 %v4576, %v4578
        %v4580 = vrot.slane %v4552, %v4579
        %v4581 = vcombine.low %v4559, %v4566
        %v4582 = vcombine.low %v4573, %v4580
        %v4584 = vunpack.c.l.s4 1966171168
        %v4585 = vunpack.c.0.s8 %v4584
        %v4586 = vlaneseq
        %v4587 = vshrl.u32 %v4586, 7
        %v4588 = vsub.s32 %v4585, %v4587
        %v4589 = vrot.slane %v4581, %v4588
        %v4591 = vunpack.c.l.s4 1966171168
        %v4592 = vunpack.c.0.s8 %v4591
        %v4593 = vlaneseq
        %v4594 = vshrl.u32 %v4593, 7
        %v4595 = vsub.s32 %v4592, %v4594
        %v4596 = vrot.slane %v4582, %v4595
        %v4597 = vcombine.low %v4589, %v4596
        %v4599 = vsub.f32 %v4025, %v4597
        %v4601 = vcombine.high %v4599, %v4599
        %v4603 = vunpack.c.l.s4 1966171168
        %v4604 = vunpack.c.0.s8 %v4603
        %v4605 = vlaneseq
        %v4606 = vshrl.u32 %v4605, 7
        %v4607 = vsub.s32 %v4604, %v4606
        %v4608 = vrot.slane %v4599, %v4607
        %v4610 = vunpack.c.l.s4 1966171168
        %v4611 = vunpack.c.0.s8 %v4610
        %v4612 = vlaneseq
        %v4613 = vshrl.u32 %v4612, 7
        %v4614 = vsub.s32 %v4611, %v4613
        %v4615 = vrot.slane %v4601, %v4614
        %v4616 = vcombine.high %v4608, %v4608
        %v4617 = vcombine.high %v4615, %v4615
        %v4619 = vunpack.c.l.s4 1966171168
        %v4620 = vunpack.c.0.s8 %v4619
        %v4621 = vlaneseq
        %v4622 = vshrl.u32 %v4621, 7
        %v4623 = vsub.s32 %v4620, %v4622
        %v4624 = vrot.slane %v4608, %v4623
        %v4626 = vunpack.c.l.s4 1966171168
        %v4627 = vunpack.c.0.s8 %v4626
        %v4628 = vlaneseq
        %v4629 = vshrl.u32 %v4628, 7
        %v4630 = vsub.s32 %v4627, %v4629
        %v4631 = vrot.slane %v4615, %v4630
        %v4633 = vunpack.c.l.s4 1966171168
        %v4634 = vunpack.c.0.s8 %v4633
        %v4635 = vlaneseq
        %v4636 = vshrl.u32 %v4635, 7
        %v4637 = vsub.s32 %v4634, %v4636
        %v4638 = vrot.slane %v4616, %v4637
        %v4640 = vunpack.c.l.s4 1966171168
        %v4641 = vunpack.c.0.s8 %v4640
        %v4642 = vlaneseq
        %v4643 = vshrl.u32 %v4642, 7
        %v4644 = vsub.s32 %v4641, %v4643
        %v4645 = vrot.slane %v4617, %v4644
        %v4646 = vcombine.high %v4624, %v4624
        %v4647 = vcombine.high %v4631, %v4631
        %v4648 = vcombine.high %v4638, %v4638
        %v4649 = vcombine.high %v4645, %v4645
        %v4658 = vmul.f32 %v4428, %v4624
        %v4659 = vmul.f32 %v4430, %v4638
        %v4660 = vmul.f32 %v4432, %v4646
        %v4661 = vmul.f32 %v4434, %v4648
        %v4662 = vmul.f32 %v4436, %v4631
        %v4663 = vmul.f32 %v4438, %v4645
        %v4664 = vmul.f32 %v4440, %v4647
        %v4665 = vmul.f32 %v4442, %v4649
        %v4666 = vadd.f32 %v4533, %v4658
        %v4667 = vadd.f32 %v4534, %v4659
        %v4668 = vadd.f32 %v4535, %v4660
        %v4669 = vadd.f32 %v4536, %v4661
        %v4670 = vadd.f32 %v4537, %v4662
        %v4671 = vadd.f32 %v4538, %v4663
        %v4672 = vadd.f32 %v4539, %v4664
        %v4673 = vadd.f32 %v4540, %v4665
        %s4674 = sadd.s32 %s390, 5
        %v4675 = vstv %s4674
        %vm4676 = vcmp.lt.s32.totalorder %v4675, %v340
        %v4677 = vsel %vm4676, 1, 0
        %4678 = vset.pattern.permute.xlu0 0
        %4679 = vperm.xlu0 %4678, %v4677
        %v4680 = vpop.permute.xlu0 %4679
        %vm4681 = vcmp.eq.s32.totalorder %v4680, 1
        %v4690 = vcombine.low %v4666, %v4667
        %v4691 = vcombine.low %v4668, %v4669
        %v4692 = vcombine.low %v4670, %v4671
        %v4693 = vcombine.low %v4672, %v4673
        %v4695 = vunpack.c.l.s4 1966171168
        %v4696 = vunpack.c.0.s8 %v4695
        %v4697 = vlaneseq
        %v4698 = vshrl.u32 %v4697, 7
        %v4699 = vsub.s32 %v4696, %v4698
        %v4700 = vrot.slane %v4690, %v4699
        %v4702 = vunpack.c.l.s4 1966171168
        %v4703 = vunpack.c.0.s8 %v4702
        %v4704 = vlaneseq
        %v4705 = vshrl.u32 %v4704, 7
        %v4706 = vsub.s32 %v4703, %v4705
        %v4707 = vrot.slane %v4691, %v4706
        %v4709 = vunpack.c.l.s4 1966171168
        %v4710 = vunpack.c.0.s8 %v4709
        %v4711 = vlaneseq
        %v4712 = vshrl.u32 %v4711, 7
        %v4713 = vsub.s32 %v4710, %v4712
        %v4714 = vrot.slane %v4692, %v4713
        %v4716 = vunpack.c.l.s4 1966171168
        %v4717 = vunpack.c.0.s8 %v4716
        %v4718 = vlaneseq
        %v4719 = vshrl.u32 %v4718, 7
        %v4720 = vsub.s32 %v4717, %v4719
        %v4721 = vrot.slane %v4693, %v4720
        %v4722 = vcombine.low %v4700, %v4707
        %v4723 = vcombine.low %v4714, %v4721
        %v4725 = vunpack.c.l.s4 1966171168
        %v4726 = vunpack.c.0.s8 %v4725
        %v4727 = vlaneseq
        %v4728 = vshrl.u32 %v4727, 7
        %v4729 = vsub.s32 %v4726, %v4728
        %v4730 = vrot.slane %v4722, %v4729
        %v4732 = vunpack.c.l.s4 1966171168
        %v4733 = vunpack.c.0.s8 %v4732
        %v4734 = vlaneseq
        %v4735 = vshrl.u32 %v4734, 7
        %v4736 = vsub.s32 %v4733, %v4735
        %v4737 = vrot.slane %v4723, %v4736
        %v4738 = vcombine.low %v4730, %v4737
        %v4740 = vsel %vm4681, %v4738, %v4025
        %v4741 = vsel %vm4681, %v4738, 0.0
        %v4743 = vcombine.high %v4741, %v4741
        %v4745 = vunpack.c.l.s4 1966171168
        %v4746 = vunpack.c.0.s8 %v4745
        %v4747 = vlaneseq
        %v4748 = vshrl.u32 %v4747, 7
        %v4749 = vsub.s32 %v4746, %v4748
        %v4750 = vrot.slane %v4741, %v4749
        %v4752 = vunpack.c.l.s4 1966171168
        %v4753 = vunpack.c.0.s8 %v4752
        %v4754 = vlaneseq
        %v4755 = vshrl.u32 %v4754, 7
        %v4756 = vsub.s32 %v4753, %v4755
        %v4757 = vrot.slane %v4743, %v4756
        %v4758 = vcombine.high %v4750, %v4750
        %v4759 = vcombine.high %v4757, %v4757
        %v4761 = vunpack.c.l.s4 1966171168
        %v4762 = vunpack.c.0.s8 %v4761
        %v4763 = vlaneseq
        %v4764 = vshrl.u32 %v4763, 7
        %v4765 = vsub.s32 %v4762, %v4764
        %v4766 = vrot.slane %v4750, %v4765
        %v4768 = vunpack.c.l.s4 1966171168
        %v4769 = vunpack.c.0.s8 %v4768
        %v4770 = vlaneseq
        %v4771 = vshrl.u32 %v4770, 7
        %v4772 = vsub.s32 %v4769, %v4771
        %v4773 = vrot.slane %v4757, %v4772
        %v4775 = vunpack.c.l.s4 1966171168
        %v4776 = vunpack.c.0.s8 %v4775
        %v4777 = vlaneseq
        %v4778 = vshrl.u32 %v4777, 7
        %v4779 = vsub.s32 %v4776, %v4778
        %v4780 = vrot.slane %v4758, %v4779
        %v4782 = vunpack.c.l.s4 1966171168
        %v4783 = vunpack.c.0.s8 %v4782
        %v4784 = vlaneseq
        %v4785 = vshrl.u32 %v4784, 7
        %v4786 = vsub.s32 %v4783, %v4785
        %v4787 = vrot.slane %v4759, %v4786
        %v4788 = vcombine.high %v4766, %v4766
        %v4789 = vcombine.high %v4773, %v4773
        %v4790 = vcombine.high %v4780, %v4780
        %v4791 = vcombine.high %v4787, %v4787
        %4800 = vst [vmem:[%s317 + $0x5] sm:$0x1] %v4766
        %4801 = vst [vmem:[%s317 + $0xd] sm:$0x1] %v4780
        %4802 = vst [vmem:[%s317 + $0x15] sm:$0x1] %v4788
        %4803 = vst [vmem:[%s317 + $0x1d] sm:$0x1] %v4790
        %4804 = vst [vmem:[%s317 + $0x25] sm:$0x1] %v4773
        %4805 = vst [vmem:[%s317 + $0x2d] sm:$0x1] %v4787
        %4806 = vst [vmem:[%s317 + $0x35] sm:$0x1] %v4789
        %4807 = vst [vmem:[%s317 + $0x3d] sm:$0x1] %v4791
        %s4808 = scalar_lea.vmem %s292, 6 [#allocation3]
        %v4809 = vld [vmem:[%s4808] ss:$8 sm:$0x7]
        %s4810 = scalar_lea.vmem %s292, 30 [#allocation3]
        %v4811 = vld [vmem:[%s4810] ss:$8 sm:$0x7]
        %s4812 = scalar_lea.vmem %s292, 54 [#allocation3]
        %v4813 = vld [vmem:[%s4812] ss:$8 sm:$0x7]
        %s4814 = scalar_lea.vmem %s292, 78 [#allocation3]
        %v4815 = vld [vmem:[%s4814] ss:$8 sm:$0x7]
        %s4816 = scalar_lea.vmem %s292, 102 [#allocation3]
        %v4817 = vld [vmem:[%s4816] ss:$8 sm:$0x7]
        %s4818 = scalar_lea.vmem %s292, 126 [#allocation3]
        %v4819 = vld [vmem:[%s4818] ss:$8 sm:$0x7]
        %s4820 = scalar_lea.vmem %s292, 150 [#allocation3]
        %v4821 = vld [vmem:[%s4820] ss:$8 sm:$0x7]
        %s4822 = scalar_lea.vmem %s292, 174 [#allocation3]
        %v4823 = vld [vmem:[%s4822] ss:$8 sm:$0x7]
        %v4824 = vpack.c.bf16 %v4740, %v4740
        %4825 = vmatprep.subr.bf16.mxu0 %v489
        %4826 = vmatpush1.bf16.msra.mxu0 %v488
        %4827 = vmatprep.subr.bf16.mxu0 %v492
        %4828 = vmatpush1.bf16.msra.mxu0 %v491
        %4829 = vmatprep.subr.bf16.mxu0 %v495
        %4830 = vmatpush1.bf16.msra.mxu0 %v494
        %4831 = vmatprep.subr.bf16.mxu0 %v498
        %4832 = vmatpush1.bf16.msra.mxu0 %v497
        %4833 = vmatprep.subr.bf16.mxu0 %v501
        %4834 = vmatpush1.bf16.msra.mxu0 %v500
        %4835 = vmatprep.subr.bf16.mxu0 %v504
        %4836 = vmatpush1.bf16.msra.mxu0 %v503
        %4837 = vmatprep.subr.bf16.mxu0 %v507
        %4838 = vmatpush1.bf16.msra.mxu0 %v506
        %4839 = vmatprep.subr.bf16.mxu0 %v510
        %4840 = vmatpush1.bf16.msra.mxu0 %v509
        %4841 = vmatprep.subr.bf16.mxu0 0
        %4842 = vmatpush1.bf16.msra.mxu0 0
        %4843 = vmatprep.subr.bf16.mxu0 0
        %4844 = vmatpush1.bf16.msra.mxu0 0
        %4845 = vmatprep.subr.bf16.mxu0 0
        %4846 = vmatpush1.bf16.msra.mxu0 0
        %4847 = vmatprep.subr.bf16.mxu0 0
        %4848 = vmatpush1.bf16.msra.mxu0 0
        %4849 = vmatprep.subr.bf16.mxu0 0
        %4850 = vmatpush1.bf16.msra.mxu0 0
        %4851 = vmatprep.subr.bf16.mxu0 0
        %4852 = vmatpush1.bf16.msra.mxu0 0
        %4853 = vmatprep.subr.bf16.mxu0 0
        %4854 = vmatpush1.bf16.msra.mxu0 0
        %4855 = vmatprep.subr.bf16.mxu0 0
        %4856 = vmatpush1.bf16.msra.mxu0 0
        %4857 = vmatprep.mubr.bf16.mxu0 0
        %4858 = vmatmul.mubr.bf16.gmra.mrb[0].mxu0 %v4824
        %v4859 = vpop.f32.mrb[0].mxu0
        %v4860 = vadd.f32 %v378, %v4859
        %v4861 = vpop.f32.mrb[0].mxu0
        %v4862 = vadd.f32 %v382, %v4861
        %v4863 = vpop.f32.mrb[0].mxu0
        %v4864 = vpop.f32.mrb[0].mxu0
        %4865 = vdwg.mxu0
        %4866 = vmatprep.subr.bf16.mxu0 0
        %4867 = vmatpush1.bf16.msra.mxu0 %v490
        %4868 = vmatprep.subr.bf16.mxu0 0
        %4869 = vmatpush1.bf16.msra.mxu0 %v493
        %4870 = vmatprep.subr.bf16.mxu0 0
        %4871 = vmatpush1.bf16.msra.mxu0 %v496
        %4872 = vmatprep.subr.bf16.mxu0 0
        %4873 = vmatpush1.bf16.msra.mxu0 %v499
        %4874 = vmatprep.subr.bf16.mxu0 0
        %4875 = vmatpush1.bf16.msra.mxu0 %v502
        %4876 = vmatprep.subr.bf16.mxu0 0
        %4877 = vmatpush1.bf16.msra.mxu0 %v505
        %4878 = vmatprep.subr.bf16.mxu0 0
        %4879 = vmatpush1.bf16.msra.mxu0 %v508
        %4880 = vmatprep.subr.bf16.mxu0 0
        %4881 = vmatpush1.bf16.msra.mxu0 %v511
        %4882 = vmatprep.subr.bf16.mxu0 0
        %4883 = vmatpush1.bf16.msra.mxu0 0
        %4884 = vmatprep.subr.bf16.mxu0 0
        %4885 = vmatpush1.bf16.msra.mxu0 0
        %4886 = vmatprep.subr.bf16.mxu0 0
        %4887 = vmatpush1.bf16.msra.mxu0 0
        %4888 = vmatprep.subr.bf16.mxu0 0
        %4889 = vmatpush1.bf16.msra.mxu0 0
        %4890 = vmatprep.subr.bf16.mxu0 0
        %4891 = vmatpush1.bf16.msra.mxu0 0
        %4892 = vmatprep.subr.bf16.mxu0 0
        %4893 = vmatpush1.bf16.msra.mxu0 0
        %4894 = vmatprep.subr.bf16.mxu0 0
        %4895 = vmatpush1.bf16.msra.mxu0 0
        %4896 = vmatprep.subr.bf16.mxu0 0
        %4897 = vmatpush1.bf16.msra.mxu0 0
        %4898 = vmatprep.mubr.bf16.mxu0 0
        %4899 = vmatmul.mubr.bf16.gmra.mrb[0].mxu0 %v4824
        %v4900 = vpop.f32.mrb[0].mxu0
        %v4901 = vadd.f32 %v386, %v4900
        %v4902 = vpop.f32.mrb[0].mxu0
        %v4903 = vpop.f32.mrb[0].mxu0
        %v4904 = vpop.f32.mrb[0].mxu0
        %4905 = vdwg.mxu0
        %v4907 = vcombine.high %v4860, %v4860
        %v4909 = vunpack.c.l.s4 1966171168
        %v4910 = vunpack.c.0.s8 %v4909
        %v4911 = vlaneseq
        %v4912 = vshrl.u32 %v4911, 7
        %v4913 = vsub.s32 %v4910, %v4912
        %v4914 = vrot.slane %v4860, %v4913
        %v4916 = vunpack.c.l.s4 1966171168
        %v4917 = vunpack.c.0.s8 %v4916
        %v4918 = vlaneseq
        %v4919 = vshrl.u32 %v4918, 7
        %v4920 = vsub.s32 %v4917, %v4919
        %v4921 = vrot.slane %v4907, %v4920
        %v4922 = vcombine.high %v4914, %v4914
        %v4923 = vcombine.high %v4921, %v4921
        %v4925 = vunpack.c.l.s4 1966171168
        %v4926 = vunpack.c.0.s8 %v4925
        %v4927 = vlaneseq
        %v4928 = vshrl.u32 %v4927, 7
        %v4929 = vsub.s32 %v4926, %v4928
        %v4930 = vrot.slane %v4914, %v4929
        %v4932 = vunpack.c.l.s4 1966171168
        %v4933 = vunpack.c.0.s8 %v4932
        %v4934 = vlaneseq
        %v4935 = vshrl.u32 %v4934, 7
        %v4936 = vsub.s32 %v4933, %v4935
        %v4937 = vrot.slane %v4921, %v4936
        %v4939 = vunpack.c.l.s4 1966171168
        %v4940 = vunpack.c.0.s8 %v4939
        %v4941 = vlaneseq
        %v4942 = vshrl.u32 %v4941, 7
        %v4943 = vsub.s32 %v4940, %v4942
        %v4944 = vrot.slane %v4922, %v4943
        %v4946 = vunpack.c.l.s4 1966171168
        %v4947 = vunpack.c.0.s8 %v4946
        %v4948 = vlaneseq
        %v4949 = vshrl.u32 %v4948, 7
        %v4950 = vsub.s32 %v4947, %v4949
        %v4951 = vrot.slane %v4923, %v4950
        %v4952 = vcombine.high %v4930, %v4930
        %v4953 = vcombine.high %v4937, %v4937
        %v4954 = vcombine.high %v4944, %v4944
        %v4955 = vcombine.high %v4951, %v4951
        %v4964 = vadd.f32 %v4809, %v4930
        %v4965 = vadd.f32 %v4811, %v4944
        %v4966 = vadd.f32 %v4813, %v4952
        %v4967 = vadd.f32 %v4815, %v4954
        %v4968 = vadd.f32 %v4817, %v4937
        %v4969 = vadd.f32 %v4819, %v4951
        %v4970 = vadd.f32 %v4821, %v4953
        %v4971 = vadd.f32 %v4823, %v4955
        %v4972 = vxor.u32 %v4964, 2147483648
        %v4973 = vxor.u32 %v4965, 2147483648
        %v4974 = vxor.u32 %v4966, 2147483648
        %v4975 = vxor.u32 %v4967, 2147483648
        %v4976 = vxor.u32 %v4968, 2147483648
        %v4977 = vxor.u32 %v4969, 2147483648
        %v4978 = vxor.u32 %v4970, 2147483648
        %v4979 = vxor.u32 %v4971, 2147483648
        %v4980 = vmul.f32 %v4972, 1.442695
        %v4981 = vpow.pop %v4980
        %v4982 = vmul.f32 %v4973, 1.442695
        %v4983 = vpow.pop %v4982
        %v4984 = vmul.f32 %v4974, 1.442695
        %v4985 = vpow.pop %v4984
        %v4986 = vmul.f32 %v4975, 1.442695
        %v4987 = vpow.pop %v4986
        %v4988 = vmul.f32 %v4976, 1.442695
        %v4989 = vpow.pop %v4988
        %v4990 = vmul.f32 %v4977, 1.442695
        %v4991 = vpow.pop %v4990
        %v4992 = vmul.f32 %v4978, 1.442695
        %v4993 = vpow.pop %v4992
        %v4994 = vmul.f32 %v4979, 1.442695
        %v4995 = vpow.pop %v4994
        %v4996 = vadd.f32 %v4981, 1.0
        %v4997 = vadd.f32 %v4983, 1.0
        %v4998 = vadd.f32 %v4985, 1.0
        %v4999 = vadd.f32 %v4987, 1.0
        %v5000 = vadd.f32 %v4989, 1.0
        %v5001 = vadd.f32 %v4991, 1.0
        %v5002 = vadd.f32 %v4993, 1.0
        %v5003 = vadd.f32 %v4995, 1.0
        %v5004 = vrcp.pop %v4996
        %v5005 = vmul.f32 1.0, %v5004
        %v5006 = vrcp.pop %v4997
        %v5007 = vmul.f32 1.0, %v5006
        %v5008 = vrcp.pop %v4998
        %v5009 = vmul.f32 1.0, %v5008
        %v5010 = vrcp.pop %v4999
        %v5011 = vmul.f32 1.0, %v5010
        %v5012 = vrcp.pop %v5000
        %v5013 = vmul.f32 1.0, %v5012
        %v5014 = vrcp.pop %v5001
        %v5015 = vmul.f32 1.0, %v5014
        %v5016 = vrcp.pop %v5002
        %v5017 = vmul.f32 1.0, %v5016
        %v5018 = vrcp.pop %v5003
        %v5019 = vmul.f32 1.0, %v5018
        %v5028 = vrot.slane %v4809, 1
        %v5029 = vrot.slane %v4811, 1
        %v5030 = vrot.slane %v4813, 1
        %v5031 = vrot.slane %v4815, 1
        %v5032 = vrot.slane %v4817, 1
        %v5033 = vrot.slane %v4819, 1
        %v5034 = vrot.slane %v4821, 1
        %v5035 = vrot.slane %v4823, 1
        %v5045 = vcombine.high %v4862, %v4862
        %v5047 = vunpack.c.l.s4 1966171168
        %v5048 = vunpack.c.0.s8 %v5047
        %v5049 = vlaneseq
        %v5050 = vshrl.u32 %v5049, 7
        %v5051 = vsub.s32 %v5048, %v5050
        %v5052 = vrot.slane %v4862, %v5051
        %v5054 = vunpack.c.l.s4 1966171168
        %v5055 = vunpack.c.0.s8 %v5054
        %v5056 = vlaneseq
        %v5057 = vshrl.u32 %v5056, 7
        %v5058 = vsub.s32 %v5055, %v5057
        %v5059 = vrot.slane %v5045, %v5058
        %v5060 = vcombine.high %v5052, %v5052
        %v5061 = vcombine.high %v5059, %v5059
        %v5063 = vunpack.c.l.s4 1966171168
        %v5064 = vunpack.c.0.s8 %v5063
        %v5065 = vlaneseq
        %v5066 = vshrl.u32 %v5065, 7
        %v5067 = vsub.s32 %v5064, %v5066
        %v5068 = vrot.slane %v5052, %v5067
        %v5070 = vunpack.c.l.s4 1966171168
        %v5071 = vunpack.c.0.s8 %v5070
        %v5072 = vlaneseq
        %v5073 = vshrl.u32 %v5072, 7
        %v5074 = vsub.s32 %v5071, %v5073
        %v5075 = vrot.slane %v5059, %v5074
        %v5077 = vunpack.c.l.s4 1966171168
        %v5078 = vunpack.c.0.s8 %v5077
        %v5079 = vlaneseq
        %v5080 = vshrl.u32 %v5079, 7
        %v5081 = vsub.s32 %v5078, %v5080
        %v5082 = vrot.slane %v5060, %v5081
        %v5084 = vunpack.c.l.s4 1966171168
        %v5085 = vunpack.c.0.s8 %v5084
        %v5086 = vlaneseq
        %v5087 = vshrl.u32 %v5086, 7
        %v5088 = vsub.s32 %v5085, %v5087
        %v5089 = vrot.slane %v5061, %v5088
        %v5090 = vcombine.high %v5068, %v5068
        %v5091 = vcombine.high %v5075, %v5075
        %v5092 = vcombine.high %v5082, %v5082
        %v5093 = vcombine.high %v5089, %v5089
        %v5102 = vadd.f32 %v5028, %v5068
        %v5103 = vadd.f32 %v5029, %v5082
        %v5104 = vadd.f32 %v5030, %v5090
        %v5105 = vadd.f32 %v5031, %v5092
        %v5106 = vadd.f32 %v5032, %v5075
        %v5107 = vadd.f32 %v5033, %v5089
        %v5108 = vadd.f32 %v5034, %v5091
        %v5109 = vadd.f32 %v5035, %v5093
        %v5110 = vxor.u32 %v5102, 2147483648
        %v5111 = vxor.u32 %v5103, 2147483648
        %v5112 = vxor.u32 %v5104, 2147483648
        %v5113 = vxor.u32 %v5105, 2147483648
        %v5114 = vxor.u32 %v5106, 2147483648
        %v5115 = vxor.u32 %v5107, 2147483648
        %v5116 = vxor.u32 %v5108, 2147483648
        %v5117 = vxor.u32 %v5109, 2147483648
        %v5118 = vmul.f32 %v5110, 1.442695
        %v5119 = vpow.pop %v5118
        %v5120 = vmul.f32 %v5111, 1.442695
        %v5121 = vpow.pop %v5120
        %v5122 = vmul.f32 %v5112, 1.442695
        %v5123 = vpow.pop %v5122
        %v5124 = vmul.f32 %v5113, 1.442695
        %v5125 = vpow.pop %v5124
        %v5126 = vmul.f32 %v5114, 1.442695
        %v5127 = vpow.pop %v5126
        %v5128 = vmul.f32 %v5115, 1.442695
        %v5129 = vpow.pop %v5128
        %v5130 = vmul.f32 %v5116, 1.442695
        %v5131 = vpow.pop %v5130
        %v5132 = vmul.f32 %v5117, 1.442695
        %v5133 = vpow.pop %v5132
        %v5134 = vadd.f32 %v5119, 1.0
        %v5135 = vadd.f32 %v5121, 1.0
        %v5136 = vadd.f32 %v5123, 1.0
        %v5137 = vadd.f32 %v5125, 1.0
        %v5138 = vadd.f32 %v5127, 1.0
        %v5139 = vadd.f32 %v5129, 1.0
        %v5140 = vadd.f32 %v5131, 1.0
        %v5141 = vadd.f32 %v5133, 1.0
        %v5142 = vrcp.pop %v5134
        %v5143 = vmul.f32 1.0, %v5142
        %v5144 = vrcp.pop %v5135
        %v5145 = vmul.f32 1.0, %v5144
        %v5146 = vrcp.pop %v5136
        %v5147 = vmul.f32 1.0, %v5146
        %v5148 = vrcp.pop %v5137
        %v5149 = vmul.f32 1.0, %v5148
        %v5150 = vrcp.pop %v5138
        %v5151 = vmul.f32 1.0, %v5150
        %v5152 = vrcp.pop %v5139
        %v5153 = vmul.f32 1.0, %v5152
        %v5154 = vrcp.pop %v5140
        %v5155 = vmul.f32 1.0, %v5154
        %v5156 = vrcp.pop %v5141
        %v5157 = vmul.f32 1.0, %v5156
        %v5159 = vcombine.high %v4901, %v4901
        %v5161 = vunpack.c.l.s4 1966171168
        %v5162 = vunpack.c.0.s8 %v5161
        %v5163 = vlaneseq
        %v5164 = vshrl.u32 %v5163, 7
        %v5165 = vsub.s32 %v5162, %v5164
        %v5166 = vrot.slane %v4901, %v5165
        %v5168 = vunpack.c.l.s4 1966171168
        %v5169 = vunpack.c.0.s8 %v5168
        %v5170 = vlaneseq
        %v5171 = vshrl.u32 %v5170, 7
        %v5172 = vsub.s32 %v5169, %v5171
        %v5173 = vrot.slane %v5159, %v5172
        %v5174 = vcombine.high %v5166, %v5166
        %v5175 = vcombine.high %v5173, %v5173
        %v5177 = vunpack.c.l.s4 1966171168
        %v5178 = vunpack.c.0.s8 %v5177
        %v5179 = vlaneseq
        %v5180 = vshrl.u32 %v5179, 7
        %v5181 = vsub.s32 %v5178, %v5180
        %v5182 = vrot.slane %v5166, %v5181
        %v5184 = vunpack.c.l.s4 1966171168
        %v5185 = vunpack.c.0.s8 %v5184
        %v5186 = vlaneseq
        %v5187 = vshrl.u32 %v5186, 7
        %v5188 = vsub.s32 %v5185, %v5187
        %v5189 = vrot.slane %v5173, %v5188
        %v5191 = vunpack.c.l.s4 1966171168
        %v5192 = vunpack.c.0.s8 %v5191
        %v5193 = vlaneseq
        %v5194 = vshrl.u32 %v5193, 7
        %v5195 = vsub.s32 %v5192, %v5194
        %v5196 = vrot.slane %v5174, %v5195
        %v5198 = vunpack.c.l.s4 1966171168
        %v5199 = vunpack.c.0.s8 %v5198
        %v5200 = vlaneseq
        %v5201 = vshrl.u32 %v5200, 7
        %v5202 = vsub.s32 %v5199, %v5201
        %v5203 = vrot.slane %v5175, %v5202
        %v5204 = vcombine.high %v5182, %v5182
        %v5205 = vcombine.high %v5189, %v5189
        %v5206 = vcombine.high %v5196, %v5196
        %v5207 = vcombine.high %v5203, %v5203
        %v5216 = vmul.f32 %v5005, %v5182
        %v5217 = vmul.f32 %v5007, %v5196
        %v5218 = vmul.f32 %v5009, %v5204
        %v5219 = vmul.f32 %v5011, %v5206
        %v5220 = vmul.f32 %v5013, %v5189
        %v5221 = vmul.f32 %v5015, %v5203
        %v5222 = vmul.f32 %v5017, %v5205
        %v5223 = vmul.f32 %v5019, %v5207
        %v5224 = vrot.slane %v4809, 2
        %v5225 = vrot.slane %v4811, 2
        %v5226 = vrot.slane %v4813, 2
        %v5227 = vrot.slane %v4815, 2
        %v5228 = vrot.slane %v4817, 2
        %v5229 = vrot.slane %v4819, 2
        %v5230 = vrot.slane %v4821, 2
        %v5231 = vrot.slane %v4823, 2
        %v5240 = vadd.f32 %v5224, %v5216
        %v5241 = vadd.f32 %v5225, %v5217
        %v5242 = vadd.f32 %v5226, %v5218
        %v5243 = vadd.f32 %v5227, %v5219
        %v5244 = vadd.f32 %v5228, %v5220
        %v5245 = vadd.f32 %v5229, %v5221
        %v5246 = vadd.f32 %v5230, %v5222
        %v5247 = vadd.f32 %v5231, %v5223
        %v5248 = vtanh.pop %v5240
        %v5249 = vtanh.pop %v5241
        %v5250 = vtanh.pop %v5242
        %v5251 = vtanh.pop %v5243
        %v5252 = vtanh.pop %v5244
        %v5253 = vtanh.pop %v5245
        %v5254 = vtanh.pop %v5246
        %v5255 = vtanh.pop %v5247
        %v5264 = vcombine.low %v5248, %v5249
        %v5265 = vcombine.low %v5250, %v5251
        %v5266 = vcombine.low %v5252, %v5253
        %v5267 = vcombine.low %v5254, %v5255
        %v5269 = vunpack.c.l.s4 1966171168
        %v5270 = vunpack.c.0.s8 %v5269
        %v5271 = vlaneseq
        %v5272 = vshrl.u32 %v5271, 7
        %v5273 = vsub.s32 %v5270, %v5272
        %v5274 = vrot.slane %v5264, %v5273
        %v5276 = vunpack.c.l.s4 1966171168
        %v5277 = vunpack.c.0.s8 %v5276
        %v5278 = vlaneseq
        %v5279 = vshrl.u32 %v5278, 7
        %v5280 = vsub.s32 %v5277, %v5279
        %v5281 = vrot.slane %v5265, %v5280
        %v5283 = vunpack.c.l.s4 1966171168
        %v5284 = vunpack.c.0.s8 %v5283
        %v5285 = vlaneseq
        %v5286 = vshrl.u32 %v5285, 7
        %v5287 = vsub.s32 %v5284, %v5286
        %v5288 = vrot.slane %v5266, %v5287
        %v5290 = vunpack.c.l.s4 1966171168
        %v5291 = vunpack.c.0.s8 %v5290
        %v5292 = vlaneseq
        %v5293 = vshrl.u32 %v5292, 7
        %v5294 = vsub.s32 %v5291, %v5293
        %v5295 = vrot.slane %v5267, %v5294
        %v5296 = vcombine.low %v5274, %v5281
        %v5297 = vcombine.low %v5288, %v5295
        %v5299 = vunpack.c.l.s4 1966171168
        %v5300 = vunpack.c.0.s8 %v5299
        %v5301 = vlaneseq
        %v5302 = vshrl.u32 %v5301, 7
        %v5303 = vsub.s32 %v5300, %v5302
        %v5304 = vrot.slane %v5296, %v5303
        %v5306 = vunpack.c.l.s4 1966171168
        %v5307 = vunpack.c.0.s8 %v5306
        %v5308 = vlaneseq
        %v5309 = vshrl.u32 %v5308, 7
        %v5310 = vsub.s32 %v5307, %v5309
        %v5311 = vrot.slane %v5297, %v5310
        %v5312 = vcombine.low %v5304, %v5311
        %v5314 = vsub.f32 %v4740, %v5312
        %v5316 = vcombine.high %v5314, %v5314
        %v5318 = vunpack.c.l.s4 1966171168
        %v5319 = vunpack.c.0.s8 %v5318
        %v5320 = vlaneseq
        %v5321 = vshrl.u32 %v5320, 7
        %v5322 = vsub.s32 %v5319, %v5321
        %v5323 = vrot.slane %v5314, %v5322
        %v5325 = vunpack.c.l.s4 1966171168
        %v5326 = vunpack.c.0.s8 %v5325
        %v5327 = vlaneseq
        %v5328 = vshrl.u32 %v5327, 7
        %v5329 = vsub.s32 %v5326, %v5328
        %v5330 = vrot.slane %v5316, %v5329
        %v5331 = vcombine.high %v5323, %v5323
        %v5332 = vcombine.high %v5330, %v5330
        %v5334 = vunpack.c.l.s4 1966171168
        %v5335 = vunpack.c.0.s8 %v5334
        %v5336 = vlaneseq
        %v5337 = vshrl.u32 %v5336, 7
        %v5338 = vsub.s32 %v5335, %v5337
        %v5339 = vrot.slane %v5323, %v5338
        %v5341 = vunpack.c.l.s4 1966171168
        %v5342 = vunpack.c.0.s8 %v5341
        %v5343 = vlaneseq
        %v5344 = vshrl.u32 %v5343, 7
        %v5345 = vsub.s32 %v5342, %v5344
        %v5346 = vrot.slane %v5330, %v5345
        %v5348 = vunpack.c.l.s4 1966171168
        %v5349 = vunpack.c.0.s8 %v5348
        %v5350 = vlaneseq
        %v5351 = vshrl.u32 %v5350, 7
        %v5352 = vsub.s32 %v5349, %v5351
        %v5353 = vrot.slane %v5331, %v5352
        %v5355 = vunpack.c.l.s4 1966171168
        %v5356 = vunpack.c.0.s8 %v5355
        %v5357 = vlaneseq
        %v5358 = vshrl.u32 %v5357, 7
        %v5359 = vsub.s32 %v5356, %v5358
        %v5360 = vrot.slane %v5332, %v5359
        %v5361 = vcombine.high %v5339, %v5339
        %v5362 = vcombine.high %v5346, %v5346
        %v5363 = vcombine.high %v5353, %v5353
        %v5364 = vcombine.high %v5360, %v5360
        %v5373 = vmul.f32 %v5143, %v5339
        %v5374 = vmul.f32 %v5145, %v5353
        %v5375 = vmul.f32 %v5147, %v5361
        %v5376 = vmul.f32 %v5149, %v5363
        %v5377 = vmul.f32 %v5151, %v5346
        %v5378 = vmul.f32 %v5153, %v5360
        %v5379 = vmul.f32 %v5155, %v5362
        %v5380 = vmul.f32 %v5157, %v5364
        %v5381 = vadd.f32 %v5248, %v5373
        %v5382 = vadd.f32 %v5249, %v5374
        %v5383 = vadd.f32 %v5250, %v5375
        %v5384 = vadd.f32 %v5251, %v5376
        %v5385 = vadd.f32 %v5252, %v5377
        %v5386 = vadd.f32 %v5253, %v5378
        %v5387 = vadd.f32 %v5254, %v5379
        %v5388 = vadd.f32 %v5255, %v5380
        %s5389 = sadd.s32 %s390, 6
        %v5390 = vstv %s5389
        %vm5391 = vcmp.lt.s32.totalorder %v5390, %v340
        %v5392 = vsel %vm5391, 1, 0
        %5393 = vset.pattern.permute.xlu0 0
        %5394 = vperm.xlu0 %5393, %v5392
        %v5395 = vpop.permute.xlu0 %5394
        %vm5396 = vcmp.eq.s32.totalorder %v5395, 1
        %v5405 = vcombine.low %v5381, %v5382
        %v5406 = vcombine.low %v5383, %v5384
        %v5407 = vcombine.low %v5385, %v5386
        %v5408 = vcombine.low %v5387, %v5388
        %v5410 = vunpack.c.l.s4 1966171168
        %v5411 = vunpack.c.0.s8 %v5410
        %v5412 = vlaneseq
        %v5413 = vshrl.u32 %v5412, 7
        %v5414 = vsub.s32 %v5411, %v5413
        %v5415 = vrot.slane %v5405, %v5414
        %v5417 = vunpack.c.l.s4 1966171168
        %v5418 = vunpack.c.0.s8 %v5417
        %v5419 = vlaneseq
        %v5420 = vshrl.u32 %v5419, 7
        %v5421 = vsub.s32 %v5418, %v5420
        %v5422 = vrot.slane %v5406, %v5421
        %v5424 = vunpack.c.l.s4 1966171168
        %v5425 = vunpack.c.0.s8 %v5424
        %v5426 = vlaneseq
        %v5427 = vshrl.u32 %v5426, 7
        %v5428 = vsub.s32 %v5425, %v5427
        %v5429 = vrot.slane %v5407, %v5428
        %v5431 = vunpack.c.l.s4 1966171168
        %v5432 = vunpack.c.0.s8 %v5431
        %v5433 = vlaneseq
        %v5434 = vshrl.u32 %v5433, 7
        %v5435 = vsub.s32 %v5432, %v5434
        %v5436 = vrot.slane %v5408, %v5435
        %v5437 = vcombine.low %v5415, %v5422
        %v5438 = vcombine.low %v5429, %v5436
        %v5440 = vunpack.c.l.s4 1966171168
        %v5441 = vunpack.c.0.s8 %v5440
        %v5442 = vlaneseq
        %v5443 = vshrl.u32 %v5442, 7
        %v5444 = vsub.s32 %v5441, %v5443
        %v5445 = vrot.slane %v5437, %v5444
        %v5447 = vunpack.c.l.s4 1966171168
        %v5448 = vunpack.c.0.s8 %v5447
        %v5449 = vlaneseq
        %v5450 = vshrl.u32 %v5449, 7
        %v5451 = vsub.s32 %v5448, %v5450
        %v5452 = vrot.slane %v5438, %v5451
        %v5453 = vcombine.low %v5445, %v5452
        %v5455 = vsel %vm5396, %v5453, %v4740
        %v5456 = vsel %vm5396, %v5453, 0.0
        %v5458 = vcombine.high %v5456, %v5456
        %v5460 = vunpack.c.l.s4 1966171168
        %v5461 = vunpack.c.0.s8 %v5460
        %v5462 = vlaneseq
        %v5463 = vshrl.u32 %v5462, 7
        %v5464 = vsub.s32 %v5461, %v5463
        %v5465 = vrot.slane %v5456, %v5464
        %v5467 = vunpack.c.l.s4 1966171168
        %v5468 = vunpack.c.0.s8 %v5467
        %v5469 = vlaneseq
        %v5470 = vshrl.u32 %v5469, 7
        %v5471 = vsub.s32 %v5468, %v5470
        %v5472 = vrot.slane %v5458, %v5471
        %v5473 = vcombine.high %v5465, %v5465
        %v5474 = vcombine.high %v5472, %v5472
        %v5476 = vunpack.c.l.s4 1966171168
        %v5477 = vunpack.c.0.s8 %v5476
        %v5478 = vlaneseq
        %v5479 = vshrl.u32 %v5478, 7
        %v5480 = vsub.s32 %v5477, %v5479
        %v5481 = vrot.slane %v5465, %v5480
        %v5483 = vunpack.c.l.s4 1966171168
        %v5484 = vunpack.c.0.s8 %v5483
        %v5485 = vlaneseq
        %v5486 = vshrl.u32 %v5485, 7
        %v5487 = vsub.s32 %v5484, %v5486
        %v5488 = vrot.slane %v5472, %v5487
        %v5490 = vunpack.c.l.s4 1966171168
        %v5491 = vunpack.c.0.s8 %v5490
        %v5492 = vlaneseq
        %v5493 = vshrl.u32 %v5492, 7
        %v5494 = vsub.s32 %v5491, %v5493
        %v5495 = vrot.slane %v5473, %v5494
        %v5497 = vunpack.c.l.s4 1966171168
        %v5498 = vunpack.c.0.s8 %v5497
        %v5499 = vlaneseq
        %v5500 = vshrl.u32 %v5499, 7
        %v5501 = vsub.s32 %v5498, %v5500
        %v5502 = vrot.slane %v5474, %v5501
        %v5503 = vcombine.high %v5481, %v5481
        %v5504 = vcombine.high %v5488, %v5488
        %v5505 = vcombine.high %v5495, %v5495
        %v5506 = vcombine.high %v5502, %v5502
        %5515 = vst [vmem:[%s317 + $0x6] sm:$0x1] %v5481
        %5516 = vst [vmem:[%s317 + $0xe] sm:$0x1] %v5495
        %5517 = vst [vmem:[%s317 + $0x16] sm:$0x1] %v5503
        %5518 = vst [vmem:[%s317 + $0x1e] sm:$0x1] %v5505
        %5519 = vst [vmem:[%s317 + $0x26] sm:$0x1] %v5488
        %5520 = vst [vmem:[%s317 + $0x2e] sm:$0x1] %v5502
        %5521 = vst [vmem:[%s317 + $0x36] sm:$0x1] %v5504
        %5522 = vst [vmem:[%s317 + $0x3e] sm:$0x1] %v5506
        %s5523 = scalar_lea.vmem %s292, 7 [#allocation3]
        %v5524 = vld [vmem:[%s5523] ss:$8 sm:$0x7]
        %s5525 = scalar_lea.vmem %s292, 31 [#allocation3]
        %v5526 = vld [vmem:[%s5525] ss:$8 sm:$0x7]
        %s5527 = scalar_lea.vmem %s292, 55 [#allocation3]
        %v5528 = vld [vmem:[%s5527] ss:$8 sm:$0x7]
        %s5529 = scalar_lea.vmem %s292, 79 [#allocation3]
        %v5530 = vld [vmem:[%s5529] ss:$8 sm:$0x7]
        %s5531 = scalar_lea.vmem %s292, 103 [#allocation3]
        %v5532 = vld [vmem:[%s5531] ss:$8 sm:$0x7]
        %s5533 = scalar_lea.vmem %s292, 127 [#allocation3]
        %v5534 = vld [vmem:[%s5533] ss:$8 sm:$0x7]
        %s5535 = scalar_lea.vmem %s292, 151 [#allocation3]
        %v5536 = vld [vmem:[%s5535] ss:$8 sm:$0x7]
        %s5537 = scalar_lea.vmem %s292, 175 [#allocation3]
        %v5538 = vld [vmem:[%s5537] ss:$8 sm:$0x7]
        %v5539 = vpack.c.bf16 %v5455, %v5455
        %5540 = vmatprep.subr.bf16.mxu0 %v489
        %5541 = vmatpush1.bf16.msra.mxu0 %v488
        %5542 = vmatprep.subr.bf16.mxu0 %v492
        %5543 = vmatpush1.bf16.msra.mxu0 %v491
        %5544 = vmatprep.subr.bf16.mxu0 %v495
        %5545 = vmatpush1.bf16.msra.mxu0 %v494
        %5546 = vmatprep.subr.bf16.mxu0 %v498
        %5547 = vmatpush1.bf16.msra.mxu0 %v497
        %5548 = vmatprep.subr.bf16.mxu0 %v501
        %5549 = vmatpush1.bf16.msra.mxu0 %v500
        %5550 = vmatprep.subr.bf16.mxu0 %v504
        %5551 = vmatpush1.bf16.msra.mxu0 %v503
        %5552 = vmatprep.subr.bf16.mxu0 %v507
        %5553 = vmatpush1.bf16.msra.mxu0 %v506
        %5554 = vmatprep.subr.bf16.mxu0 %v510
        %5555 = vmatpush1.bf16.msra.mxu0 %v509
        %5556 = vmatprep.subr.bf16.mxu0 0
        %5557 = vmatpush1.bf16.msra.mxu0 0
        %5558 = vmatprep.subr.bf16.mxu0 0
        %5559 = vmatpush1.bf16.msra.mxu0 0
        %5560 = vmatprep.subr.bf16.mxu0 0
        %5561 = vmatpush1.bf16.msra.mxu0 0
        %5562 = vmatprep.subr.bf16.mxu0 0
        %5563 = vmatpush1.bf16.msra.mxu0 0
        %5564 = vmatprep.subr.bf16.mxu0 0
        %5565 = vmatpush1.bf16.msra.mxu0 0
        %5566 = vmatprep.subr.bf16.mxu0 0
        %5567 = vmatpush1.bf16.msra.mxu0 0
        %5568 = vmatprep.subr.bf16.mxu0 0
        %5569 = vmatpush1.bf16.msra.mxu0 0
        %5570 = vmatprep.subr.bf16.mxu0 0
        %5571 = vmatpush1.bf16.msra.mxu0 0
        %5572 = vmatprep.mubr.bf16.mxu0 0
        %5573 = vmatmul.mubr.bf16.gmra.mrb[0].mxu0 %v5539
        %v5574 = vpop.f32.mrb[0].mxu0
        %v5575 = vadd.f32 %v378, %v5574
        %v5576 = vpop.f32.mrb[0].mxu0
        %v5577 = vadd.f32 %v382, %v5576
        %v5578 = vpop.f32.mrb[0].mxu0
        %v5579 = vpop.f32.mrb[0].mxu0
        %5580 = vdwg.mxu0
        %5581 = vmatprep.subr.bf16.mxu0 0
        %5582 = vmatpush1.bf16.msra.mxu0 %v490
        %5583 = vmatprep.subr.bf16.mxu0 0
        %5584 = vmatpush1.bf16.msra.mxu0 %v493
        %5585 = vmatprep.subr.bf16.mxu0 0
        %5586 = vmatpush1.bf16.msra.mxu0 %v496
        %5587 = vmatprep.subr.bf16.mxu0 0
        %5588 = vmatpush1.bf16.msra.mxu0 %v499
        %5589 = vmatprep.subr.bf16.mxu0 0
        %5590 = vmatpush1.bf16.msra.mxu0 %v502
        %5591 = vmatprep.subr.bf16.mxu0 0
        %5592 = vmatpush1.bf16.msra.mxu0 %v505
        %5593 = vmatprep.subr.bf16.mxu0 0
        %5594 = vmatpush1.bf16.msra.mxu0 %v508
        %5595 = vmatprep.subr.bf16.mxu0 0
        %5596 = vmatpush1.bf16.msra.mxu0 %v511
        %5597 = vmatprep.subr.bf16.mxu0 0
        %5598 = vmatpush1.bf16.msra.mxu0 0
        %5599 = vmatprep.subr.bf16.mxu0 0
        %5600 = vmatpush1.bf16.msra.mxu0 0
        %5601 = vmatprep.subr.bf16.mxu0 0
        %5602 = vmatpush1.bf16.msra.mxu0 0
        %5603 = vmatprep.subr.bf16.mxu0 0
        %5604 = vmatpush1.bf16.msra.mxu0 0
        %5605 = vmatprep.subr.bf16.mxu0 0
        %5606 = vmatpush1.bf16.msra.mxu0 0
        %5607 = vmatprep.subr.bf16.mxu0 0
        %5608 = vmatpush1.bf16.msra.mxu0 0
        %5609 = vmatprep.subr.bf16.mxu0 0
        %5610 = vmatpush1.bf16.msra.mxu0 0
        %5611 = vmatprep.subr.bf16.mxu0 0
        %5612 = vmatpush1.bf16.msra.mxu0 0
        %5613 = vmatprep.mubr.bf16.mxu0 0
        %5614 = vmatmul.mubr.bf16.gmra.mrb[0].mxu0 %v5539
        %v5615 = vpop.f32.mrb[0].mxu0
        %v5616 = vadd.f32 %v386, %v5615
        %v5617 = vpop.f32.mrb[0].mxu0
        %v5618 = vpop.f32.mrb[0].mxu0
        %v5619 = vpop.f32.mrb[0].mxu0
        %5620 = vdwg.mxu0
        %v5622 = vcombine.high %v5575, %v5575
        %v5624 = vunpack.c.l.s4 1966171168
        %v5625 = vunpack.c.0.s8 %v5624
        %v5626 = vlaneseq
        %v5627 = vshrl.u32 %v5626, 7
        %v5628 = vsub.s32 %v5625, %v5627
        %v5629 = vrot.slane %v5575, %v5628
        %v5631 = vunpack.c.l.s4 1966171168
        %v5632 = vunpack.c.0.s8 %v5631
        %v5633 = vlaneseq
        %v5634 = vshrl.u32 %v5633, 7
        %v5635 = vsub.s32 %v5632, %v5634
        %v5636 = vrot.slane %v5622, %v5635
        %v5637 = vcombine.high %v5629, %v5629
        %v5638 = vcombine.high %v5636, %v5636
        %v5640 = vunpack.c.l.s4 1966171168
        %v5641 = vunpack.c.0.s8 %v5640
        %v5642 = vlaneseq
        %v5643 = vshrl.u32 %v5642, 7
        %v5644 = vsub.s32 %v5641, %v5643
        %v5645 = vrot.slane %v5629, %v5644
        %v5647 = vunpack.c.l.s4 1966171168
        %v5648 = vunpack.c.0.s8 %v5647
        %v5649 = vlaneseq
        %v5650 = vshrl.u32 %v5649, 7
        %v5651 = vsub.s32 %v5648, %v5650
        %v5652 = vrot.slane %v5636, %v5651
        %v5654 = vunpack.c.l.s4 1966171168
        %v5655 = vunpack.c.0.s8 %v5654
        %v5656 = vlaneseq
        %v5657 = vshrl.u32 %v5656, 7
        %v5658 = vsub.s32 %v5655, %v5657
        %v5659 = vrot.slane %v5637, %v5658
        %v5661 = vunpack.c.l.s4 1966171168
        %v5662 = vunpack.c.0.s8 %v5661
        %v5663 = vlaneseq
        %v5664 = vshrl.u32 %v5663, 7
        %v5665 = vsub.s32 %v5662, %v5664
        %v5666 = vrot.slane %v5638, %v5665
        %v5667 = vcombine.high %v5645, %v5645
        %v5668 = vcombine.high %v5652, %v5652
        %v5669 = vcombine.high %v5659, %v5659
        %v5670 = vcombine.high %v5666, %v5666
        %v5679 = vadd.f32 %v5524, %v5645
        %v5680 = vadd.f32 %v5526, %v5659
        %v5681 = vadd.f32 %v5528, %v5667
        %v5682 = vadd.f32 %v5530, %v5669
        %v5683 = vadd.f32 %v5532, %v5652
        %v5684 = vadd.f32 %v5534, %v5666
        %v5685 = vadd.f32 %v5536, %v5668
        %v5686 = vadd.f32 %v5538, %v5670
        %v5687 = vxor.u32 %v5679, 2147483648
        %v5688 = vxor.u32 %v5680, 2147483648
        %v5689 = vxor.u32 %v5681, 2147483648
        %v5690 = vxor.u32 %v5682, 2147483648
        %v5691 = vxor.u32 %v5683, 2147483648
        %v5692 = vxor.u32 %v5684, 2147483648
        %v5693 = vxor.u32 %v5685, 2147483648
        %v5694 = vxor.u32 %v5686, 2147483648
        %v5695 = vmul.f32 %v5687, 1.442695
        %v5696 = vpow.pop %v5695
        %v5697 = vmul.f32 %v5688, 1.442695
        %v5698 = vpow.pop %v5697
        %v5699 = vmul.f32 %v5689, 1.442695
        %v5700 = vpow.pop %v5699
        %v5701 = vmul.f32 %v5690, 1.442695
        %v5702 = vpow.pop %v5701
        %v5703 = vmul.f32 %v5691, 1.442695
        %v5704 = vpow.pop %v5703
        %v5705 = vmul.f32 %v5692, 1.442695
        %v5706 = vpow.pop %v5705
        %v5707 = vmul.f32 %v5693, 1.442695
        %v5708 = vpow.pop %v5707
        %v5709 = vmul.f32 %v5694, 1.442695
        %v5710 = vpow.pop %v5709
        %v5711 = vadd.f32 %v5696, 1.0
        %v5712 = vadd.f32 %v5698, 1.0
        %v5713 = vadd.f32 %v5700, 1.0
        %v5714 = vadd.f32 %v5702, 1.0
        %v5715 = vadd.f32 %v5704, 1.0
        %v5716 = vadd.f32 %v5706, 1.0
        %v5717 = vadd.f32 %v5708, 1.0
        %v5718 = vadd.f32 %v5710, 1.0
        %v5719 = vrcp.pop %v5711
        %v5720 = vmul.f32 1.0, %v5719
        %v5721 = vrcp.pop %v5712
        %v5722 = vmul.f32 1.0, %v5721
        %v5723 = vrcp.pop %v5713
        %v5724 = vmul.f32 1.0, %v5723
        %v5725 = vrcp.pop %v5714
        %v5726 = vmul.f32 1.0, %v5725
        %v5727 = vrcp.pop %v5715
        %v5728 = vmul.f32 1.0, %v5727
        %v5729 = vrcp.pop %v5716
        %v5730 = vmul.f32 1.0, %v5729
        %v5731 = vrcp.pop %v5717
        %v5732 = vmul.f32 1.0, %v5731
        %v5733 = vrcp.pop %v5718
        %v5734 = vmul.f32 1.0, %v5733
        %v5743 = vrot.slane %v5524, 1
        %v5744 = vrot.slane %v5526, 1
        %v5745 = vrot.slane %v5528, 1
        %v5746 = vrot.slane %v5530, 1
        %v5747 = vrot.slane %v5532, 1
        %v5748 = vrot.slane %v5534, 1
        %v5749 = vrot.slane %v5536, 1
        %v5750 = vrot.slane %v5538, 1
        %v5760 = vcombine.high %v5577, %v5577
        %v5762 = vunpack.c.l.s4 1966171168
        %v5763 = vunpack.c.0.s8 %v5762
        %v5764 = vlaneseq
        %v5765 = vshrl.u32 %v5764, 7
        %v5766 = vsub.s32 %v5763, %v5765
        %v5767 = vrot.slane %v5577, %v5766
        %v5769 = vunpack.c.l.s4 1966171168
        %v5770 = vunpack.c.0.s8 %v5769
        %v5771 = vlaneseq
        %v5772 = vshrl.u32 %v5771, 7
        %v5773 = vsub.s32 %v5770, %v5772
        %v5774 = vrot.slane %v5760, %v5773
        %v5775 = vcombine.high %v5767, %v5767
        %v5776 = vcombine.high %v5774, %v5774
        %v5778 = vunpack.c.l.s4 1966171168
        %v5779 = vunpack.c.0.s8 %v5778
        %v5780 = vlaneseq
        %v5781 = vshrl.u32 %v5780, 7
        %v5782 = vsub.s32 %v5779, %v5781
        %v5783 = vrot.slane %v5767, %v5782
        %v5785 = vunpack.c.l.s4 1966171168
        %v5786 = vunpack.c.0.s8 %v5785
        %v5787 = vlaneseq
        %v5788 = vshrl.u32 %v5787, 7
        %v5789 = vsub.s32 %v5786, %v5788
        %v5790 = vrot.slane %v5774, %v5789
        %v5792 = vunpack.c.l.s4 1966171168
        %v5793 = vunpack.c.0.s8 %v5792
        %v5794 = vlaneseq
        %v5795 = vshrl.u32 %v5794, 7
        %v5796 = vsub.s32 %v5793, %v5795
        %v5797 = vrot.slane %v5775, %v5796
        %v5799 = vunpack.c.l.s4 1966171168
        %v5800 = vunpack.c.0.s8 %v5799
        %v5801 = vlaneseq
        %v5802 = vshrl.u32 %v5801, 7
        %v5803 = vsub.s32 %v5800, %v5802
        %v5804 = vrot.slane %v5776, %v5803
        %v5805 = vcombine.high %v5783, %v5783
        %v5806 = vcombine.high %v5790, %v5790
        %v5807 = vcombine.high %v5797, %v5797
        %v5808 = vcombine.high %v5804, %v5804
        %v5817 = vadd.f32 %v5743, %v5783
        %v5818 = vadd.f32 %v5744, %v5797
        %v5819 = vadd.f32 %v5745, %v5805
        %v5820 = vadd.f32 %v5746, %v5807
        %v5821 = vadd.f32 %v5747, %v5790
        %v5822 = vadd.f32 %v5748, %v5804
        %v5823 = vadd.f32 %v5749, %v5806
        %v5824 = vadd.f32 %v5750, %v5808
        %v5825 = vxor.u32 %v5817, 2147483648
        %v5826 = vxor.u32 %v5818, 2147483648
        %v5827 = vxor.u32 %v5819, 2147483648
        %v5828 = vxor.u32 %v5820, 2147483648
        %v5829 = vxor.u32 %v5821, 2147483648
        %v5830 = vxor.u32 %v5822, 2147483648
        %v5831 = vxor.u32 %v5823, 2147483648
        %v5832 = vxor.u32 %v5824, 2147483648
        %v5833 = vmul.f32 %v5825, 1.442695
        %v5834 = vpow.pop %v5833
        %v5835 = vmul.f32 %v5826, 1.442695
        %v5836 = vpow.pop %v5835
        %v5837 = vmul.f32 %v5827, 1.442695
        %v5838 = vpow.pop %v5837
        %v5839 = vmul.f32 %v5828, 1.442695
        %v5840 = vpow.pop %v5839
        %v5841 = vmul.f32 %v5829, 1.442695
        %v5842 = vpow.pop %v5841
        %v5843 = vmul.f32 %v5830, 1.442695
        %v5844 = vpow.pop %v5843
        %v5845 = vmul.f32 %v5831, 1.442695
        %v5846 = vpow.pop %v5845
        %v5847 = vmul.f32 %v5832, 1.442695
        %v5848 = vpow.pop %v5847
        %v5849 = vadd.f32 %v5834, 1.0
        %v5850 = vadd.f32 %v5836, 1.0
        %v5851 = vadd.f32 %v5838, 1.0
        %v5852 = vadd.f32 %v5840, 1.0
        %v5853 = vadd.f32 %v5842, 1.0
        %v5854 = vadd.f32 %v5844, 1.0
        %v5855 = vadd.f32 %v5846, 1.0
        %v5856 = vadd.f32 %v5848, 1.0
        %v5857 = vrcp.pop %v5849
        %v5858 = vmul.f32 1.0, %v5857
        %v5859 = vrcp.pop %v5850
        %v5860 = vmul.f32 1.0, %v5859
        %v5861 = vrcp.pop %v5851
        %v5862 = vmul.f32 1.0, %v5861
        %v5863 = vrcp.pop %v5852
        %v5864 = vmul.f32 1.0, %v5863
        %v5865 = vrcp.pop %v5853
        %v5866 = vmul.f32 1.0, %v5865
        %v5867 = vrcp.pop %v5854
        %v5868 = vmul.f32 1.0, %v5867
        %v5869 = vrcp.pop %v5855
        %v5870 = vmul.f32 1.0, %v5869
        %v5871 = vrcp.pop %v5856
        %v5872 = vmul.f32 1.0, %v5871
        %v5874 = vcombine.high %v5616, %v5616
        %v5876 = vunpack.c.l.s4 1966171168
        %v5877 = vunpack.c.0.s8 %v5876
        %v5878 = vlaneseq
        %v5879 = vshrl.u32 %v5878, 7
        %v5880 = vsub.s32 %v5877, %v5879
        %v5881 = vrot.slane %v5616, %v5880
        %v5883 = vunpack.c.l.s4 1966171168
        %v5884 = vunpack.c.0.s8 %v5883
        %v5885 = vlaneseq
        %v5886 = vshrl.u32 %v5885, 7
        %v5887 = vsub.s32 %v5884, %v5886
        %v5888 = vrot.slane %v5874, %v5887
        %v5889 = vcombine.high %v5881, %v5881
        %v5890 = vcombine.high %v5888, %v5888
        %v5892 = vunpack.c.l.s4 1966171168
        %v5893 = vunpack.c.0.s8 %v5892
        %v5894 = vlaneseq
        %v5895 = vshrl.u32 %v5894, 7
        %v5896 = vsub.s32 %v5893, %v5895
        %v5897 = vrot.slane %v5881, %v5896
        %v5899 = vunpack.c.l.s4 1966171168
        %v5900 = vunpack.c.0.s8 %v5899
        %v5901 = vlaneseq
        %v5902 = vshrl.u32 %v5901, 7
        %v5903 = vsub.s32 %v5900, %v5902
        %v5904 = vrot.slane %v5888, %v5903
        %v5906 = vunpack.c.l.s4 1966171168
        %v5907 = vunpack.c.0.s8 %v5906
        %v5908 = vlaneseq
        %v5909 = vshrl.u32 %v5908, 7
        %v5910 = vsub.s32 %v5907, %v5909
        %v5911 = vrot.slane %v5889, %v5910
        %v5913 = vunpack.c.l.s4 1966171168
        %v5914 = vunpack.c.0.s8 %v5913
        %v5915 = vlaneseq
        %v5916 = vshrl.u32 %v5915, 7
        %v5917 = vsub.s32 %v5914, %v5916
        %v5918 = vrot.slane %v5890, %v5917
        %v5919 = vcombine.high %v5897, %v5897
        %v5920 = vcombine.high %v5904, %v5904
        %v5921 = vcombine.high %v5911, %v5911
        %v5922 = vcombine.high %v5918, %v5918
        %v5931 = vmul.f32 %v5720, %v5897
        %v5932 = vmul.f32 %v5722, %v5911
        %v5933 = vmul.f32 %v5724, %v5919
        %v5934 = vmul.f32 %v5726, %v5921
        %v5935 = vmul.f32 %v5728, %v5904
        %v5936 = vmul.f32 %v5730, %v5918
        %v5937 = vmul.f32 %v5732, %v5920
        %v5938 = vmul.f32 %v5734, %v5922
        %v5939 = vrot.slane %v5524, 2
        %v5940 = vrot.slane %v5526, 2
        %v5941 = vrot.slane %v5528, 2
        %v5942 = vrot.slane %v5530, 2
        %v5943 = vrot.slane %v5532, 2
        %v5944 = vrot.slane %v5534, 2
        %v5945 = vrot.slane %v5536, 2
        %v5946 = vrot.slane %v5538, 2
        %v5955 = vadd.f32 %v5939, %v5931
        %v5956 = vadd.f32 %v5940, %v5932
        %v5957 = vadd.f32 %v5941, %v5933
        %v5958 = vadd.f32 %v5942, %v5934
        %v5959 = vadd.f32 %v5943, %v5935
        %v5960 = vadd.f32 %v5944, %v5936
        %v5961 = vadd.f32 %v5945, %v5937
        %v5962 = vadd.f32 %v5946, %v5938
        %v5963 = vtanh.pop %v5955
        %v5964 = vtanh.pop %v5956
        %v5965 = vtanh.pop %v5957
        %v5966 = vtanh.pop %v5958
        %v5967 = vtanh.pop %v5959
        %v5968 = vtanh.pop %v5960
        %v5969 = vtanh.pop %v5961
        %v5970 = vtanh.pop %v5962
        %v5979 = vcombine.low %v5963, %v5964
        %v5980 = vcombine.low %v5965, %v5966
        %v5981 = vcombine.low %v5967, %v5968
        %v5982 = vcombine.low %v5969, %v5970
        %v5984 = vunpack.c.l.s4 1966171168
        %v5985 = vunpack.c.0.s8 %v5984
        %v5986 = vlaneseq
        %v5987 = vshrl.u32 %v5986, 7
        %v5988 = vsub.s32 %v5985, %v5987
        %v5989 = vrot.slane %v5979, %v5988
        %v5991 = vunpack.c.l.s4 1966171168
        %v5992 = vunpack.c.0.s8 %v5991
        %v5993 = vlaneseq
        %v5994 = vshrl.u32 %v5993, 7
        %v5995 = vsub.s32 %v5992, %v5994
        %v5996 = vrot.slane %v5980, %v5995
        %v5998 = vunpack.c.l.s4 1966171168
        %v5999 = vunpack.c.0.s8 %v5998
        %v6000 = vlaneseq
        %v6001 = vshrl.u32 %v6000, 7
        %v6002 = vsub.s32 %v5999, %v6001
        %v6003 = vrot.slane %v5981, %v6002
        %v6005 = vunpack.c.l.s4 1966171168
        %v6006 = vunpack.c.0.s8 %v6005
        %v6007 = vlaneseq
        %v6008 = vshrl.u32 %v6007, 7
        %v6009 = vsub.s32 %v6006, %v6008
        %v6010 = vrot.slane %v5982, %v6009
        %v6011 = vcombine.low %v5989, %v5996
        %v6012 = vcombine.low %v6003, %v6010
        %v6014 = vunpack.c.l.s4 1966171168
        %v6015 = vunpack.c.0.s8 %v6014
        %v6016 = vlaneseq
        %v6017 = vshrl.u32 %v6016, 7
        %v6018 = vsub.s32 %v6015, %v6017
        %v6019 = vrot.slane %v6011, %v6018
        %v6021 = vunpack.c.l.s4 1966171168
        %v6022 = vunpack.c.0.s8 %v6021
        %v6023 = vlaneseq
        %v6024 = vshrl.u32 %v6023, 7
        %v6025 = vsub.s32 %v6022, %v6024
        %v6026 = vrot.slane %v6012, %v6025
        %v6027 = vcombine.low %v6019, %v6026
        %v6029 = vsub.f32 %v5455, %v6027
        %v6031 = vcombine.high %v6029, %v6029
        %v6033 = vunpack.c.l.s4 1966171168
        %v6034 = vunpack.c.0.s8 %v6033
        %v6035 = vlaneseq
        %v6036 = vshrl.u32 %v6035, 7
        %v6037 = vsub.s32 %v6034, %v6036
        %v6038 = vrot.slane %v6029, %v6037
        %v6040 = vunpack.c.l.s4 1966171168
        %v6041 = vunpack.c.0.s8 %v6040
        %v6042 = vlaneseq
        %v6043 = vshrl.u32 %v6042, 7
        %v6044 = vsub.s32 %v6041, %v6043
        %v6045 = vrot.slane %v6031, %v6044
        %v6046 = vcombine.high %v6038, %v6038
        %v6047 = vcombine.high %v6045, %v6045
        %v6049 = vunpack.c.l.s4 1966171168
        %v6050 = vunpack.c.0.s8 %v6049
        %v6051 = vlaneseq
        %v6052 = vshrl.u32 %v6051, 7
        %v6053 = vsub.s32 %v6050, %v6052
        %v6054 = vrot.slane %v6038, %v6053
        %v6056 = vunpack.c.l.s4 1966171168
        %v6057 = vunpack.c.0.s8 %v6056
        %v6058 = vlaneseq
        %v6059 = vshrl.u32 %v6058, 7
        %v6060 = vsub.s32 %v6057, %v6059
        %v6061 = vrot.slane %v6045, %v6060
        %v6063 = vunpack.c.l.s4 1966171168
        %v6064 = vunpack.c.0.s8 %v6063
        %v6065 = vlaneseq
        %v6066 = vshrl.u32 %v6065, 7
        %v6067 = vsub.s32 %v6064, %v6066
        %v6068 = vrot.slane %v6046, %v6067
        %v6070 = vunpack.c.l.s4 1966171168
        %v6071 = vunpack.c.0.s8 %v6070
        %v6072 = vlaneseq
        %v6073 = vshrl.u32 %v6072, 7
        %v6074 = vsub.s32 %v6071, %v6073
        %v6075 = vrot.slane %v6047, %v6074
        %v6076 = vcombine.high %v6054, %v6054
        %v6077 = vcombine.high %v6061, %v6061
        %v6078 = vcombine.high %v6068, %v6068
        %v6079 = vcombine.high %v6075, %v6075
        %v6088 = vmul.f32 %v5858, %v6054
        %v6089 = vmul.f32 %v5860, %v6068
        %v6090 = vmul.f32 %v5862, %v6076
        %v6091 = vmul.f32 %v5864, %v6078
        %v6092 = vmul.f32 %v5866, %v6061
        %v6093 = vmul.f32 %v5868, %v6075
        %v6094 = vmul.f32 %v5870, %v6077
        %v6095 = vmul.f32 %v5872, %v6079
        %v6096 = vadd.f32 %v5963, %v6088
        %v6097 = vadd.f32 %v5964, %v6089
        %v6098 = vadd.f32 %v5965, %v6090
        %v6099 = vadd.f32 %v5966, %v6091
        %v6100 = vadd.f32 %v5967, %v6092
        %v6101 = vadd.f32 %v5968, %v6093
        %v6102 = vadd.f32 %v5969, %v6094
        %v6103 = vadd.f32 %v5970, %v6095
        %s6104 = sadd.s32 %s390, 7
        %v6105 = vstv %s6104
        %vm6106 = vcmp.lt.s32.totalorder %v6105, %v340
        %v6107 = vsel %vm6106, 1, 0
        %6108 = vset.pattern.permute.xlu0 0
        %6109 = vperm.xlu0 %6108, %v6107
        %v6110 = vpop.permute.xlu0 %6109
        %vm6111 = vcmp.eq.s32.totalorder %v6110, 1
        %v6120 = vcombine.low %v6096, %v6097
        %v6121 = vcombine.low %v6098, %v6099
        %v6122 = vcombine.low %v6100, %v6101
        %v6123 = vcombine.low %v6102, %v6103
        %v6125 = vunpack.c.l.s4 1966171168
        %v6126 = vunpack.c.0.s8 %v6125
        %v6127 = vlaneseq
        %v6128 = vshrl.u32 %v6127, 7
        %v6129 = vsub.s32 %v6126, %v6128
        %v6130 = vrot.slane %v6120, %v6129
        %v6132 = vunpack.c.l.s4 1966171168
        %v6133 = vunpack.c.0.s8 %v6132
        %v6134 = vlaneseq
        %v6135 = vshrl.u32 %v6134, 7
        %v6136 = vsub.s32 %v6133, %v6135
        %v6137 = vrot.slane %v6121, %v6136
        %v6139 = vunpack.c.l.s4 1966171168
        %v6140 = vunpack.c.0.s8 %v6139
        %v6141 = vlaneseq
        %v6142 = vshrl.u32 %v6141, 7
        %v6143 = vsub.s32 %v6140, %v6142
        %v6144 = vrot.slane %v6122, %v6143
        %v6146 = vunpack.c.l.s4 1966171168
        %v6147 = vunpack.c.0.s8 %v6146
        %v6148 = vlaneseq
        %v6149 = vshrl.u32 %v6148, 7
        %v6150 = vsub.s32 %v6147, %v6149
        %v6151 = vrot.slane %v6123, %v6150
        %v6152 = vcombine.low %v6130, %v6137
        %v6153 = vcombine.low %v6144, %v6151
        %v6155 = vunpack.c.l.s4 1966171168
        %v6156 = vunpack.c.0.s8 %v6155
        %v6157 = vlaneseq
        %v6158 = vshrl.u32 %v6157, 7
        %v6159 = vsub.s32 %v6156, %v6158
        %v6160 = vrot.slane %v6152, %v6159
        %v6162 = vunpack.c.l.s4 1966171168
        %v6163 = vunpack.c.0.s8 %v6162
        %v6164 = vlaneseq
        %v6165 = vshrl.u32 %v6164, 7
        %v6166 = vsub.s32 %v6163, %v6165
        %v6167 = vrot.slane %v6153, %v6166
        %v6168 = vcombine.low %v6160, %v6167
        %v6170 = vsel %vm6111, %v6168, %v5455
        %v6171 = vsel %vm6111, %v6168, 0.0
        %v6173 = vcombine.high %v6171, %v6171
        %v6175 = vunpack.c.l.s4 1966171168
        %v6176 = vunpack.c.0.s8 %v6175
        %v6177 = vlaneseq
        %v6178 = vshrl.u32 %v6177, 7
        %v6179 = vsub.s32 %v6176, %v6178
        %v6180 = vrot.slane %v6171, %v6179
        %v6182 = vunpack.c.l.s4 1966171168
        %v6183 = vunpack.c.0.s8 %v6182
        %v6184 = vlaneseq
        %v6185 = vshrl.u32 %v6184, 7
        %v6186 = vsub.s32 %v6183, %v6185
        %v6187 = vrot.slane %v6173, %v6186
        %v6188 = vcombine.high %v6180, %v6180
        %v6189 = vcombine.high %v6187, %v6187
        %v6191 = vunpack.c.l.s4 1966171168
        %v6192 = vunpack.c.0.s8 %v6191
        %v6193 = vlaneseq
        %v6194 = vshrl.u32 %v6193, 7
        %v6195 = vsub.s32 %v6192, %v6194
        %v6196 = vrot.slane %v6180, %v6195
        %v6198 = vunpack.c.l.s4 1966171168
        %v6199 = vunpack.c.0.s8 %v6198
        %v6200 = vlaneseq
        %v6201 = vshrl.u32 %v6200, 7
        %v6202 = vsub.s32 %v6199, %v6201
        %v6203 = vrot.slane %v6187, %v6202
        %v6205 = vunpack.c.l.s4 1966171168
        %v6206 = vunpack.c.0.s8 %v6205
        %v6207 = vlaneseq
        %v6208 = vshrl.u32 %v6207, 7
        %v6209 = vsub.s32 %v6206, %v6208
        %v6210 = vrot.slane %v6188, %v6209
        %v6212 = vunpack.c.l.s4 1966171168
        %v6213 = vunpack.c.0.s8 %v6212
        %v6214 = vlaneseq
        %v6215 = vshrl.u32 %v6214, 7
        %v6216 = vsub.s32 %v6213, %v6215
        %v6217 = vrot.slane %v6189, %v6216
        %v6218 = vcombine.high %v6196, %v6196
        %v6219 = vcombine.high %v6203, %v6203
        %v6220 = vcombine.high %v6210, %v6210
        %v6221 = vcombine.high %v6217, %v6217
        %6230 = vst [vmem:[%s317 + $0x7] sm:$0x1] %v6196
        %6231 = vst [vmem:[%s317 + $0xf] sm:$0x1] %v6210
        %6232 = vst [vmem:[%s317 + $0x17] sm:$0x1] %v6218
        %6233 = vst [vmem:[%s317 + $0x1f] sm:$0x1] %v6220
        %6234 = vst [vmem:[%s317 + $0x27] sm:$0x1] %v6203
        %6235 = vst [vmem:[%s317 + $0x2f] sm:$0x1] %v6217
        %6236 = vst [vmem:[%s317 + $0x37] sm:$0x1] %v6219
        %6237 = vst [vmem:[%s317 + $0x3f] sm:$0x1] %v6221
        %6238 = vst [vmem:[#allocation2] sm:$0xff] %v6170
        %6239 = vst [vmem:[%s333] sm:$0xff] %v6170
        %s6240 = sand.u32 %s135, 1
        %s6241 = sand.u32 %s135, 1
        %s6242 = smul.addr %s6241, 64
        %s6243 = scalar_lea.vmem [#allocation4], %s6242
        %p6244 = scmp.lt.s32.totalorder %s21, 0
        %s6245 = scalar_select %p6244, %s21, 0
        %s6246 = smul.addr %s6245, 8
        %s6247 = scalar_lea.vmem %s5, %s6246
        // Predicated region
        $region64: #{encoder_forward.1} parent=54 // pred_check
          %p6248 = pneg %p145
        $region65: #{encoder_forward.1} parent=54 // pred_check_branch
          %6250 = sbr.rel (%p6248) target = $region67
        $region66: #{encoder_forward.1} parent=54 // pred_region
          %s6251 = smul.u32 8, %s21
          %s6252 = smul.addr %s6251, 2
          %s6253 = sadd.s32 %s22, %s6252
          %s6254 = smul.addr %s6253, 8
          %s6255 = scalar_lea.vmem %s4, %s6254
          // Predicated region
          $region68: #{encoder_forward.1} parent=66 // pred_check
            _
          $region69: #{encoder_forward.1} parent=66 // pred_check_branch
            %6257 = sbr.rel (0) target = $region71
          $region70: #{encoder_forward.1} parent=66 // pred_region
            // Predicated region
            $region72: #{encoder_forward.1} parent=70 // pred_check
              _
            $region73: #{encoder_forward.1} parent=70 // pred_check_branch
              %6259 = sbr.rel (0) target = $region75
            $region74: #{encoder_forward.1} parent=70 // pred_region
              // Predicated region
              $region87: #{encoder_forward.1} parent=74 // pred_check
                _
              $region88: #{encoder_forward.1} parent=74 // pred_check_branch
                %6288 = sbr.rel (0) target = $region90
              $region89: #{encoder_forward.1} parent=74 // pred_region
                loop: start=0, step=1, limit=1
                $region91: #{encoder_forward.1} parent=89 // loop_pre_header
                  _
                $region92: #{encoder_forward.1} parent=89 // loop_header
                  %s6290 = sphi 0, %s6294
                  %p6291 = scmp.ge.s32.totalorder %s6290, 1
                  %s6295 = sphi %s6243, %s6243
                  %s6296 = sphi %s6255, %s6255
                $region93: #{encoder_forward.1} parent=89 // loop_header_branch
                  %6293 = sbr.rel (%p6291) target = $region97
                $region94: #{encoder_forward.1} parent=89 // loop_body
                  %v6297 = vld [vmem:[%s6295] sm:$0xff]
                  %6298 = vst [vmem:[%s6296] sm:$0xff] %v6297
                  %v6299 = vld [vmem:[%s6295 + $0x8] sm:$0xff]
                  %6300 = vst [vmem:[%s6296 + $0x10] sm:$0xff] %v6299
                  %v6301 = vld [vmem:[%s6295 + $0x10] sm:$0xff]
                  %6302 = vst [vmem:[%s6296 + $0x20] sm:$0xff] %v6301
                  %v6303 = vld [vmem:[%s6295 + $0x18] sm:$0xff]
                  %6304 = vst [vmem:[%s6296 + $0x30] sm:$0xff] %v6303
                  %v6305 = vld [vmem:[%s6295 + $0x20] sm:$0xff]
                  %6306 = vst [vmem:[%s6296 + $0x40] sm:$0xff] %v6305
                  %v6307 = vld [vmem:[%s6295 + $0x28] sm:$0xff]
                  %6308 = vst [vmem:[%s6296 + $0x50] sm:$0xff] %v6307
                  %v6309 = vld [vmem:[%s6295 + $0x30] sm:$0xff]
                  %6310 = vst [vmem:[%s6296 + $0x60] sm:$0xff] %v6309
                  %v6311 = vld [vmem:[%s6295 + $0x38] sm:$0xff]
                  %6312 = vst [vmem:[%s6296 + $0x70] sm:$0xff] %v6311
                $region95: #{encoder_forward.1} parent=89 // loop_footer
                  %s6294 = sadd.s32 1, %s6290
                $region96: #{encoder_forward.1} parent=89 // loop_footer_branch
                  %6289 = sbr.rel target = $region92
                $region97: #{encoder_forward.1} parent=89 // loop_exit
                  _
              $region90: #{encoder_forward.1} parent=74 // pred_fallthru
                _
              // Predicated region
              $region98: #{encoder_forward.1} parent=74 // pred_check
                _
              $region99: #{encoder_forward.1} parent=74 // pred_check_branch
                %6314 = sbr.rel target = $region101
              $region100: #{encoder_forward.1} parent=74 // pred_region
                _
              $region101: #{encoder_forward.1} parent=74 // pred_fallthru
                _
            $region75: #{encoder_forward.1} parent=70 // pred_fallthru
              _
            // Predicated region
            $region76: #{encoder_forward.1} parent=70 // pred_check
              _
            $region77: #{encoder_forward.1} parent=70 // pred_check_branch
              %6261 = sbr.rel target = $region79
            $region78: #{encoder_forward.1} parent=70 // pred_region
              loop: start=0, step=1, limit=1
              $region80: #{encoder_forward.1} parent=78 // loop_pre_header
                _
              $region81: #{encoder_forward.1} parent=78 // loop_header
                %s6264 = sphi 0, %s6268
                %p6265 = scmp.ge.s32.totalorder %s6264, 1
                %s6269 = sphi %s6243, %s6243
                %s6270 = sphi %s6255, %s6255
              $region82: #{encoder_forward.1} parent=78 // loop_header_branch
                %6267 = sbr.rel (%p6265) target = $region86
              $region83: #{encoder_forward.1} parent=78 // loop_body
                %v6271 = vld [vmem:[%s6269] sm:$0xff]
                %6272 = vst [vmem:[%s6270] sm:$0xff] %v6271
                %v6273 = vld [vmem:[%s6269 + $0x8] sm:$0xff]
                %6274 = vst [vmem:[%s6270 + $0x10] sm:$0xff] %v6273
                %v6275 = vld [vmem:[%s6269 + $0x10] sm:$0xff]
                %6276 = vst [vmem:[%s6270 + $0x20] sm:$0xff] %v6275
                %v6277 = vld [vmem:[%s6269 + $0x18] sm:$0xff]
                %6278 = vst [vmem:[%s6270 + $0x30] sm:$0xff] %v6277
                %v6279 = vld [vmem:[%s6269 + $0x20] sm:$0xff]
                %6280 = vst [vmem:[%s6270 + $0x40] sm:$0xff] %v6279
                %v6281 = vld [vmem:[%s6269 + $0x28] sm:$0xff]
                %6282 = vst [vmem:[%s6270 + $0x50] sm:$0xff] %v6281
                %v6283 = vld [vmem:[%s6269 + $0x30] sm:$0xff]
                %6284 = vst [vmem:[%s6270 + $0x60] sm:$0xff] %v6283
                %v6285 = vld [vmem:[%s6269 + $0x38] sm:$0xff]
                %6286 = vst [vmem:[%s6270 + $0x70] sm:$0xff] %v6285
              $region84: #{encoder_forward.1} parent=78 // loop_footer
                %s6268 = sadd.s32 1, %s6264
              $region85: #{encoder_forward.1} parent=78 // loop_footer_branch
                %6263 = sbr.rel target = $region81
              $region86: #{encoder_forward.1} parent=78 // loop_exit
                _
            $region79: #{encoder_forward.1} parent=70 // pred_fallthru
              _
          $region71: #{encoder_forward.1} parent=66 // pred_fallthru
            _
          %6315 = vnop
        $region67: #{encoder_forward.1} parent=54 // pred_fallthru
          _
        // Predicated region
        $region102: #{encoder_forward.1} parent=54 // pred_check
          %p6316 = pneg %p171
        $region103: #{encoder_forward.1} parent=54 // pred_check_branch
          %6318 = sbr.rel (%p6316) target = $region105
        $region104: #{encoder_forward.1} parent=54 // pred_region
          _
        $region105: #{encoder_forward.1} parent=54 // pred_fallthru
          _
        // Predicated region
        $region106: #{encoder_forward.1} parent=54 // pred_check
          %p6319 = pneg %p171
        $region107: #{encoder_forward.1} parent=54 // pred_check_branch
          %6321 = sbr.rel (%p6319) target = $region109
        $region108: #{encoder_forward.1} parent=54 // pred_region
          %p6322 = scmp.lt.s32.totalorder %s21, 0
          %s6323 = scalar_select %p6322, %s21, 0
          %s6324 = smul.addr %s6323, 8
          %s6325 = scalar_lea.vmem %s5, %s6324
        $region109: #{encoder_forward.1} parent=54 // pred_fallthru
          _
      $region55: #{encoder_forward.1} parent=5 // pred_fallthru
        _
      %p6326 = scmp.le.s32.totalorder 2, %s12
      // Predicated region
      $region110: #{encoder_forward.1} parent=5 // pred_check
        %p6327 = pneg %p6326
      $region111: #{encoder_forward.1} parent=5 // pred_check_branch
        %6329 = sbr.rel (%p6327) target = $region113
      $region112: #{encoder_forward.1} parent=5 // pred_region
        %s6330 = ssub.s32 %s12, 2
        // Predicated region
        $region114: #{encoder_forward.1} parent=112 // pred_check
          %p6331 = pneg %p151
        $region115: #{encoder_forward.1} parent=112 // pred_check_branch
          %6333 = sbr.rel (%p6331) target = $region117
        $region116: #{encoder_forward.1} parent=112 // pred_region
          %s6334 = sand.u32 %s136, 1
          %s6335 = sand.u32 %s136, 1
          %s6336 = smul.addr %s6335, 64
          %s6337 = scalar_lea.vmem [#allocation4], %s6336
        $region117: #{encoder_forward.1} parent=112 // pred_fallthru
          _
      $region113: #{encoder_forward.1} parent=5 // pred_fallthru
        _
    $region6: #{encoder_forward.1} parent=1 // loop_footer
      %s16 = sadd.s32 1, %s12
    $region7: #{encoder_forward.1} parent=1 // loop_footer_branch
      %11 = sbr.rel target = $region3
    $region8: #{encoder_forward.1} parent=1 // loop_exit
      _

</llo_original>
